<compile_context>
chip_gen: v6e
topology: v6e:2x2x1
jax: 0.10.0
libtpu: 0.0.40
codegen_flags: <defaults>
</compile_context>

<pallas_src>
import jax
import jax.numpy as jnp
import numpy as np
from jax import lax
from jax.experimental import pallas as pl
from jax.experimental.pallas import tpu as pltpu

EPS = 1e-5


def _round_up(x, m):
    return ((x + m - 1) // m) * m


# ------------------------------ Pallas kernel ------------------------------ #

def _make_kernel(H, W, Pp, pad):
    HW = H * W
    P3 = 3 * Pp

    def kernel(x_ref, s1_ref, b1_ref, w1_ref, b2_ref, w2_ref, w3_ref,
               o_ref, t2s_ref):
        # bn1 (folded, f32) + relu1 on the bf16 input block
        t1 = jnp.maximum(x_ref[...].astype(jnp.float32) * s1_ref[...] + b1_ref[...], 0.0)
        # conv1 (1x1) with bn2 scale folded into its output columns, + bn2 bias + relu2
        h1 = jnp.dot(t1.astype(jnp.bfloat16), w1_ref[...],
                     preferred_element_type=jnp.float32)
        t2 = jnp.maximum(h1 + b2_ref[...], 0.0).astype(jnp.bfloat16)     # (HW, Pp)

        # Stage t2 into a zero-halo'd (HW + 2*pad, 3*Pp) bf16 scratch.  Column block
        # j in {0,1,2} holds the dj = j-1 horizontally shifted (and boundary-masked)
        # copy, so the 3x3 conv needs only 3 matmuls with K = 3*Pp (one per di).
        zero_halo = jnp.zeros((pad, P3), jnp.bfloat16)
        t2s_ref[0:pad, :] = zero_halo                                    # top halo
        t2s_ref[pad + HW:pad + HW + pad, :] = zero_halo                  # bottom halo
        t2s_ref[pad:pad + HW, Pp:2 * Pp] = t2                            # dj = 0

        # dj = -1 / +1 copies: read the center block offset by one row (the halo row
        # read in is already zero) and apply the image-width mask ONCE here.
        w_idx = lax.broadcasted_iota(jnp.int32, (HW, 1), 0) % W
        left = t2s_ref[pad - 1:pad - 1 + HW, Pp:2 * Pp]                  # t2[r-1]
        t2s_ref[pad:pad + HW, 0:Pp] = jnp.where(w_idx > 0, left,
                                                jnp.zeros_like(left))
        right = t2s_ref[pad + 1:pad + 1 + HW, Pp:2 * Pp]                 # t2[r+1]
        t2s_ref[pad:pad + HW, 2 * Pp:3 * Pp] = jnp.where(w_idx < W - 1, right,
                                                         jnp.zeros_like(right))

        # conv2 (3x3, stride 1, pad 1): 3 row-shifted (HW, 3Pp) @ (3Pp, Pp) MXU matmuls
        acc = jnp.zeros((HW, Pp), jnp.float32)
        for di in (-1, 0, 1):
            tap = t2s_ref[pad + di * W:pad + di * W + HW, :]             # (HW, 3Pp) bf16
            acc = acc + jnp.dot(tap, w2_ref[di + 1],
                                preferred_element_type=jnp.float32)

        # second application of bn2 (as in the original forward; bn3 is unused) + relu3
        t3 = jnp.maximum(acc + b2_ref[...], 0.0)
        # conv3 (1x1) + residual (re-read the resident input block; downsample=None)
        h3 = jnp.dot(t3.astype(jnp.bfloat16), w3_ref[...],
                     preferred_element_type=jnp.float32)
        o_ref[...] = (h3 + x_ref[...].astype(jnp.float32)).astype(o_ref.dtype)

    return kernel


# --------------------------------- wrapper ---------------------------------- #

def preact_bottleneck(x_nchw, params):
    """Fused PreActBottleneck forward (stride=1, downsample=None). Returns bf16 NCHW."""
    x = jnp.transpose(x_nchw, (0, 2, 3, 1))                    # NCHW -> NHWC
    N, H, W, Cin = x.shape
    P = params["w1"].shape[0]                                  # planes
    Cout = 4 * P
    assert Cin == Cout, "stride=1 / downsample=None requires inplanes == 4*planes"
    # TODO(synk): stride>1 / downsample path not implemented (module default config only).
    # TODO(synk): for very large H*W slabs (v7x: 64 MiB VMEM) tile the H axis with a
    # 1-row halo instead of one whole image per grid step; that also raises grid
    # parallelism for megacore when N is small.
    HW = H * W
    pad = _round_up(W, 8)                  # sublane-aligned vertical halo (pad >= W)
    Cp = _round_up(Cin, 128)               # lane-dense padded channel counts
    Pp = _round_up(P, 128)

    # fold inference-mode BatchNorm into scale/bias
    def fold(g, b, rm, rv):
        s = g / jnp.sqrt(rv + EPS)
        return s, b - rm * s

    s1, b1 = fold(*params["bn1"])
    s2, b2 = fold(*params["bn2"])
    # bn3 exists in the module __init__ but is never used in forward()

    # conv weights in matmul layout with the bn2 *scale* folded into the output
    # columns of conv1 and conv2 (the forward applies bn2 after each), zero-padded
    # to lane-dense channel counts, bf16 operands (f32 accumulation in-kernel).
    w1 = jnp.transpose(params["w1"][:, :, 0, 0], (1, 0)) * s2[None, :]          # (Cin, P)
    w1p = jnp.pad(w1, ((0, Cp - Cin), (0, Pp - P))).astype(jnp.bfloat16)
    w2 = jnp.transpose(params["w2"], (2, 3, 1, 0)) * s2[None, None, None, :]    # (3,3,P,P) [kh,kw,ci,co]
    w2p = (jnp.pad(w2, ((0, 0), (0, 0), (0, Pp - P), (0, Pp - P)))
           .reshape(3, 3 * Pp, Pp).astype(jnp.bfloat16))                        # (3, 3Pp, Pp)
    w3 = jnp.transpose(params["w3"][:, :, 0, 0], (1, 0))                        # (P, Cout)
    w3p = jnp.pad(w3, ((0, Pp - P), (0, Cp - Cout))).astype(jnp.bfloat16)

    s1r = jnp.pad(s1, (0, Cp - Cin)).reshape(1, Cp).astype(jnp.float32)
    b1r = jnp.pad(b1, (0, Cp - Cin)).reshape(1, Cp).astype(jnp.float32)
    b2r = jnp.pad(b2, (0, Pp - P)).reshape(1, Pp).astype(jnp.float32)

    # bf16 HBM input (channel-padded); padded channels are zero so they stay zero
    # through the whole block and the residual add, and are sliced off at the end.
    xp = jnp.pad(x.astype(jnp.bfloat16), ((0, 0), (0, 0), (0, 0), (0, Cp - Cin)))
    x2d = xp.reshape(N, HW, Cp)

    def resident(shape):                   # weights / constants: same block every step
        return pl.BlockSpec(shape, lambda n: (0,) * len(shape))

    out2d = pl.pallas_call(
        _make_kernel(H, W, Pp, pad),
        out_shape=jax.ShapeDtypeStruct((N, HW, Cp), jnp.bfloat16),
        grid=(N,),                          # one full HxW slab per grid step
        in_specs=[
            pl.BlockSpec((None, HW, Cp), lambda n: (n, 0, 0)),   # x (also the residual)
            resident((1, Cp)),                                   # bn1 scale
            resident((1, Cp)),                                   # bn1 bias
            resident((Cp, Pp)),                                  # conv1 (bn2-scaled)
            resident((1, Pp)),                                   # bn2 bias
            resident((3, 3 * Pp, Pp)),                           # conv2 taps (bn2-scaled)
            resident((Pp, Cp)),                                  # conv3
        ],
        out_specs=pl.BlockSpec((None, HW, Cp), lambda n: (n, 0, 0)),
        scratch_shapes=[pltpu.VMEM((HW + 2 * pad, 3 * Pp), jnp.bfloat16)],
        compiler_params=pltpu.CompilerParams(
            dimension_semantics=("parallel",),                   # shard images across TCs
            vmem_limit_bytes=64 * 1024 * 1024),
    )(x2d, s1r, b1r, w1p, b2r, w2p, w3p)

    out = out2d[:, :, :Cout].reshape(N, H, W, Cout)
    return jnp.transpose(out, (0, 3, 1, 2))                      # NHWC -> NCHW (bf16)


# ----------------------------- pure-JAX reference --------------------------- #

def reference_forward(x_nchw, params):
    x = jnp.transpose(x_nchw, (0, 2, 3, 1)).astype(jnp.float32)

    def fold(g, b, rm, rv):
        s = g / jnp.sqrt(rv + EPS)
        return s, b - rm * s

    s1, b1 = fold(*params["bn1"])
    s2, b2 = fold(*params["bn2"])
    w1 = jnp.transpose(params["w1"], (2, 3, 1, 0))  # OIHW -> HWIO
    w2 = jnp.transpose(params["w2"], (2, 3, 1, 0))
    w3 = jnp.transpose(params["w3"], (2, 3, 1, 0))
    dn = ("NHWC", "HWIO", "NHWC")
    conv = lambda a, w, p: lax.conv_general_dilated(
        a, w, (1, 1), p, dimension_numbers=dn, precision=lax.Precision.HIGHEST)

    t = jnp.maximum(x * s1 + b1, 0.0)
    t = conv(t, w1, "VALID")
    t = jnp.maximum(t * s2 + b2, 0.0)
    t = conv(t, w2, ((1, 1), (1, 1)))
    t = jnp.maximum(t * s2 + b2, 0.0)      # bn2 applied again, as in the original forward
    t = conv(t, w3, "VALID")
    out = t + x
    return jnp.transpose(out, (0, 3, 1, 2))


# ----------------------------------- main ----------------------------------- #

if __name__ == "__main__":
    planes = 4
    inplanes = 4 * planes   # 16: required so the residual add works with downsample=None
    N, H, W = 2, 16, 16

    key = jax.random.PRNGKey(0)
    ks = jax.random.split(key, 8)

    def bn_params(k, c):
        k1, k2, k3, k4 = jax.random.split(k, 4)
        gamma = 1.0 + 0.1 * jax.random.normal(k1, (c,), jnp.float32)
        beta = 0.1 * jax.random.normal(k2, (c,), jnp.float32)
        rmean = 0.1 * jax.random.normal(k3, (c,), jnp.float32)
        rvar = 1.0 + 0.1 * jnp.abs(jax.random.normal(k4, (c,), jnp.float32))
        return (gamma, beta, rmean, rvar)

    params = {
        "bn1": bn_params(ks[0], inplanes),
        "bn2": bn_params(ks[1], planes),
        "bn3": bn_params(ks[2], planes),  # created but unused (matches original module)
        "w1": 0.1 * jax.random.normal(ks[3], (planes, inplanes, 1, 1), jnp.float32),
        "w2": 0.1 * jax.random.normal(ks[4], (planes, planes, 3, 3), jnp.float32),
        "w3": 0.1 * jax.random.normal(ks[5], (4 * planes, planes, 1, 1), jnp.float32),
    }
    x = jax.random.normal(ks[6], (N, inplanes, H, W), jnp.float32)

    out = jax.block_until_ready(preact_bottleneck(x, params))
    ref = reference_forward(x, params)
    assert out.shape == (N, 4 * planes, H, W)
    # kernel is bf16 I/O + bf16 matmul operands (f32 accumulation); reference is f32 HIGHEST
    np.testing.assert_allclose(np.asarray(out.astype(jnp.float32)), np.asarray(ref),
                               rtol=2e-2, atol=2e-2)
    print("KERNEL_OK")
</pallas_src>

<mosaic_0001>
module attributes {stable_mosaic.version = 11 : i64} {
  func.func @kernel(%arg0: i32, %arg1: memref<1x256x128xbf16, #tpu.memory_space<vmem>>, %arg2: memref<1x128xf32, #tpu.memory_space<vmem>>, %arg3: memref<1x128xf32, #tpu.memory_space<vmem>>, %arg4: memref<128x128xbf16, #tpu.memory_space<vmem>>, %arg5: memref<1x128xf32, #tpu.memory_space<vmem>>, %arg6: memref<3x384x128xbf16, #tpu.memory_space<vmem>>, %arg7: memref<128x128xbf16, #tpu.memory_space<vmem>>, %arg8: memref<1x256x128xbf16, #tpu.memory_space<vmem>>, %arg9: memref<288x384xbf16, #tpu.memory_space<vmem>>) attributes {dimension_semantics = [#tpu.dimension_semantics<parallel>], iteration_bounds = array<i64: 2>, scalar_prefetch = 0 : i64, scratch_operands = 1 : i64, tpu.core_type = #tpu.core_type<tc>, window_params = [{transform_indices = @transform_0, window_bounds = array<i64: 1, 256, 128>}, {pipeline_mode = #tpu.pipeline_mode<synchronous>, transform_indices = @transform_1, window_bounds = array<i64: 1, 128>}, {pipeline_mode = #tpu.pipeline_mode<synchronous>, transform_indices = @transform_2, window_bounds = array<i64: 1, 128>}, {pipeline_mode = #tpu.pipeline_mode<synchronous>, transform_indices = @transform_3, window_bounds = array<i64: 128, 128>}, {pipeline_mode = #tpu.pipeline_mode<synchronous>, transform_indices = @transform_4, window_bounds = array<i64: 1, 128>}, {pipeline_mode = #tpu.pipeline_mode<synchronous>, transform_indices = @transform_5, window_bounds = array<i64: 3, 384, 128>}, {pipeline_mode = #tpu.pipeline_mode<synchronous>, transform_indices = @transform_6, window_bounds = array<i64: 128, 128>}, {transform_indices = @transform_7, window_bounds = array<i64: 1, 256, 128>}]} {
    %c0 = arith.constant 0 : index
    %c0_0 = arith.constant 0 : index
    %c0_1 = arith.constant 0 : index
    %0 = vector.load %arg1[%c0, %c0_0, %c0_1] : memref<1x256x128xbf16, #tpu.memory_space<vmem>>, vector<1x256x128xbf16>
    %1 = vector.shape_cast %0 : vector<1x256x128xbf16> to vector<256x128xbf16>
    %2 = arith.extf %1 : vector<256x128xbf16> to vector<256x128xf32>
    %c0_2 = arith.constant 0 : index
    %c0_3 = arith.constant 0 : index
    %3 = vector.load %arg2[%c0_2, %c0_3] : memref<1x128xf32, #tpu.memory_space<vmem>>, vector<1x128xf32>
    %4 = vector.broadcast %3 : vector<1x128xf32> to vector<256x128xf32>
    %5 = arith.mulf %2, %4 : vector<256x128xf32>
    %c0_4 = arith.constant 0 : index
    %c0_5 = arith.constant 0 : index
    %6 = vector.load %arg3[%c0_4, %c0_5] : memref<1x128xf32, #tpu.memory_space<vmem>>, vector<1x128xf32>
    %7 = vector.broadcast %6 : vector<1x128xf32> to vector<256x128xf32>
    %8 = arith.addf %5, %7 : vector<256x128xf32>
    %cst = arith.constant 0.000000e+00 : f32
    %9 = vector.broadcast %cst : f32 to vector<256x128xf32>
    %10 = arith.maximumf %8, %9 : vector<256x128xf32>
    %11 = arith.truncf %10 : vector<256x128xf32> to vector<256x128xbf16>
    %c0_6 = arith.constant 0 : index
    %c0_7 = arith.constant 0 : index
    %12 = vector.load %arg4[%c0_6, %c0_7] : memref<128x128xbf16, #tpu.memory_space<vmem>>, vector<128x128xbf16>
    %cst_8 = arith.constant dense<0.000000e+00> : vector<256x128xf32>
    %13 = tpu.matmul %11, %12, %cst_8 {dimension_numbers = #tpu.dot_dimension_numbers<[1], [0], [0], [1], [0, 0, 1, 1], [], []>} : vector<256x128xbf16>, vector<128x128xbf16>, vector<256x128xf32> -> vector<256x128xf32>
    %c0_9 = arith.constant 0 : index
    %c0_10 = arith.constant 0 : index
    %14 = vector.load %arg5[%c0_9, %c0_10] : memref<1x128xf32, #tpu.memory_space<vmem>>, vector<1x128xf32>
    %15 = vector.broadcast %14 : vector<1x128xf32> to vector<256x128xf32>
    %16 = arith.addf %13, %15 : vector<256x128xf32>
    %cst_11 = arith.constant 0.000000e+00 : f32
    %17 = vector.broadcast %cst_11 : f32 to vector<256x128xf32>
    %18 = arith.maximumf %16, %17 : vector<256x128xf32>
    %19 = arith.truncf %18 : vector<256x128xf32> to vector<256x128xbf16>
    %cst_12 = arith.constant 0.000000e+00 : bf16
    %20 = vector.broadcast %cst_12 : bf16 to vector<16x384xbf16>
    %c0_13 = arith.constant 0 : index
    %c0_14 = arith.constant 0 : index
    %21 = vector.load %arg9[%c0_13, %c0_14] : memref<288x384xbf16, #tpu.memory_space<vmem>>, vector<16x384xbf16>
    tpu.vector_store %arg9[%c0_13, %c0_14], %20 {strides = array<i32>} : memref<288x384xbf16, #tpu.memory_space<vmem>>, vector<16x384xbf16>,
    %c272 = arith.constant 272 : index
    %c0_15 = arith.constant 0 : index
    %22 = vector.load %arg9[%c272, %c0_15] : memref<288x384xbf16, #tpu.memory_space<vmem>>, vector<16x384xbf16>
    tpu.vector_store %arg9[%c272, %c0_15], %20 {strides = array<i32>} : memref<288x384xbf16, #tpu.memory_space<vmem>>, vector<16x384xbf16>,
    %c16 = arith.constant 16 : index
    %c128 = arith.constant 128 : index
    %23 = vector.load %arg9[%c16, %c128] : memref<288x384xbf16, #tpu.memory_space<vmem>>, vector<256x128xbf16>
    tpu.vector_store %arg9[%c16, %c128], %19 {strides = array<i32>} : memref<288x384xbf16, #tpu.memory_space<vmem>>, vector<256x128xbf16>,
    %24 = tpu.iota {dimensions = array<i32: 0>} : vector<256x1xi32>
    %c16_i32 = arith.constant 16 : i32
    %c0_i32 = arith.constant 0 : i32
    %25 = arith.cmpi eq, %c16_i32, %c0_i32 : i32
    %c1_i32 = arith.constant 1 : i32
    %26 = arith.select %25, %c1_i32, %c16_i32 : i32
    %27 = vector.broadcast %26 : i32 to vector<256x1xi32>
    %28 = arith.remsi %24, %27 : vector<256x1xi32>
    %c0_i32_16 = arith.constant 0 : i32
    %29 = vector.broadcast %c0_i32_16 : i32 to vector<256x1xi32>
    %30 = arith.cmpi ne, %28, %29 : vector<256x1xi32>
    %c0_i32_17 = arith.constant 0 : i32
    %31 = vector.broadcast %c0_i32_17 : i32 to vector<256x1xi32>
    %32 = arith.cmpi slt, %28, %31 : vector<256x1xi32>
    %c0_i32_18 = arith.constant 0 : i32
    %33 = arith.cmpi slt, %26, %c0_i32_18 : i32
    %34 = vector.broadcast %33 : i1 to vector<256x1xi1>
    %35 = vector.broadcast %34 : vector<256x1xi1> to vector<256x1xi1>
    %36 = arith.xori %32, %35 : vector<256x1xi1>
    %37 = arith.andi %36, %30 : vector<256x1xi1>
    %38 = vector.broadcast %26 : i32 to vector<256x1xi32>
    %39 = arith.addi %28, %38 : vector<256x1xi32>
    %40 = arith.select %37, %39, %28 : vector<256x1xi1>, vector<256x1xi32>
    %c15 = arith.constant 15 : index
    %c128_19 = arith.constant 128 : index
    %41 = vector.load %arg9[%c15, %c128_19] : memref<288x384xbf16, #tpu.memory_space<vmem>>, vector<256x128xbf16>
    %c0_i32_20 = arith.constant 0 : i32
    %42 = vector.broadcast %c0_i32_20 : i32 to vector<256x1xi32>
    %43 = arith.cmpi sgt, %40, %42 : vector<256x1xi32>
    %cst_21 = arith.constant 0.000000e+00 : bf16
    %44 = vector.broadcast %cst_21 : bf16 to vector<256x128xbf16>
    %45 = vector.shape_cast %43 : vector<256x1xi1> to vector<256x1xi1>
    %46 = vector.broadcast %45 : vector<256x1xi1> to vector<256x128xi1>
    %47 = arith.select %46, %41, %44 : vector<256x128xi1>, vector<256x128xbf16>
    %c16_22 = arith.constant 16 : index
    %c0_23 = arith.constant 0 : index
    %48 = vector.load %arg9[%c16_22, %c0_23] : memref<288x384xbf16, #tpu.memory_space<vmem>>, vector<256x128xbf16>
    tpu.vector_store %arg9[%c16_22, %c0_23], %47 {strides = array<i32>} : memref<288x384xbf16, #tpu.memory_space<vmem>>, vector<256x128xbf16>,
    %c17 = arith.constant 17 : index
    %c128_24 = arith.constant 128 : index
    %49 = vector.load %arg9[%c17, %c128_24] : memref<288x384xbf16, #tpu.memory_space<vmem>>, vector<256x128xbf16>
    %c15_i32 = arith.constant 15 : i32
    %50 = vector.broadcast %c15_i32 : i32 to vector<256x1xi32>
    %51 = arith.cmpi slt, %40, %50 : vector<256x1xi32>
    %cst_25 = arith.constant 0.000000e+00 : bf16
    %52 = vector.broadcast %cst_25 : bf16 to vector<256x128xbf16>
    %53 = vector.shape_cast %51 : vector<256x1xi1> to vector<256x1xi1>
    %54 = vector.broadcast %53 : vector<256x1xi1> to vector<256x128xi1>
    %55 = arith.select %54, %49, %52 : vector<256x128xi1>, vector<256x128xbf16>
    %c16_26 = arith.constant 16 : index
    %c256 = arith.constant 256 : index
    %56 = vector.load %arg9[%c16_26, %c256] : memref<288x384xbf16, #tpu.memory_space<vmem>>, vector<256x128xbf16>
    tpu.vector_store %arg9[%c16_26, %c256], %55 {strides = array<i32>} : memref<288x384xbf16, #tpu.memory_space<vmem>>, vector<256x128xbf16>,
    %cst_27 = arith.constant 0.000000e+00 : f32
    %57 = vector.broadcast %cst_27 : f32 to vector<256x128xf32>
    %c0_28 = arith.constant 0 : index
    %c0_29 = arith.constant 0 : index
    %58 = vector.load %arg9[%c0_28, %c0_29] : memref<288x384xbf16, #tpu.memory_space<vmem>>, vector<256x384xbf16>
    %c0_30 = arith.constant 0 : index
    %c0_31 = arith.constant 0 : index
    %c0_32 = arith.constant 0 : index
    %59 = vector.load %arg6[%c0_30, %c0_31, %c0_32] : memref<3x384x128xbf16, #tpu.memory_space<vmem>>, vector<1x384x128xbf16>
    %60 = vector.shape_cast %59 : vector<1x384x128xbf16> to vector<384x128xbf16>
    %cst_33 = arith.constant dense<0.000000e+00> : vector<256x128xf32>
    %61 = tpu.matmul %58, %60, %cst_33 {dimension_numbers = #tpu.dot_dimension_numbers<[1], [0], [0], [1], [0, 0, 1, 1], [], []>} : vector<256x384xbf16>, vector<384x128xbf16>, vector<256x128xf32> -> vector<256x128xf32>
    %62 = arith.addf %57, %61 : vector<256x128xf32>
    %c16_34 = arith.constant 16 : index
    %c0_35 = arith.constant 0 : index
    %63 = vector.load %arg9[%c16_34, %c0_35] : memref<288x384xbf16, #tpu.memory_space<vmem>>, vector<256x384xbf16>
    %c1 = arith.constant 1 : index
    %c0_36 = arith.constant 0 : index
    %c0_37 = arith.constant 0 : index
    %64 = vector.load %arg6[%c1, %c0_36, %c0_37] : memref<3x384x128xbf16, #tpu.memory_space<vmem>>, vector<1x384x128xbf16>
    %65 = vector.shape_cast %64 : vector<1x384x128xbf16> to vector<384x128xbf16>
    %cst_38 = arith.constant dense<0.000000e+00> : vector<256x128xf32>
    %66 = tpu.matmul %63, %65, %cst_38 {dimension_numbers = #tpu.dot_dimension_numbers<[1], [0], [0], [1], [0, 0, 1, 1], [], []>} : vector<256x384xbf16>, vector<384x128xbf16>, vector<256x128xf32> -> vector<256x128xf32>
    %67 = arith.addf %62, %66 : vector<256x128xf32>
    %c32 = arith.constant 32 : index
    %c0_39 = arith.constant 0 : index
    %68 = vector.load %arg9[%c32, %c0_39] : memref<288x384xbf16, #tpu.memory_space<vmem>>, vector<256x384xbf16>
    %c2 = arith.constant 2 : index
    %c0_40 = arith.constant 0 : index
    %c0_41 = arith.constant 0 : index
    %69 = vector.load %arg6[%c2, %c0_40, %c0_41] : memref<3x384x128xbf16, #tpu.memory_space<vmem>>, vector<1x384x128xbf16>
    %70 = vector.shape_cast %69 : vector<1x384x128xbf16> to vector<384x128xbf16>
    %cst_42 = arith.constant dense<0.000000e+00> : vector<256x128xf32>
    %71 = tpu.matmul %68, %70, %cst_42 {dimension_numbers = #tpu.dot_dimension_numbers<[1], [0], [0], [1], [0, 0, 1, 1], [], []>} : vector<256x384xbf16>, vector<384x128xbf16>, vector<256x128xf32> -> vector<256x128xf32>
    %72 = arith.addf %67, %71 : vector<256x128xf32>
    %c0_43 = arith.constant 0 : index
    %c0_44 = arith.constant 0 : index
    %73 = vector.load %arg5[%c0_43, %c0_44] : memref<1x128xf32, #tpu.memory_space<vmem>>, vector<1x128xf32>
    %74 = vector.broadcast %73 : vector<1x128xf32> to vector<256x128xf32>
    %75 = arith.addf %72, %74 : vector<256x128xf32>
    %cst_45 = arith.constant 0.000000e+00 : f32
    %76 = vector.broadcast %cst_45 : f32 to vector<256x128xf32>
    %77 = arith.maximumf %75, %76 : vector<256x128xf32>
    %78 = arith.truncf %77 : vector<256x128xf32> to vector<256x128xbf16>
    %c0_46 = arith.constant 0 : index
    %c0_47 = arith.constant 0 : index
    %79 = vector.load %arg7[%c0_46, %c0_47] : memref<128x128xbf16, #tpu.memory_space<vmem>>, vector<128x128xbf16>
    %cst_48 = arith.constant dense<0.000000e+00> : vector<256x128xf32>
    %80 = tpu.matmul %78, %79, %cst_48 {dimension_numbers = #tpu.dot_dimension_numbers<[1], [0], [0], [1], [0, 0, 1, 1], [], []>} : vector<256x128xbf16>, vector<128x128xbf16>, vector<256x128xf32> -> vector<256x128xf32>
    %c0_49 = arith.constant 0 : index
    %c0_50 = arith.constant 0 : index
    %c0_51 = arith.constant 0 : index
    %81 = vector.load %arg1[%c0_49, %c0_50, %c0_51] : memref<1x256x128xbf16, #tpu.memory_space<vmem>>, vector<1x256x128xbf16>
    %82 = vector.shape_cast %81 : vector<1x256x128xbf16> to vector<256x128xbf16>
    %83 = arith.extf %82 : vector<256x128xbf16> to vector<256x128xf32>
    %84 = arith.addf %80, %83 : vector<256x128xf32>
    %85 = arith.truncf %84 : vector<256x128xf32> to vector<256x128xbf16>
    %c0_52 = arith.constant 0 : index
    %c0_53 = arith.constant 0 : index
    %c0_54 = arith.constant 0 : index
    %86 = vector.load %arg8[%c0_52, %c0_53, %c0_54] : memref<1x256x128xbf16, #tpu.memory_space<vmem>>, vector<1x256x128xbf16>
    %87 = vector.shape_cast %86 : vector<1x256x128xbf16> to vector<256x128xbf16>
    %88 = vector.shape_cast %85 : vector<256x128xbf16> to vector<1x256x128xbf16>
    tpu.vector_store %arg8[%c0_52, %c0_53, %c0_54], %88 {strides = array<i32>} : memref<1x256x128xbf16, #tpu.memory_space<vmem>>, vector<1x256x128xbf16>,
    return
  }
  func.func @transform_0(%arg0: i32) -> (i32, i32, i32) {
    %c0_i32 = arith.constant 0 : i32
    %c0_i32_0 = arith.constant 0 : i32
    %c0_i32_1 = arith.constant 0 : i32
    return %arg0, %c0_i32, %c0_i32_0 : i32, i32, i32
  }
  func.func @transform_1(%arg0: i32) -> (i32, i32) {
    %c0_i32 = arith.constant 0 : i32
    %c0_i32_0 = arith.constant 0 : i32
    %c0_i32_1 = arith.constant 0 : i32
    return %c0_i32, %c0_i32_0 : i32, i32
  }
  func.func @transform_2(%arg0: i32) -> (i32, i32) {
    %c0_i32 = arith.constant 0 : i32
    %c0_i32_0 = arith.constant 0 : i32
    %c0_i32_1 = arith.constant 0 : i32
    return %c0_i32, %c0_i32_0 : i32, i32
  }
  func.func @transform_3(%arg0: i32) -> (i32, i32) {
    %c0_i32 = arith.constant 0 : i32
    %c0_i32_0 = arith.constant 0 : i32
    %c0_i32_1 = arith.constant 0 : i32
    return %c0_i32, %c0_i32_0 : i32, i32
  }
  func.func @transform_4(%arg0: i32) -> (i32, i32) {
    %c0_i32 = arith.constant 0 : i32
    %c0_i32_0 = arith.constant 0 : i32
    %c0_i32_1 = arith.constant 0 : i32
    return %c0_i32, %c0_i32_0 : i32, i32
  }
  func.func @transform_5(%arg0: i32) -> (i32, i32, i32) {
    %c0_i32 = arith.constant 0 : i32
    %c0_i32_0 = arith.constant 0 : i32
    %c0_i32_1 = arith.constant 0 : i32
    %c0_i32_2 = arith.constant 0 : i32
    return %c0_i32, %c0_i32_0, %c0_i32_1 : i32, i32, i32
  }
  func.func @transform_6(%arg0: i32) -> (i32, i32) {
    %c0_i32 = arith.constant 0 : i32
    %c0_i32_0 = arith.constant 0 : i32
    %c0_i32_1 = arith.constant 0 : i32
    return %c0_i32, %c0_i32_0 : i32, i32
  }
  func.func @transform_7(%arg0: i32) -> (i32, i32, i32) {
    %c0_i32 = arith.constant 0 : i32
    %c0_i32_0 = arith.constant 0 : i32
    %c0_i32_1 = arith.constant 0 : i32
    return %arg0, %c0_i32, %c0_i32_0 : i32, i32, i32
  }
}

</mosaic_0001>

<llo_original>
// kernel: tpu_custom_call.1
$region0: #{tpu_custom_call.1}
  #allocation0 [shape = 'u32[]', space=smem, size = 0x4, offset = 0x4, fixed_abs, tag = 'smem constant byte address 0x4 - core index']
  #allocation1 [shape = 'u32[144,128]{1,0:T(1,128)}', space=vmem, size = 0x12000, scoped, tag = 'internal scratch']
  #allocation2 [shape = 'bf16[288,384]{1,0:T(8,128)(2,1)}', space=vmem, size = 0x36000, scoped, tag = 'scratch operand']
  %s0 = inlined_call_operand.hbm [shape: bf16[2,256,128], index: 0, kind: input, shape index: {}]
  %s1 = inlined_call_operand.vmem [shape: f32[1,128], index: 1, kind: input, shape index: {}]
  %s2 = inlined_call_operand.vmem [shape: f32[1,128], index: 2, kind: input, shape index: {}]
  %s3 = inlined_call_operand.hbm [shape: bf16[128,128], index: 3, kind: input, shape index: {}]
  %s4 = inlined_call_operand.vmem [shape: f32[1,128], index: 4, kind: input, shape index: {}]
  %s5 = inlined_call_operand.hbm [shape: bf16[3,384,128], index: 5, kind: input, shape index: {}]
  %s6 = inlined_call_operand.hbm [shape: bf16[128,128], index: 6, kind: input, shape index: {}]
  %s7 = inlined_call_operand.hbm [shape: bf16[2,256,128], index: 7, kind: output, shape index: {}]
  %s8 = sld [smem:[#allocation0]]
  $region77: #{tpu_custom_call.1} parent=0
    _
  %s10 = ssub.s32 1, %s8
  %s11 = scalar_select 0, %s10, %s8
  $region1: #{tpu_custom_call.1} parent=0
    #allocation3 [shape = 'u8[131072]{0}', space=vmem, size = 0x20000, scoped, tag = 'input window, operand 0']
    #allocation4 [shape = 's32[2]{0}', space=sflag, size = 0x8, scoped, tag = 'scoped memory for tpu_custom_call.1']
    #allocation5 [shape = 's32[2]{0}', space=sflag, size = 0x8, scoped, tag = 'scoped memory for tpu_custom_call.1']
    #allocation6 [shape = 'u8[32768]{0}', space=vmem, size = 0x8000, scoped, tag = 'input window, operand 3, single buffered']
    #allocation7 [shape = 's32[1]{0}', space=sflag, size = 0x4, scoped, tag = 'scoped memory for tpu_custom_call.1']
    #allocation8 [shape = 'u8[294912]{0}', space=vmem, size = 0x48000, scoped, tag = 'input window, operand 5, single buffered']
    #allocation9 [shape = 'u8[32768]{0}', space=vmem, size = 0x8000, scoped, tag = 'input window, operand 6, single buffered']
    #allocation10 [shape = 's32[1]{0}', space=sflag, size = 0x4, scoped, tag = 'scoped memory for tpu_custom_call.1']
    #allocation11 [shape = 'u8[131072]{0}', space=vmem, size = 0x20000, scoped, tag = 'output window, operand 0']
    %12 = vsyncpa [#allocation4], 0
    %s13 = scalar_lea.sflag [#allocation4], 1
    %14 = vsyncpa %s13, 0
    %15 = vsyncpa [#allocation7], 0
    %16 = vsyncpa [#allocation10], 0
    %17 = vsyncpa [#allocation5], 0
    %s18 = scalar_lea.sflag [#allocation5], 1
    %19 = vsyncpa %s18, 0
    loop: start=0, step=1, limit=4
    $region2: #{tpu_custom_call.1} parent=1 // loop_pre_header
      _
    $region3: #{tpu_custom_call.1} parent=1 // loop_header
      %s21 = sphi 0, %s25
      %p22 = scmp.ge.s32.totalorder %s21, 4
      %s31 = sphi 0, %s33
      %s34 = sphi 0, %s31
      %s35 = sphi 0, %s34
      %s51 = sphi 0, %s35
      %s55 = sphi 0, %s55
      %s57 = sphi 0, %s55
      %s58 = sphi 0, %s57
      %s72 = sphi 0, %s58
      %s76 = sphi 0, %s76
      %s78 = sphi 0, %s76
      %s79 = sphi 0, %s78
      %s93 = sphi 0, %s79
      %s97 = sphi 0, %s97
      %s99 = sphi 0, %s97
      %s100 = sphi 0, %s99
      %s114 = sphi 0, %s100
      %s118 = sphi 0, %s118
      %s120 = sphi 0, %s118
      %s121 = sphi 0, %s120
      %s135 = sphi 0, %s121
      %s139 = sphi 0, %s139
      %s141 = sphi 0, %s139
      %s142 = sphi 0, %s141
      %s156 = sphi 0, %s142
      %s160 = sphi 0, %s160
      %s162 = sphi 0, %s160
      %s163 = sphi 0, %s162
      %s177 = sphi 0, %s163
      %s183 = sphi 0, %s185
      %s186 = sphi 0, %s183
      %s187 = sphi 0, %s186
      %s203 = sphi 0, %s187
    $region4: #{tpu_custom_call.1} parent=1 // loop_header_branch
      %24 = sbr.rel (%p22) target = $region8
    $region5: #{tpu_custom_call.1} parent=1 // loop_body
      %s26 = ssub.s32 %s21, 1
      %s27 = ssub.s32 %s21, 2
      %s28 = sadd.s32 %s21, 1
      %s29 = ssub.s32 %s21, %s28
      %p30 = scmp.eq.s32.totalorder %s29, 0
      %s32 = sadd.s32 %s31, 1
      %s33 = scalar_select %p30, %s31, %s32
      %p36 = pneg %p30
      %p37 = scmp.eq.s32.totalorder %s21, 1
      %p38 = por %p36, %p37
      %p39 = scmp.ne.s32.totalorder %s31, %s34
      %p40 = scmp.eq.s32.totalorder %s21, 0
      %p41 = por %p39, %p40
      %p42 = scmp.ne.s32.totalorder %s31, %s34
      %p43 = scmp.eq.s32.totalorder %s26, 1
      %p44 = por %p42, %p43
      %p45 = scmp.ne.s32.totalorder %s34, %s35
      %p46 = scmp.eq.s32.totalorder %s26, 0
      %p47 = por %p45, %p46
      %p48 = scmp.ne.s32.totalorder %s34, %s35
      %p49 = scmp.eq.s32.totalorder %s27, 1
      %p50 = por %p48, %p49
      %p52 = scmp.ne.s32.totalorder %s35, %s51
      %p53 = scmp.eq.s32.totalorder %s27, 0
      %p54 = por %p52, %p53
      %s56 = sadd.s32 %s55, 1
      %p59 = scmp.eq.s32.totalorder %s21, 1
      %p60 = scmp.ne.s32.totalorder %s55, %s57
      %p61 = scmp.eq.s32.totalorder %s21, 0
      %p62 = por %p60, %p61
      %p63 = scmp.ne.s32.totalorder %s55, %s57
      %p64 = scmp.eq.s32.totalorder %s26, 1
      %p65 = por %p63, %p64
      %p66 = scmp.ne.s32.totalorder %s57, %s58
      %p67 = scmp.eq.s32.totalorder %s26, 0
      %p68 = por %p66, %p67
      %p69 = scmp.ne.s32.totalorder %s57, %s58
      %p70 = scmp.eq.s32.totalorder %s27, 1
      %p71 = por %p69, %p70
      %p73 = scmp.ne.s32.totalorder %s58, %s72
      %p74 = scmp.eq.s32.totalorder %s27, 0
      %p75 = por %p73, %p74
      %s77 = sadd.s32 %s76, 1
      %p80 = scmp.eq.s32.totalorder %s21, 1
      %p81 = scmp.ne.s32.totalorder %s76, %s78
      %p82 = scmp.eq.s32.totalorder %s21, 0
      %p83 = por %p81, %p82
      %p84 = scmp.ne.s32.totalorder %s76, %s78
      %p85 = scmp.eq.s32.totalorder %s26, 1
      %p86 = por %p84, %p85
      %p87 = scmp.ne.s32.totalorder %s78, %s79
      %p88 = scmp.eq.s32.totalorder %s26, 0
      %p89 = por %p87, %p88
      %p90 = scmp.ne.s32.totalorder %s78, %s79
      %p91 = scmp.eq.s32.totalorder %s27, 1
      %p92 = por %p90, %p91
      %p94 = scmp.ne.s32.totalorder %s79, %s93
      %p95 = scmp.eq.s32.totalorder %s27, 0
      %p96 = por %p94, %p95
      %s98 = sadd.s32 %s97, 1
      %p101 = scmp.eq.s32.totalorder %s21, 1
      %p102 = scmp.ne.s32.totalorder %s97, %s99
      %p103 = scmp.eq.s32.totalorder %s21, 0
      %p104 = por %p102, %p103
      %p105 = scmp.ne.s32.totalorder %s97, %s99
      %p106 = scmp.eq.s32.totalorder %s26, 1
      %p107 = por %p105, %p106
      %p108 = scmp.ne.s32.totalorder %s99, %s100
      %p109 = scmp.eq.s32.totalorder %s26, 0
      %p110 = por %p108, %p109
      %p111 = scmp.ne.s32.totalorder %s99, %s100
      %p112 = scmp.eq.s32.totalorder %s27, 1
      %p113 = por %p111, %p112
      %p115 = scmp.ne.s32.totalorder %s100, %s114
      %p116 = scmp.eq.s32.totalorder %s27, 0
      %p117 = por %p115, %p116
      %s119 = sadd.s32 %s118, 1
      %p122 = scmp.eq.s32.totalorder %s21, 1
      %p123 = scmp.ne.s32.totalorder %s118, %s120
      %p124 = scmp.eq.s32.totalorder %s21, 0
      %p125 = por %p123, %p124
      %p126 = scmp.ne.s32.totalorder %s118, %s120
      %p127 = scmp.eq.s32.totalorder %s26, 1
      %p128 = por %p126, %p127
      %p129 = scmp.ne.s32.totalorder %s120, %s121
      %p130 = scmp.eq.s32.totalorder %s26, 0
      %p131 = por %p129, %p130
      %p132 = scmp.ne.s32.totalorder %s120, %s121
      %p133 = scmp.eq.s32.totalorder %s27, 1
      %p134 = por %p132, %p133
      %p136 = scmp.ne.s32.totalorder %s121, %s135
      %p137 = scmp.eq.s32.totalorder %s27, 0
      %p138 = por %p136, %p137
      %s140 = sadd.s32 %s139, 1
      %p143 = scmp.eq.s32.totalorder %s21, 1
      %p144 = scmp.ne.s32.totalorder %s139, %s141
      %p145 = scmp.eq.s32.totalorder %s21, 0
      %p146 = por %p144, %p145
      %p147 = scmp.ne.s32.totalorder %s139, %s141
      %p148 = scmp.eq.s32.totalorder %s26, 1
      %p149 = por %p147, %p148
      %p150 = scmp.ne.s32.totalorder %s141, %s142
      %p151 = scmp.eq.s32.totalorder %s26, 0
      %p152 = por %p150, %p151
      %p153 = scmp.ne.s32.totalorder %s141, %s142
      %p154 = scmp.eq.s32.totalorder %s27, 1
      %p155 = por %p153, %p154
      %p157 = scmp.ne.s32.totalorder %s142, %s156
      %p158 = scmp.eq.s32.totalorder %s27, 0
      %p159 = por %p157, %p158
      %s161 = sadd.s32 %s160, 1
      %p164 = scmp.eq.s32.totalorder %s21, 1
      %p165 = scmp.ne.s32.totalorder %s160, %s162
      %p166 = scmp.eq.s32.totalorder %s21, 0
      %p167 = por %p165, %p166
      %p168 = scmp.ne.s32.totalorder %s160, %s162
      %p169 = scmp.eq.s32.totalorder %s26, 1
      %p170 = por %p168, %p169
      %p171 = scmp.ne.s32.totalorder %s162, %s163
      %p172 = scmp.eq.s32.totalorder %s26, 0
      %p173 = por %p171, %p172
      %p174 = scmp.ne.s32.totalorder %s162, %s163
      %p175 = scmp.eq.s32.totalorder %s27, 1
      %p176 = por %p174, %p175
      %p178 = scmp.ne.s32.totalorder %s163, %s177
      %p179 = scmp.eq.s32.totalorder %s27, 0
      %p180 = por %p178, %p179
      %s181 = ssub.s32 %s21, %s28
      %p182 = scmp.eq.s32.totalorder %s181, 0
      %s184 = sadd.s32 %s183, 1
      %s185 = scalar_select %p182, %s183, %s184
      %p188 = pneg %p182
      %p189 = scmp.eq.s32.totalorder %s21, 1
      %p190 = por %p188, %p189
      %p191 = scmp.ne.s32.totalorder %s183, %s186
      %p192 = scmp.eq.s32.totalorder %s21, 0
      %p193 = por %p191, %p192
      %p194 = scmp.ne.s32.totalorder %s183, %s186
      %p195 = scmp.eq.s32.totalorder %s26, 1
      %p196 = por %p194, %p195
      %p197 = scmp.ne.s32.totalorder %s186, %s187
      %p198 = scmp.eq.s32.totalorder %s26, 0
      %p199 = por %p197, %p198
      %p200 = scmp.ne.s32.totalorder %s186, %s187
      %p201 = scmp.eq.s32.totalorder %s27, 1
      %p202 = por %p200, %p201
      %p204 = scmp.ne.s32.totalorder %s187, %s203
      %p205 = scmp.eq.s32.totalorder %s27, 0
      %p206 = por %p204, %p205
      %p207 = scmp.le.s32.totalorder 1, %s21
      %p208 = scmp.lt.s32.totalorder %s21, 3
      %p209 = pnand %p207, %p208
      %p210 = pneg %p209
      // Predicated region
      $region9: #{tpu_custom_call.1} parent=5 // pred_check
        _
      $region10: #{tpu_custom_call.1} parent=5 // pred_check_branch
        %212 = sbr.rel (%p209) target = $region12
      $region11: #{tpu_custom_call.1} parent=5 // pred_region
        %s213 = ssub.s32 %s21, 1
        // Predicated region
        $region13: #{tpu_custom_call.1} parent=11 // pred_check
          %p214 = pneg %p68
        $region14: #{tpu_custom_call.1} parent=11 // pred_check_branch
          %216 = sbr.rel (%p214) target = $region16
        $region15: #{tpu_custom_call.1} parent=11 // pred_region
          _
        $region16: #{tpu_custom_call.1} parent=11 // pred_fallthru
          _
        // Predicated region
        $region17: #{tpu_custom_call.1} parent=11 // pred_check
          %p217 = pneg %p89
        $region18: #{tpu_custom_call.1} parent=11 // pred_check_branch
          %219 = sbr.rel (%p217) target = $region20
        $region19: #{tpu_custom_call.1} parent=11 // pred_region
          _
        $region20: #{tpu_custom_call.1} parent=11 // pred_fallthru
          _
        // Predicated region
        $region21: #{tpu_custom_call.1} parent=11 // pred_check
          %p220 = pneg %p110
        $region22: #{tpu_custom_call.1} parent=11 // pred_check_branch
          %222 = sbr.rel (%p220) target = $region24
        $region23: #{tpu_custom_call.1} parent=11 // pred_region
          %s224 = ssub.s32 1024, 1024
          %225 = vsyncadd [#allocation7], %s224
          %s226 = sshll.u32 [#allocation6], 4
          %s227 = int_to_ptr.vmem [resolvable:$true] %s226
          %232 = dma.hbm_to_vmem [thread:$0]  %s3, 1024, %s227, [#allocation7], 64, 64, 4
        $region24: #{tpu_custom_call.1} parent=11 // pred_fallthru
          _
        // Predicated region
        $region25: #{tpu_custom_call.1} parent=11 // pred_check
          %p233 = pneg %p131
        $region26: #{tpu_custom_call.1} parent=11 // pred_check_branch
          %235 = sbr.rel (%p233) target = $region28
        $region27: #{tpu_custom_call.1} parent=11 // pred_region
          _
        $region28: #{tpu_custom_call.1} parent=11 // pred_fallthru
          _
        // Predicated region
        $region29: #{tpu_custom_call.1} parent=11 // pred_check
          %p236 = pneg %p152
        $region30: #{tpu_custom_call.1} parent=11 // pred_check_branch
          %238 = sbr.rel (%p236) target = $region32
        $region31: #{tpu_custom_call.1} parent=11 // pred_region
          %s240 = ssub.s32 9216, 9216
          %241 = vsyncadd [#allocation7], %s240
          %s242 = sshll.u32 [#allocation8], 4
          %s243 = int_to_ptr.vmem [resolvable:$true] %s242
          %248 = dma.hbm_to_vmem [thread:$0]  %s5, 9216, %s243, [#allocation7], 64, 64, 4
        $region32: #{tpu_custom_call.1} parent=11 // pred_fallthru
          _
        // Predicated region
        $region33: #{tpu_custom_call.1} parent=11 // pred_check
          %p249 = pneg %p173
        $region34: #{tpu_custom_call.1} parent=11 // pred_check_branch
          %251 = sbr.rel (%p249) target = $region36
        $region35: #{tpu_custom_call.1} parent=11 // pred_region
          %s253 = ssub.s32 1024, 1024
          %254 = vsyncadd [#allocation10], %s253
          %s255 = sshll.u32 [#allocation9], 4
          %s256 = int_to_ptr.vmem [resolvable:$true] %s255
          %261 = dma.hbm_to_vmem [thread:$0]  %s6, 1024, %s256, [#allocation10], 64, 64, 4
        $region36: #{tpu_custom_call.1} parent=11 // pred_fallthru
          _
      $region12: #{tpu_custom_call.1} parent=5 // pred_fallthru
        _
      %p262 = scmp.lt.s32.totalorder %s21, 2
      // Predicated region
      $region37: #{tpu_custom_call.1} parent=5 // pred_check
        %p263 = pneg %p262
      $region38: #{tpu_custom_call.1} parent=5 // pred_check_branch
        %265 = sbr.rel (%p263) target = $region40
      $region39: #{tpu_custom_call.1} parent=5 // pred_region
        // Predicated region
        $region41: #{tpu_custom_call.1} parent=39 // pred_check
          %p266 = pneg %p41
        $region42: #{tpu_custom_call.1} parent=39 // pred_check_branch
          %268 = sbr.rel (%p266) target = $region44
        $region43: #{tpu_custom_call.1} parent=39 // pred_region
          %s269 = sand.u32 %s31, 1
          %s270 = scalar_lea.sflag [#allocation4], %s269
          %s271 = sand.u32 %s31, 1
          %s272 = smul.addr %s271, 128
          %s273 = scalar_lea.vmem [#allocation3], %s272
          %s275 = ssub.s32 2048, 2048
          %276 = vsyncadd %s270, %s275
          %s277 = smul.addr %s21, 32
          %s278 = smul.addr %s277, 64
          %s279 = scalar_lea.hbm %s0, %s278
          %s280 = sshll.u32 %s273, 4
          %s281 = int_to_ptr.vmem [resolvable:$true] %s280
          %286 = dma.hbm_to_vmem [thread:$0]  %s279, 2048, %s281, %s270, 64, 64, 4
        $region44: #{tpu_custom_call.1} parent=39 // pred_fallthru
          _
      $region40: #{tpu_custom_call.1} parent=5 // pred_fallthru
        _
      %p287 = scmp.le.s32.totalorder 1, %s21
      %p288 = scmp.lt.s32.totalorder %s21, 3
      %p289 = pnand %p287, %p288
      %p290 = pneg %p289
      // Predicated region
      $region45: #{tpu_custom_call.1} parent=5 // pred_check
        _
      $region46: #{tpu_custom_call.1} parent=5 // pred_check_branch
        %292 = sbr.rel (%p289) target = $region48
      $region47: #{tpu_custom_call.1} parent=5 // pred_region
        %s293 = ssub.s32 %s21, 1
        %s294 = sand.u32 %s34, 1
        %s295 = scalar_lea.sflag [#allocation4], %s294
        %s296 = sand.u32 %s34, 1
        %s297 = smul.addr %s296, 128
        %s298 = scalar_lea.vmem [#allocation3], %s297
        // Predicated region
        $region49: #{tpu_custom_call.1} parent=47 // pred_check
          %p299 = pneg %p47
        $region50: #{tpu_custom_call.1} parent=47 // pred_check_branch
          %301 = sbr.rel (%p299) target = $region52
        $region51: #{tpu_custom_call.1} parent=47 // pred_region
          %302 = dma.done %s295, 2048
        $region52: #{tpu_custom_call.1} parent=47 // pred_fallthru
          _
        // Predicated region
        $region53: #{tpu_custom_call.1} parent=47 // pred_check
          %p303 = pneg %p110
        $region54: #{tpu_custom_call.1} parent=47 // pred_check_branch
          %305 = sbr.rel (%p303) target = $region56
        $region55: #{tpu_custom_call.1} parent=47 // pred_region
          %306 = dma.done [#allocation7], 1024
        $region56: #{tpu_custom_call.1} parent=47 // pred_fallthru
          _
        // Predicated region
        $region57: #{tpu_custom_call.1} parent=47 // pred_check
          %p307 = pneg %p152
        $region58: #{tpu_custom_call.1} parent=47 // pred_check_branch
          %309 = sbr.rel (%p307) target = $region60
        $region59: #{tpu_custom_call.1} parent=47 // pred_region
          %310 = dma.done [#allocation7], 9216
        $region60: #{tpu_custom_call.1} parent=47 // pred_fallthru
          _
        // Predicated region
        $region61: #{tpu_custom_call.1} parent=47 // pred_check
          %p311 = pneg %p173
        $region62: #{tpu_custom_call.1} parent=47 // pred_check_branch
          %313 = sbr.rel (%p311) target = $region64
        $region63: #{tpu_custom_call.1} parent=47 // pred_region
          %314 = dma.done [#allocation10], 1024
        $region64: #{tpu_custom_call.1} parent=47 // pred_fallthru
          _
        %s315 = sand.u32 %s34, 1
        %s316 = scalar_lea.sflag [#allocation4], %s315
        %s317 = sand.u32 %s34, 1
        %s318 = smul.addr %s317, 128
        %s319 = scalar_lea.vmem [#allocation3], %s318
        %p320 = pneg %p47
        %p321 = pneg %p44
        %p322 = pneg %p68
        %p323 = pneg %p65
        %p324 = pneg %p89
        %p325 = pneg %p86
        %p326 = pneg %p110
        %p327 = pneg %p107
        %p328 = pneg %p131
        %p329 = pneg %p128
        %p330 = pneg %p152
        %p331 = pneg %p149
        %p332 = pneg %p173
        %p333 = pneg %p170
        %p334 = pneg %p199
        %p335 = pneg %p196
        %s336 = sand.u32 %s186, 1
        %s337 = scalar_lea.sflag [#allocation5], %s336
        %s338 = sand.u32 %s186, 1
        %s339 = smul.addr %s338, 128
        %s340 = scalar_lea.vmem [#allocation11], %s339
        %v344 = vld [vmem:[%s298] sm:$0xf]
        %v345 = vld [vmem:[%s298 + $0x4] sm:$0xf]
        %v346 = vld [vmem:[%s298 + $0x8] sm:$0xf]
        %v347 = vld [vmem:[%s298 + $0xc] sm:$0xf]
        %v348 = vld [vmem:[%s298 + $0x10] sm:$0xf]
        %v349 = vld [vmem:[%s298 + $0x14] sm:$0xf]
        %v350 = vld [vmem:[%s298 + $0x18] sm:$0xf]
        %v351 = vld [vmem:[%s298 + $0x1c] sm:$0xf]
        %v352 = vld [vmem:[%s298 + $0x20] sm:$0xf]
        %v353 = vld [vmem:[%s298 + $0x24] sm:$0xf]
        %v354 = vld [vmem:[%s298 + $0x28] sm:$0xf]
        %v355 = vld [vmem:[%s298 + $0x2c] sm:$0xf]
        %v356 = vld [vmem:[%s298 + $0x30] sm:$0xf]
        %v357 = vld [vmem:[%s298 + $0x34] sm:$0xf]
        %v358 = vld [vmem:[%s298 + $0x38] sm:$0xf]
        %v359 = vld [vmem:[%s298 + $0x3c] sm:$0xf]
        %v360 = vld [vmem:[%s298 + $0x40] sm:$0xf]
        %v361 = vld [vmem:[%s298 + $0x44] sm:$0xf]
        %v362 = vld [vmem:[%s298 + $0x48] sm:$0xf]
        %v363 = vld [vmem:[%s298 + $0x4c] sm:$0xf]
        %v364 = vld [vmem:[%s298 + $0x50] sm:$0xf]
        %v365 = vld [vmem:[%s298 + $0x54] sm:$0xf]
        %v366 = vld [vmem:[%s298 + $0x58] sm:$0xf]
        %v367 = vld [vmem:[%s298 + $0x5c] sm:$0xf]
        %v368 = vld [vmem:[%s298 + $0x60] sm:$0xf]
        %v369 = vld [vmem:[%s298 + $0x64] sm:$0xf]
        %v370 = vld [vmem:[%s298 + $0x68] sm:$0xf]
        %v371 = vld [vmem:[%s298 + $0x6c] sm:$0xf]
        %v372 = vld [vmem:[%s298 + $0x70] sm:$0xf]
        %v373 = vld [vmem:[%s298 + $0x74] sm:$0xf]
        %v374 = vld [vmem:[%s298 + $0x78] sm:$0xf]
        %v375 = vld [vmem:[%s298 + $0x7c] sm:$0xf]
        %v376 = vunpack.c.l.bf16 %v344
        %v377 = vunpack.c.l.bf16 %v345
        %v378 = vunpack.c.l.bf16 %v346
        %v379 = vunpack.c.l.bf16 %v347
        %v380 = vunpack.c.l.bf16 %v348
        %v381 = vunpack.c.l.bf16 %v349
        %v382 = vunpack.c.l.bf16 %v350
        %v383 = vunpack.c.l.bf16 %v351
        %v384 = vunpack.c.l.bf16 %v352
        %v385 = vunpack.c.l.bf16 %v353
        %v386 = vunpack.c.l.bf16 %v354
        %v387 = vunpack.c.l.bf16 %v355
        %v388 = vunpack.c.l.bf16 %v356
        %v389 = vunpack.c.l.bf16 %v357
        %v390 = vunpack.c.l.bf16 %v358
        %v391 = vunpack.c.l.bf16 %v359
        %v392 = vunpack.c.l.bf16 %v360
        %v393 = vunpack.c.l.bf16 %v361
        %v394 = vunpack.c.l.bf16 %v362
        %v395 = vunpack.c.l.bf16 %v363
        %v396 = vunpack.c.l.bf16 %v364
        %v397 = vunpack.c.l.bf16 %v365
        %v398 = vunpack.c.l.bf16 %v366
        %v399 = vunpack.c.l.bf16 %v367
        %v400 = vunpack.c.l.bf16 %v368
        %v401 = vunpack.c.l.bf16 %v369
        %v402 = vunpack.c.l.bf16 %v370
        %v403 = vunpack.c.l.bf16 %v371
        %v404 = vunpack.c.l.bf16 %v372
        %v405 = vunpack.c.l.bf16 %v373
        %v406 = vunpack.c.l.bf16 %v374
        %v407 = vunpack.c.l.bf16 %v375
        %v408 = vld [vmem:[%s1] sm:$0x1]
        %v410 = vlaneseq
        %v411 = vshrl.u32 %v410, 7
        %v412 = vsub.s32 0, %v411
        %v413 = vrot.slane %v408, %v412
        %v415 = vmul.f32 %v376, %v413
        %v416 = vmul.f32 %v377, %v413
        %v417 = vmul.f32 %v378, %v413
        %v418 = vmul.f32 %v379, %v413
        %v419 = vmul.f32 %v380, %v413
        %v420 = vmul.f32 %v381, %v413
        %v421 = vmul.f32 %v382, %v413
        %v422 = vmul.f32 %v383, %v413
        %v423 = vmul.f32 %v384, %v413
        %v424 = vmul.f32 %v385, %v413
        %v425 = vmul.f32 %v386, %v413
        %v426 = vmul.f32 %v387, %v413
        %v427 = vmul.f32 %v388, %v413
        %v428 = vmul.f32 %v389, %v413
        %v429 = vmul.f32 %v390, %v413
        %v430 = vmul.f32 %v391, %v413
        %v431 = vmul.f32 %v392, %v413
        %v432 = vmul.f32 %v393, %v413
        %v433 = vmul.f32 %v394, %v413
        %v434 = vmul.f32 %v395, %v413
        %v435 = vmul.f32 %v396, %v413
        %v436 = vmul.f32 %v397, %v413
        %v437 = vmul.f32 %v398, %v413
        %v438 = vmul.f32 %v399, %v413
        %v439 = vmul.f32 %v400, %v413
        %v440 = vmul.f32 %v401, %v413
        %v441 = vmul.f32 %v402, %v413
        %v442 = vmul.f32 %v403, %v413
        %v443 = vmul.f32 %v404, %v413
        %v444 = vmul.f32 %v405, %v413
        %v445 = vmul.f32 %v406, %v413
        %v446 = vmul.f32 %v407, %v413
        %v447 = vld [vmem:[%s2] sm:$0x1]
        %v449 = vlaneseq
        %v450 = vshrl.u32 %v449, 7
        %v451 = vsub.s32 0, %v450
        %v452 = vrot.slane %v447, %v451
        %v454 = vadd.f32 %v415, %v452
        %v455 = vadd.f32 %v416, %v452
        %v456 = vadd.f32 %v417, %v452
        %v457 = vadd.f32 %v418, %v452
        %v458 = vadd.f32 %v419, %v452
        %v459 = vadd.f32 %v420, %v452
        %v460 = vadd.f32 %v421, %v452
        %v461 = vadd.f32 %v422, %v452
        %v462 = vadd.f32 %v423, %v452
        %v463 = vadd.f32 %v424, %v452
        %v464 = vadd.f32 %v425, %v452
        %v465 = vadd.f32 %v426, %v452
        %v466 = vadd.f32 %v427, %v452
        %v467 = vadd.f32 %v428, %v452
        %v468 = vadd.f32 %v429, %v452
        %v469 = vadd.f32 %v430, %v452
        %v470 = vadd.f32 %v431, %v452
        %v471 = vadd.f32 %v432, %v452
        %v472 = vadd.f32 %v433, %v452
        %v473 = vadd.f32 %v434, %v452
        %v474 = vadd.f32 %v435, %v452
        %v475 = vadd.f32 %v436, %v452
        %v476 = vadd.f32 %v437, %v452
        %v477 = vadd.f32 %v438, %v452
        %v478 = vadd.f32 %v439, %v452
        %v479 = vadd.f32 %v440, %v452
        %v480 = vadd.f32 %v441, %v452
        %v481 = vadd.f32 %v442, %v452
        %v482 = vadd.f32 %v443, %v452
        %v483 = vadd.f32 %v444, %v452
        %v484 = vadd.f32 %v445, %v452
        %v485 = vadd.f32 %v446, %v452
        %v486 = vmax.f32 %v454, 0.0
        %v487 = vmax.f32 %v455, 0.0
        %v488 = vmax.f32 %v456, 0.0
        %v489 = vmax.f32 %v457, 0.0
        %v490 = vmax.f32 %v458, 0.0
        %v491 = vmax.f32 %v459, 0.0
        %v492 = vmax.f32 %v460, 0.0
        %v493 = vmax.f32 %v461, 0.0
        %v494 = vmax.f32 %v462, 0.0
        %v495 = vmax.f32 %v463, 0.0
        %v496 = vmax.f32 %v464, 0.0
        %v497 = vmax.f32 %v465, 0.0
        %v498 = vmax.f32 %v466, 0.0
        %v499 = vmax.f32 %v467, 0.0
        %v500 = vmax.f32 %v468, 0.0
        %v501 = vmax.f32 %v469, 0.0
        %v502 = vmax.f32 %v470, 0.0
        %v503 = vmax.f32 %v471, 0.0
        %v504 = vmax.f32 %v472, 0.0
        %v505 = vmax.f32 %v473, 0.0
        %v506 = vmax.f32 %v474, 0.0
        %v507 = vmax.f32 %v475, 0.0
        %v508 = vmax.f32 %v476, 0.0
        %v509 = vmax.f32 %v477, 0.0
        %v510 = vmax.f32 %v478, 0.0
        %v511 = vmax.f32 %v479, 0.0
        %v512 = vmax.f32 %v480, 0.0
        %v513 = vmax.f32 %v481, 0.0
        %v514 = vmax.f32 %v482, 0.0
        %v515 = vmax.f32 %v483, 0.0
        %v516 = vmax.f32 %v484, 0.0
        %v517 = vmax.f32 %v485, 0.0
        %v518 = vpack.c.bf16 %v487, %v486
        %v519 = vpack.c.bf16 %v489, %v488
        %v520 = vpack.c.bf16 %v491, %v490
        %v521 = vpack.c.bf16 %v493, %v492
        %v522 = vpack.c.bf16 %v495, %v494
        %v523 = vpack.c.bf16 %v497, %v496
        %v524 = vpack.c.bf16 %v499, %v498
        %v525 = vpack.c.bf16 %v501, %v500
        %v526 = vpack.c.bf16 %v503, %v502
        %v527 = vpack.c.bf16 %v505, %v504
        %v528 = vpack.c.bf16 %v507, %v506
        %v529 = vpack.c.bf16 %v509, %v508
        %v530 = vpack.c.bf16 %v511, %v510
        %v531 = vpack.c.bf16 %v513, %v512
        %v532 = vpack.c.bf16 %v515, %v514
        %v533 = vpack.c.bf16 %v517, %v516
        %v534 = vld [vmem:[#allocation6] sm:$0xf]
        %v535 = vld [vmem:[#allocation6 + $0x4] sm:$0xf]
        %v536 = vld [vmem:[#allocation6 + $0x8] sm:$0xf]
        %v537 = vld [vmem:[#allocation6 + $0xc] sm:$0xf]
        %v538 = vld [vmem:[#allocation6 + $0x10] sm:$0xf]
        %v539 = vld [vmem:[#allocation6 + $0x14] sm:$0xf]
        %v540 = vld [vmem:[#allocation6 + $0x18] sm:$0xf]
        %v541 = vld [vmem:[#allocation6 + $0x1c] sm:$0xf]
        %v542 = vld [vmem:[#allocation6 + $0x20] sm:$0xf]
        %v543 = vld [vmem:[#allocation6 + $0x24] sm:$0xf]
        %v544 = vld [vmem:[#allocation6 + $0x28] sm:$0xf]
        %v545 = vld [vmem:[#allocation6 + $0x2c] sm:$0xf]
        %v546 = vld [vmem:[#allocation6 + $0x30] sm:$0xf]
        %v547 = vld [vmem:[#allocation6 + $0x34] sm:$0xf]
        %v548 = vld [vmem:[#allocation6 + $0x38] sm:$0xf]
        %v549 = vld [vmem:[#allocation6 + $0x3c] sm:$0xf]
        %v550 = vld [vmem:[%s4] sm:$0x1]
        %v552 = vlaneseq
        %v553 = vshrl.u32 %v552, 7
        %v554 = vsub.s32 0, %v553
        %v555 = vrot.slane %v550, %v554
        %v573 = vunpack.c.l.b16 %v534
        %v574 = vunpack.c.l.b16 %v535
        %v575 = vunpack.c.l.b16 %v536
        %v576 = vunpack.c.l.b16 %v537
        %v577 = vunpack.c.l.b16 %v538
        %v578 = vunpack.c.l.b16 %v539
        %v579 = vunpack.c.l.b16 %v540
        %v580 = vunpack.c.l.b16 %v541
        %v581 = vunpack.c.l.b16 %v542
        %v582 = vunpack.c.l.b16 %v543
        %v583 = vunpack.c.l.b16 %v544
        %v584 = vunpack.c.l.b16 %v545
        %v585 = vunpack.c.l.b16 %v546
        %v586 = vunpack.c.l.b16 %v547
        %v587 = vunpack.c.l.b16 %v548
        %v588 = vunpack.c.l.b16 %v549
        %v589 = vpack.c.b16 %v574, %v573
        %v590 = vpack.c.b16 %v576, %v575
        %v591 = vpack.c.b16 %v578, %v577
        %v592 = vpack.c.b16 %v580, %v579
        %v593 = vpack.c.b16 %v582, %v581
        %v594 = vpack.c.b16 %v584, %v583
        %v595 = vpack.c.b16 %v586, %v585
        %v596 = vpack.c.b16 %v588, %v587
        %605 = vmatprep.subr.bf16.mxu0 0
        %606 = vmatpush1.bf16.msra.mxu0 %v596
        %607 = vmatprep.subr.bf16.mxu0 0
        %608 = vmatpush1.bf16.msra.mxu0 %v595
        %609 = vmatprep.subr.bf16.mxu0 0
        %610 = vmatpush1.bf16.msra.mxu0 %v594
        %611 = vmatprep.subr.bf16.mxu0 0
        %612 = vmatpush1.bf16.msra.mxu0 %v593
        %613 = vmatprep.subr.bf16.mxu0 0
        %614 = vmatpush1.bf16.msra.mxu0 %v592
        %615 = vmatprep.subr.bf16.mxu0 0
        %616 = vmatpush1.bf16.msra.mxu0 %v591
        %617 = vmatprep.subr.bf16.mxu0 0
        %618 = vmatpush1.bf16.msra.mxu0 %v590
        %619 = vmatprep.subr.bf16.mxu0 0
        %620 = vmatpush1.bf16.msra.mxu0 %v589
        %621 = vmatprep.subr.bf16.mxu0 0
        %622 = vmatpush2.bf16.msra.mxu0 0
        %623 = vmatprep.subr.bf16.mxu0 0
        %624 = vmatpush2.bf16.msra.mxu0 0
        %625 = vmatprep.subr.bf16.mxu0 0
        %626 = vmatpush2.bf16.msra.mxu0 0
        %627 = vmatprep.subr.bf16.mxu0 0
        %628 = vmatpush2.bf16.msra.mxu0 0
        %629 = vmatprep.subr.bf16.mxu0 0
        %630 = vmatpush2.bf16.msra.mxu0 0
        %631 = vmatprep.subr.bf16.mxu0 0
        %632 = vmatpush2.bf16.msra.mxu0 0
        %633 = vmatprep.subr.bf16.mxu0 0
        %634 = vmatpush2.bf16.msra.mxu0 0
        %635 = vmatprep.subr.bf16.mxu0 0
        %636 = vmatpush2.bf16.msra.mxu0 0
        %637 = vmatprep.mubr.bf16.mxu0 0
        %638 = vmatmul.mubr.bf16.gmra.mxu0 %v518
        %v639 = vpop.f32.mrf.mxu0
        %v640 = vadd.f32 %v555, %v639
        %v641 = vpop.f32.mrf.mxu0
        %v642 = vpop.f32.mrf.mxu0
        %v643 = vadd.f32 %v555, %v642
        %v644 = vpop.f32.mrf.mxu0
        %645 = vmatprep.mubr.bf16.mxu0 0
        %646 = vmatmul.mubr.bf16.gmra.mxu0 %v519
        %v647 = vpop.f32.mrf.mxu0
        %v648 = vadd.f32 %v555, %v647
        %v649 = vpop.f32.mrf.mxu0
        %v650 = vpop.f32.mrf.mxu0
        %v651 = vadd.f32 %v555, %v650
        %v652 = vpop.f32.mrf.mxu0
        %653 = vmatprep.mubr.bf16.mxu0 0
        %654 = vmatmul.mubr.bf16.gmra.mxu0 %v520
        %v655 = vpop.f32.mrf.mxu0
        %v656 = vadd.f32 %v555, %v655
        %v657 = vpop.f32.mrf.mxu0
        %v658 = vpop.f32.mrf.mxu0
        %v659 = vadd.f32 %v555, %v658
        %v660 = vpop.f32.mrf.mxu0
        %661 = vmatprep.mubr.bf16.mxu0 0
        %662 = vmatmul.mubr.bf16.gmra.mxu0 %v521
        %v663 = vpop.f32.mrf.mxu0
        %v664 = vadd.f32 %v555, %v663
        %v665 = vpop.f32.mrf.mxu0
        %v666 = vpop.f32.mrf.mxu0
        %v667 = vadd.f32 %v555, %v666
        %v668 = vpop.f32.mrf.mxu0
        %669 = vmatprep.mubr.bf16.mxu0 0
        %670 = vmatmul.mubr.bf16.gmra.mxu0 %v522
        %v671 = vpop.f32.mrf.mxu0
        %v672 = vadd.f32 %v555, %v671
        %v673 = vpop.f32.mrf.mxu0
        %v674 = vpop.f32.mrf.mxu0
        %v675 = vadd.f32 %v555, %v674
        %v676 = vpop.f32.mrf.mxu0
        %677 = vmatprep.mubr.bf16.mxu0 0
        %678 = vmatmul.mubr.bf16.gmra.mxu0 %v523
        %v679 = vpop.f32.mrf.mxu0
        %v680 = vadd.f32 %v555, %v679
        %v681 = vpop.f32.mrf.mxu0
        %v682 = vpop.f32.mrf.mxu0
        %v683 = vadd.f32 %v555, %v682
        %v684 = vpop.f32.mrf.mxu0
        %685 = vmatprep.mubr.bf16.mxu0 0
        %686 = vmatmul.mubr.bf16.gmra.mxu0 %v524
        %v687 = vpop.f32.mrf.mxu0
        %v688 = vadd.f32 %v555, %v687
        %v689 = vpop.f32.mrf.mxu0
        %v690 = vpop.f32.mrf.mxu0
        %v691 = vadd.f32 %v555, %v690
        %v692 = vpop.f32.mrf.mxu0
        %693 = vmatprep.mubr.bf16.mxu0 0
        %694 = vmatmul.mubr.bf16.gmra.mxu0 %v525
        %v695 = vpop.f32.mrf.mxu0
        %v696 = vadd.f32 %v555, %v695
        %v697 = vpop.f32.mrf.mxu0
        %v698 = vpop.f32.mrf.mxu0
        %v699 = vadd.f32 %v555, %v698
        %v700 = vpop.f32.mrf.mxu0
        %701 = vmatprep.mubr.bf16.mxu0 0
        %702 = vmatmul.mubr.bf16.gmra.mxu0 %v526
        %v703 = vpop.f32.mrf.mxu0
        %v704 = vadd.f32 %v555, %v703
        %v705 = vpop.f32.mrf.mxu0
        %v706 = vpop.f32.mrf.mxu0
        %v707 = vadd.f32 %v555, %v706
        %v708 = vpop.f32.mrf.mxu0
        %709 = vmatprep.mubr.bf16.mxu0 0
        %710 = vmatmul.mubr.bf16.gmra.mxu0 %v527
        %v711 = vpop.f32.mrf.mxu0
        %v712 = vadd.f32 %v555, %v711
        %v713 = vpop.f32.mrf.mxu0
        %v714 = vpop.f32.mrf.mxu0
        %v715 = vadd.f32 %v555, %v714
        %v716 = vpop.f32.mrf.mxu0
        %717 = vmatprep.mubr.bf16.mxu0 0
        %718 = vmatmul.mubr.bf16.gmra.mxu0 %v528
        %v719 = vpop.f32.mrf.mxu0
        %v720 = vadd.f32 %v555, %v719
        %v721 = vpop.f32.mrf.mxu0
        %v722 = vpop.f32.mrf.mxu0
        %v723 = vadd.f32 %v555, %v722
        %v724 = vpop.f32.mrf.mxu0
        %725 = vmatprep.mubr.bf16.mxu0 0
        %726 = vmatmul.mubr.bf16.gmra.mxu0 %v529
        %v727 = vpop.f32.mrf.mxu0
        %v728 = vadd.f32 %v555, %v727
        %v729 = vpop.f32.mrf.mxu0
        %v730 = vpop.f32.mrf.mxu0
        %v731 = vadd.f32 %v555, %v730
        %v732 = vpop.f32.mrf.mxu0
        %733 = vmatprep.mubr.bf16.mxu0 0
        %734 = vmatmul.mubr.bf16.gmra.mxu0 %v530
        %v735 = vpop.f32.mrf.mxu0
        %v736 = vadd.f32 %v555, %v735
        %v737 = vpop.f32.mrf.mxu0
        %v738 = vpop.f32.mrf.mxu0
        %v739 = vadd.f32 %v555, %v738
        %v740 = vpop.f32.mrf.mxu0
        %741 = vmatprep.mubr.bf16.mxu0 0
        %742 = vmatmul.mubr.bf16.gmra.mxu0 %v531
        %v743 = vpop.f32.mrf.mxu0
        %v744 = vadd.f32 %v555, %v743
        %v745 = vpop.f32.mrf.mxu0
        %v746 = vpop.f32.mrf.mxu0
        %v747 = vadd.f32 %v555, %v746
        %v748 = vpop.f32.mrf.mxu0
        %749 = vmatprep.mubr.bf16.mxu0 0
        %750 = vmatmul.mubr.bf16.gmra.mxu0 %v532
        %v751 = vpop.f32.mrf.mxu0
        %v752 = vadd.f32 %v555, %v751
        %v753 = vpop.f32.mrf.mxu0
        %v754 = vpop.f32.mrf.mxu0
        %v755 = vadd.f32 %v555, %v754
        %v756 = vpop.f32.mrf.mxu0
        %757 = vmatprep.mubr.bf16.mxu0 0
        %758 = vmatmul.mubr.bf16.gmra.mxu0 %v533
        %v759 = vpop.f32.mrf.mxu0
        %v760 = vadd.f32 %v555, %v759
        %v761 = vpop.f32.mrf.mxu0
        %v762 = vpop.f32.mrf.mxu0
        %v763 = vadd.f32 %v555, %v762
        %v764 = vpop.f32.mrf.mxu0
        %765 = vdwg.mxu0
        %v766 = vmax.f32 %v640, 0.0
        %v767 = vmax.f32 %v643, 0.0
        %v768 = vmax.f32 %v648, 0.0
        %v769 = vmax.f32 %v651, 0.0
        %v770 = vmax.f32 %v656, 0.0
        %v771 = vmax.f32 %v659, 0.0
        %v772 = vmax.f32 %v664, 0.0
        %v773 = vmax.f32 %v667, 0.0
        %v774 = vmax.f32 %v672, 0.0
        %v775 = vmax.f32 %v675, 0.0
        %v776 = vmax.f32 %v680, 0.0
        %v777 = vmax.f32 %v683, 0.0
        %v778 = vmax.f32 %v688, 0.0
        %v779 = vmax.f32 %v691, 0.0
        %v780 = vmax.f32 %v696, 0.0
        %v781 = vmax.f32 %v699, 0.0
        %v782 = vmax.f32 %v704, 0.0
        %v783 = vmax.f32 %v707, 0.0
        %v784 = vmax.f32 %v712, 0.0
        %v785 = vmax.f32 %v715, 0.0
        %v786 = vmax.f32 %v720, 0.0
        %v787 = vmax.f32 %v723, 0.0
        %v788 = vmax.f32 %v728, 0.0
        %v789 = vmax.f32 %v731, 0.0
        %v790 = vmax.f32 %v736, 0.0
        %v791 = vmax.f32 %v739, 0.0
        %v792 = vmax.f32 %v744, 0.0
        %v793 = vmax.f32 %v747, 0.0
        %v794 = vmax.f32 %v752, 0.0
        %v795 = vmax.f32 %v755, 0.0
        %v796 = vmax.f32 %v760, 0.0
        %v797 = vmax.f32 %v763, 0.0
        %v798 = vpack.c.bf16 %v767, %v766
        %v799 = vpack.c.bf16 %v769, %v768
        %v800 = vpack.c.bf16 %v771, %v770
        %v801 = vpack.c.bf16 %v773, %v772
        %v802 = vpack.c.bf16 %v775, %v774
        %v803 = vpack.c.bf16 %v777, %v776
        %v804 = vpack.c.bf16 %v779, %v778
        %v805 = vpack.c.bf16 %v781, %v780
        %v806 = vpack.c.bf16 %v783, %v782
        %v807 = vpack.c.bf16 %v785, %v784
        %v808 = vpack.c.bf16 %v787, %v786
        %v809 = vpack.c.bf16 %v789, %v788
        %v810 = vpack.c.bf16 %v791, %v790
        %v811 = vpack.c.bf16 %v793, %v792
        %v812 = vpack.c.bf16 %v795, %v794
        %v813 = vpack.c.bf16 %v797, %v796
        %814 = vst [vmem:[#allocation2] sm:$0xff] 0
        %815 = vst [vmem:[#allocation2 + $0x8] sm:$0xf] 0
        %816 = vst [vmem:[#allocation2 + $0xc] sm:$0xff] 0
        %817 = vst [vmem:[#allocation2 + $0x14] sm:$0xf] 0
        %818 = vst [vmem:[#allocation2 + $0x198] sm:$0xff] 0
        %819 = vst [vmem:[#allocation2 + $0x1a0] sm:$0xf] 0
        %820 = vst [vmem:[#allocation2 + $0x1a4] sm:$0xff] 0
        %821 = vst [vmem:[#allocation2 + $0x1ac] sm:$0xf] 0
        %v838 = vunpack.c.l.b16 %v798
        %v839 = vunpack.c.h.b16 %v798
        %v840 = vunpack.c.l.b16 %v799
        %v841 = vunpack.c.h.b16 %v799
        %v842 = vunpack.c.l.b16 %v800
        %v843 = vunpack.c.h.b16 %v800
        %v844 = vunpack.c.l.b16 %v801
        %v845 = vunpack.c.h.b16 %v801
        %v846 = vunpack.c.l.b16 %v802
        %v847 = vunpack.c.h.b16 %v802
        %v848 = vunpack.c.l.b16 %v803
        %v849 = vunpack.c.h.b16 %v803
        %v850 = vunpack.c.l.b16 %v804
        %v851 = vunpack.c.h.b16 %v804
        %v852 = vunpack.c.l.b16 %v805
        %v853 = vunpack.c.h.b16 %v805
        %v854 = vunpack.c.l.b16 %v806
        %v855 = vunpack.c.h.b16 %v806
        %v856 = vunpack.c.l.b16 %v807
        %v857 = vunpack.c.h.b16 %v807
        %v858 = vunpack.c.l.b16 %v808
        %v859 = vunpack.c.h.b16 %v808
        %v860 = vunpack.c.l.b16 %v809
        %v861 = vunpack.c.h.b16 %v809
        %v862 = vunpack.c.l.b16 %v810
        %v863 = vunpack.c.h.b16 %v810
        %v864 = vunpack.c.l.b16 %v811
        %v865 = vunpack.c.h.b16 %v811
        %v866 = vunpack.c.l.b16 %v812
        %v867 = vunpack.c.h.b16 %v812
        %v868 = vunpack.c.l.b16 %v813
        %v869 = vunpack.c.h.b16 %v813
        %v870 = vpack.c.b16 %v838, %v838
        %v871 = vpack.c.b16 %v839, %v839
        %v872 = vpack.c.b16 %v840, %v840
        %v873 = vpack.c.b16 %v841, %v841
        %v874 = vpack.c.b16 %v842, %v842
        %v875 = vpack.c.b16 %v843, %v843
        %v876 = vpack.c.b16 %v844, %v844
        %v877 = vpack.c.b16 %v845, %v845
        %v878 = vpack.c.b16 %v846, %v846
        %v879 = vpack.c.b16 %v847, %v847
        %v880 = vpack.c.b16 %v848, %v848
        %v881 = vpack.c.b16 %v849, %v849
        %v882 = vpack.c.b16 %v850, %v850
        %v883 = vpack.c.b16 %v851, %v851
        %v884 = vpack.c.b16 %v852, %v852
        %v885 = vpack.c.b16 %v853, %v853
        %v886 = vpack.c.b16 %v854, %v854
        %v887 = vpack.c.b16 %v855, %v855
        %v888 = vpack.c.b16 %v856, %v856
        %v889 = vpack.c.b16 %v857, %v857
        %v890 = vpack.c.b16 %v858, %v858
        %v891 = vpack.c.b16 %v859, %v859
        %v892 = vpack.c.b16 %v860, %v860
        %v893 = vpack.c.b16 %v861, %v861
        %v894 = vpack.c.b16 %v862, %v862
        %v895 = vpack.c.b16 %v863, %v863
        %v896 = vpack.c.b16 %v864, %v864
        %v897 = vpack.c.b16 %v865, %v865
        %v898 = vpack.c.b16 %v866, %v866
        %v899 = vpack.c.b16 %v867, %v867
        %v900 = vpack.c.b16 %v868, %v868
        %v901 = vpack.c.b16 %v869, %v869
        %934 = vst [vmem:[#allocation2 + $0x1c] sm:$0xf] %v870
        %935 = vst [vmem:[#allocation2 + $0x28] sm:$0xf] %v871
        %936 = vst [vmem:[#allocation2 + $0x34] sm:$0xf] %v872
        %937 = vst [vmem:[#allocation2 + $0x40] sm:$0xf] %v873
        %938 = vst [vmem:[#allocation2 + $0x4c] sm:$0xf] %v874
        %939 = vst [vmem:[#allocation2 + $0x58] sm:$0xf] %v875
        %940 = vst [vmem:[#allocation2 + $0x64] sm:$0xf] %v876
        %941 = vst [vmem:[#allocation2 + $0x70] sm:$0xf] %v877
        %942 = vst [vmem:[#allocation2 + $0x7c] sm:$0xf] %v878
        %943 = vst [vmem:[#allocation2 + $0x88] sm:$0xf] %v879
        %944 = vst [vmem:[#allocation2 + $0x94] sm:$0xf] %v880
        %945 = vst [vmem:[#allocation2 + $0xa0] sm:$0xf] %v881
        %946 = vst [vmem:[#allocation2 + $0xac] sm:$0xf] %v882
        %947 = vst [vmem:[#allocation2 + $0xb8] sm:$0xf] %v883
        %948 = vst [vmem:[#allocation2 + $0xc4] sm:$0xf] %v884
        %949 = vst [vmem:[#allocation2 + $0xd0] sm:$0xf] %v885
        %950 = vst [vmem:[#allocation2 + $0xdc] sm:$0xf] %v886
        %951 = vst [vmem:[#allocation2 + $0xe8] sm:$0xf] %v887
        %952 = vst [vmem:[#allocation2 + $0xf4] sm:$0xf] %v888
        %953 = vst [vmem:[#allocation2 + $0x100] sm:$0xf] %v889
        %954 = vst [vmem:[#allocation2 + $0x10c] sm:$0xf] %v890
        %955 = vst [vmem:[#allocation2 + $0x118] sm:$0xf] %v891
        %956 = vst [vmem:[#allocation2 + $0x124] sm:$0xf] %v892
        %957 = vst [vmem:[#allocation2 + $0x130] sm:$0xf] %v893
        %958 = vst [vmem:[#allocation2 + $0x13c] sm:$0xf] %v894
        %959 = vst [vmem:[#allocation2 + $0x148] sm:$0xf] %v895
        %960 = vst [vmem:[#allocation2 + $0x154] sm:$0xf] %v896
        %961 = vst [vmem:[#allocation2 + $0x160] sm:$0xf] %v897
        %962 = vst [vmem:[#allocation2 + $0x16c] sm:$0xf] %v898
        %963 = vst [vmem:[#allocation2 + $0x178] sm:$0xf] %v899
        %964 = vst [vmem:[#allocation2 + $0x184] sm:$0xf] %v900
        %965 = vst [vmem:[#allocation2 + $0x190] sm:$0xf] %v901
        %v966 = vlaneseq
        %v967 = vshrl.u32 %v966, 7
        %v968 = vadd.s32 %v967, 8
        %v969 = vadd.s32 %v967, 16
        %v970 = vadd.s32 %v967, 24
        %v971 = vadd.s32 %v967, 32
        %v972 = vadd.s32 %v967, 40
        %v973 = vadd.s32 %v967, 48
        %v974 = vadd.s32 %v967, 56
        %v975 = vadd.s32 %v967, 64
        %v976 = vadd.s32 %v967, 72
        %v977 = vadd.s32 %v967, 80
        %v978 = vadd.s32 %v967, 88
        %v979 = vadd.s32 %v967, 96
        %v980 = vadd.s32 %v967, 104
        %v981 = vadd.s32 %v967, 112
        %v982 = vadd.s32 %v967, 120
        %v983 = vadd.s32 %v967, 128
        %v984 = vadd.s32 %v967, 136
        %v985 = vadd.s32 %v967, 144
        %v986 = vadd.s32 %v967, 152
        %v987 = vadd.s32 %v967, 160
        %v988 = vadd.s32 %v967, 168
        %v989 = vadd.s32 %v967, 176
        %v990 = vadd.s32 %v967, 184
        %v991 = vadd.s32 %v967, 192
        %v992 = vadd.s32 %v967, 200
        %v993 = vadd.s32 %v967, 208
        %v994 = vadd.s32 %v967, 216
        %v995 = vadd.s32 %v967, 224
        %v996 = vadd.s32 %v967, 232
        %v997 = vadd.s32 %v967, 240
        %v998 = vadd.s32 %v967, 248
        %vm999 = vcmp.lt.s32.totalorder %v967, 0
        %v1000 = vsub.s32 0, %v967
        %v1001 = vsel %vm999, %v1000, %v967
        %v1002 = vshrl.u32 %v1001, 4
        %v1003 = vand.u32 %v1001, 15
        %v1004 = vsub.s32 0, %v1003
        %v1005 = vsel %vm999, %v1004, %v1003
        %vm1006 = vcmp.lt.s32.totalorder %v968, 0
        %v1007 = vsub.s32 0, %v968
        %v1008 = vsel %vm1006, %v1007, %v968
        %v1009 = vshrl.u32 %v1008, 4
        %v1010 = vand.u32 %v1008, 15
        %v1011 = vsub.s32 0, %v1010
        %v1012 = vsel %vm1006, %v1011, %v1010
        %vm1013 = vcmp.lt.s32.totalorder %v969, 0
        %v1014 = vsub.s32 0, %v969
        %v1015 = vsel %vm1013, %v1014, %v969
        %v1016 = vshrl.u32 %v1015, 4
        %v1017 = vand.u32 %v1015, 15
        %v1018 = vsub.s32 0, %v1017
        %v1019 = vsel %vm1013, %v1018, %v1017
        %vm1020 = vcmp.lt.s32.totalorder %v970, 0
        %v1021 = vsub.s32 0, %v970
        %v1022 = vsel %vm1020, %v1021, %v970
        %v1023 = vshrl.u32 %v1022, 4
        %v1024 = vand.u32 %v1022, 15
        %v1025 = vsub.s32 0, %v1024
        %v1026 = vsel %vm1020, %v1025, %v1024
        %vm1027 = vcmp.lt.s32.totalorder %v971, 0
        %v1028 = vsub.s32 0, %v971
        %v1029 = vsel %vm1027, %v1028, %v971
        %v1030 = vshrl.u32 %v1029, 4
        %v1031 = vand.u32 %v1029, 15
        %v1032 = vsub.s32 0, %v1031
        %v1033 = vsel %vm1027, %v1032, %v1031
        %vm1034 = vcmp.lt.s32.totalorder %v972, 0
        %v1035 = vsub.s32 0, %v972
        %v1036 = vsel %vm1034, %v1035, %v972
        %v1037 = vshrl.u32 %v1036, 4
        %v1038 = vand.u32 %v1036, 15
        %v1039 = vsub.s32 0, %v1038
        %v1040 = vsel %vm1034, %v1039, %v1038
        %vm1041 = vcmp.lt.s32.totalorder %v973, 0
        %v1042 = vsub.s32 0, %v973
        %v1043 = vsel %vm1041, %v1042, %v973
        %v1044 = vshrl.u32 %v1043, 4
        %v1045 = vand.u32 %v1043, 15
        %v1046 = vsub.s32 0, %v1045
        %v1047 = vsel %vm1041, %v1046, %v1045
        %vm1048 = vcmp.lt.s32.totalorder %v974, 0
        %v1049 = vsub.s32 0, %v974
        %v1050 = vsel %vm1048, %v1049, %v974
        %v1051 = vshrl.u32 %v1050, 4
        %v1052 = vand.u32 %v1050, 15
        %v1053 = vsub.s32 0, %v1052
        %v1054 = vsel %vm1048, %v1053, %v1052
        %vm1055 = vcmp.lt.s32.totalorder %v975, 0
        %v1056 = vsub.s32 0, %v975
        %v1057 = vsel %vm1055, %v1056, %v975
        %v1058 = vshrl.u32 %v1057, 4
        %v1059 = vand.u32 %v1057, 15
        %v1060 = vsub.s32 0, %v1059
        %v1061 = vsel %vm1055, %v1060, %v1059
        %vm1062 = vcmp.lt.s32.totalorder %v976, 0
        %v1063 = vsub.s32 0, %v976
        %v1064 = vsel %vm1062, %v1063, %v976
        %v1065 = vshrl.u32 %v1064, 4
        %v1066 = vand.u32 %v1064, 15
        %v1067 = vsub.s32 0, %v1066
        %v1068 = vsel %vm1062, %v1067, %v1066
        %vm1069 = vcmp.lt.s32.totalorder %v977, 0
        %v1070 = vsub.s32 0, %v977
        %v1071 = vsel %vm1069, %v1070, %v977
        %v1072 = vshrl.u32 %v1071, 4
        %v1073 = vand.u32 %v1071, 15
        %v1074 = vsub.s32 0, %v1073
        %v1075 = vsel %vm1069, %v1074, %v1073
        %vm1076 = vcmp.lt.s32.totalorder %v978, 0
        %v1077 = vsub.s32 0, %v978
        %v1078 = vsel %vm1076, %v1077, %v978
        %v1079 = vshrl.u32 %v1078, 4
        %v1080 = vand.u32 %v1078, 15
        %v1081 = vsub.s32 0, %v1080
        %v1082 = vsel %vm1076, %v1081, %v1080
        %vm1083 = vcmp.lt.s32.totalorder %v979, 0
        %v1084 = vsub.s32 0, %v979
        %v1085 = vsel %vm1083, %v1084, %v979
        %v1086 = vshrl.u32 %v1085, 4
        %v1087 = vand.u32 %v1085, 15
        %v1088 = vsub.s32 0, %v1087
        %v1089 = vsel %vm1083, %v1088, %v1087
        %vm1090 = vcmp.lt.s32.totalorder %v980, 0
        %v1091 = vsub.s32 0, %v980
        %v1092 = vsel %vm1090, %v1091, %v980
        %v1093 = vshrl.u32 %v1092, 4
        %v1094 = vand.u32 %v1092, 15
        %v1095 = vsub.s32 0, %v1094
        %v1096 = vsel %vm1090, %v1095, %v1094
        %vm1097 = vcmp.lt.s32.totalorder %v981, 0
        %v1098 = vsub.s32 0, %v981
        %v1099 = vsel %vm1097, %v1098, %v981
        %v1100 = vshrl.u32 %v1099, 4
        %v1101 = vand.u32 %v1099, 15
        %v1102 = vsub.s32 0, %v1101
        %v1103 = vsel %vm1097, %v1102, %v1101
        %vm1104 = vcmp.lt.s32.totalorder %v982, 0
        %v1105 = vsub.s32 0, %v982
        %v1106 = vsel %vm1104, %v1105, %v982
        %v1107 = vshrl.u32 %v1106, 4
        %v1108 = vand.u32 %v1106, 15
        %v1109 = vsub.s32 0, %v1108
        %v1110 = vsel %vm1104, %v1109, %v1108
        %vm1111 = vcmp.lt.s32.totalorder %v983, 0
        %v1112 = vsub.s32 0, %v983
        %v1113 = vsel %vm1111, %v1112, %v983
        %v1114 = vshrl.u32 %v1113, 4
        %v1115 = vand.u32 %v1113, 15
        %v1116 = vsub.s32 0, %v1115
        %v1117 = vsel %vm1111, %v1116, %v1115
        %vm1118 = vcmp.lt.s32.totalorder %v984, 0
        %v1119 = vsub.s32 0, %v984
        %v1120 = vsel %vm1118, %v1119, %v984
        %v1121 = vshrl.u32 %v1120, 4
        %v1122 = vand.u32 %v1120, 15
        %v1123 = vsub.s32 0, %v1122
        %v1124 = vsel %vm1118, %v1123, %v1122
        %vm1125 = vcmp.lt.s32.totalorder %v985, 0
        %v1126 = vsub.s32 0, %v985
        %v1127 = vsel %vm1125, %v1126, %v985
        %v1128 = vshrl.u32 %v1127, 4
        %v1129 = vand.u32 %v1127, 15
        %v1130 = vsub.s32 0, %v1129
        %v1131 = vsel %vm1125, %v1130, %v1129
        %vm1132 = vcmp.lt.s32.totalorder %v986, 0
        %v1133 = vsub.s32 0, %v986
        %v1134 = vsel %vm1132, %v1133, %v986
        %v1135 = vshrl.u32 %v1134, 4
        %v1136 = vand.u32 %v1134, 15
        %v1137 = vsub.s32 0, %v1136
        %v1138 = vsel %vm1132, %v1137, %v1136
        %vm1139 = vcmp.lt.s32.totalorder %v987, 0
        %v1140 = vsub.s32 0, %v987
        %v1141 = vsel %vm1139, %v1140, %v987
        %v1142 = vshrl.u32 %v1141, 4
        %v1143 = vand.u32 %v1141, 15
        %v1144 = vsub.s32 0, %v1143
        %v1145 = vsel %vm1139, %v1144, %v1143
        %vm1146 = vcmp.lt.s32.totalorder %v988, 0
        %v1147 = vsub.s32 0, %v988
        %v1148 = vsel %vm1146, %v1147, %v988
        %v1149 = vshrl.u32 %v1148, 4
        %v1150 = vand.u32 %v1148, 15
        %v1151 = vsub.s32 0, %v1150
        %v1152 = vsel %vm1146, %v1151, %v1150
        %vm1153 = vcmp.lt.s32.totalorder %v989, 0
        %v1154 = vsub.s32 0, %v989
        %v1155 = vsel %vm1153, %v1154, %v989
        %v1156 = vshrl.u32 %v1155, 4
        %v1157 = vand.u32 %v1155, 15
        %v1158 = vsub.s32 0, %v1157
        %v1159 = vsel %vm1153, %v1158, %v1157
        %vm1160 = vcmp.lt.s32.totalorder %v990, 0
        %v1161 = vsub.s32 0, %v990
        %v1162 = vsel %vm1160, %v1161, %v990
        %v1163 = vshrl.u32 %v1162, 4
        %v1164 = vand.u32 %v1162, 15
        %v1165 = vsub.s32 0, %v1164
        %v1166 = vsel %vm1160, %v1165, %v1164
        %vm1167 = vcmp.lt.s32.totalorder %v991, 0
        %v1168 = vsub.s32 0, %v991
        %v1169 = vsel %vm1167, %v1168, %v991
        %v1170 = vshrl.u32 %v1169, 4
        %v1171 = vand.u32 %v1169, 15
        %v1172 = vsub.s32 0, %v1171
        %v1173 = vsel %vm1167, %v1172, %v1171
        %vm1174 = vcmp.lt.s32.totalorder %v992, 0
        %v1175 = vsub.s32 0, %v992
        %v1176 = vsel %vm1174, %v1175, %v992
        %v1177 = vshrl.u32 %v1176, 4
        %v1178 = vand.u32 %v1176, 15
        %v1179 = vsub.s32 0, %v1178
        %v1180 = vsel %vm1174, %v1179, %v1178
        %vm1181 = vcmp.lt.s32.totalorder %v993, 0
        %v1182 = vsub.s32 0, %v993
        %v1183 = vsel %vm1181, %v1182, %v993
        %v1184 = vshrl.u32 %v1183, 4
        %v1185 = vand.u32 %v1183, 15
        %v1186 = vsub.s32 0, %v1185
        %v1187 = vsel %vm1181, %v1186, %v1185
        %vm1188 = vcmp.lt.s32.totalorder %v994, 0
        %v1189 = vsub.s32 0, %v994
        %v1190 = vsel %vm1188, %v1189, %v994
        %v1191 = vshrl.u32 %v1190, 4
        %v1192 = vand.u32 %v1190, 15
        %v1193 = vsub.s32 0, %v1192
        %v1194 = vsel %vm1188, %v1193, %v1192
        %vm1195 = vcmp.lt.s32.totalorder %v995, 0
        %v1196 = vsub.s32 0, %v995
        %v1197 = vsel %vm1195, %v1196, %v995
        %v1198 = vshrl.u32 %v1197, 4
        %v1199 = vand.u32 %v1197, 15
        %v1200 = vsub.s32 0, %v1199
        %v1201 = vsel %vm1195, %v1200, %v1199
        %vm1202 = vcmp.lt.s32.totalorder %v996, 0
        %v1203 = vsub.s32 0, %v996
        %v1204 = vsel %vm1202, %v1203, %v996
        %v1205 = vshrl.u32 %v1204, 4
        %v1206 = vand.u32 %v1204, 15
        %v1207 = vsub.s32 0, %v1206
        %v1208 = vsel %vm1202, %v1207, %v1206
        %vm1209 = vcmp.lt.s32.totalorder %v997, 0
        %v1210 = vsub.s32 0, %v997
        %v1211 = vsel %vm1209, %v1210, %v997
        %v1212 = vshrl.u32 %v1211, 4
        %v1213 = vand.u32 %v1211, 15
        %v1214 = vsub.s32 0, %v1213
        %v1215 = vsel %vm1209, %v1214, %v1213
        %vm1216 = vcmp.lt.s32.totalorder %v998, 0
        %v1217 = vsub.s32 0, %v998
        %v1218 = vsel %vm1216, %v1217, %v998
        %v1219 = vshrl.u32 %v1218, 4
        %v1220 = vand.u32 %v1218, 15
        %v1221 = vsub.s32 0, %v1220
        %v1222 = vsel %vm1216, %v1221, %v1220
        %vm1223 = vcmp.ne.s32.totalorder %v1005, 0
        %vm1224 = vcmp.ne.s32.totalorder %v1012, 0
        %vm1225 = vcmp.ne.s32.totalorder %v1019, 0
        %vm1226 = vcmp.ne.s32.totalorder %v1026, 0
        %vm1227 = vcmp.ne.s32.totalorder %v1033, 0
        %vm1228 = vcmp.ne.s32.totalorder %v1040, 0
        %vm1229 = vcmp.ne.s32.totalorder %v1047, 0
        %vm1230 = vcmp.ne.s32.totalorder %v1054, 0
        %vm1231 = vcmp.ne.s32.totalorder %v1061, 0
        %vm1232 = vcmp.ne.s32.totalorder %v1068, 0
        %vm1233 = vcmp.ne.s32.totalorder %v1075, 0
        %vm1234 = vcmp.ne.s32.totalorder %v1082, 0
        %vm1235 = vcmp.ne.s32.totalorder %v1089, 0
        %vm1236 = vcmp.ne.s32.totalorder %v1096, 0
        %vm1237 = vcmp.ne.s32.totalorder %v1103, 0
        %vm1238 = vcmp.ne.s32.totalorder %v1110, 0
        %vm1239 = vcmp.ne.s32.totalorder %v1117, 0
        %vm1240 = vcmp.ne.s32.totalorder %v1124, 0
        %vm1241 = vcmp.ne.s32.totalorder %v1131, 0
        %vm1242 = vcmp.ne.s32.totalorder %v1138, 0
        %vm1243 = vcmp.ne.s32.totalorder %v1145, 0
        %vm1244 = vcmp.ne.s32.totalorder %v1152, 0
        %vm1245 = vcmp.ne.s32.totalorder %v1159, 0
        %vm1246 = vcmp.ne.s32.totalorder %v1166, 0
        %vm1247 = vcmp.ne.s32.totalorder %v1173, 0
        %vm1248 = vcmp.ne.s32.totalorder %v1180, 0
        %vm1249 = vcmp.ne.s32.totalorder %v1187, 0
        %vm1250 = vcmp.ne.s32.totalorder %v1194, 0
        %vm1251 = vcmp.ne.s32.totalorder %v1201, 0
        %vm1252 = vcmp.ne.s32.totalorder %v1208, 0
        %vm1253 = vcmp.ne.s32.totalorder %v1215, 0
        %vm1254 = vcmp.ne.s32.totalorder %v1222, 0
        %vm1255 = vcmp.lt.s32.totalorder %v1005, 0
        %vm1256 = vcmp.lt.s32.totalorder %v1012, 0
        %vm1257 = vcmp.lt.s32.totalorder %v1019, 0
        %vm1258 = vcmp.lt.s32.totalorder %v1026, 0
        %vm1259 = vcmp.lt.s32.totalorder %v1033, 0
        %vm1260 = vcmp.lt.s32.totalorder %v1040, 0
        %vm1261 = vcmp.lt.s32.totalorder %v1047, 0
        %vm1262 = vcmp.lt.s32.totalorder %v1054, 0
        %vm1263 = vcmp.lt.s32.totalorder %v1061, 0
        %vm1264 = vcmp.lt.s32.totalorder %v1068, 0
        %vm1265 = vcmp.lt.s32.totalorder %v1075, 0
        %vm1266 = vcmp.lt.s32.totalorder %v1082, 0
        %vm1267 = vcmp.lt.s32.totalorder %v1089, 0
        %vm1268 = vcmp.lt.s32.totalorder %v1096, 0
        %vm1269 = vcmp.lt.s32.totalorder %v1103, 0
        %vm1270 = vcmp.lt.s32.totalorder %v1110, 0
        %vm1271 = vcmp.lt.s32.totalorder %v1117, 0
        %vm1272 = vcmp.lt.s32.totalorder %v1124, 0
        %vm1273 = vcmp.lt.s32.totalorder %v1131, 0
        %vm1274 = vcmp.lt.s32.totalorder %v1138, 0
        %vm1275 = vcmp.lt.s32.totalorder %v1145, 0
        %vm1276 = vcmp.lt.s32.totalorder %v1152, 0
        %vm1277 = vcmp.lt.s32.totalorder %v1159, 0
        %vm1278 = vcmp.lt.s32.totalorder %v1166, 0
        %vm1279 = vcmp.lt.s32.totalorder %v1173, 0
        %vm1280 = vcmp.lt.s32.totalorder %v1180, 0
        %vm1281 = vcmp.lt.s32.totalorder %v1187, 0
        %vm1282 = vcmp.lt.s32.totalorder %v1194, 0
        %vm1283 = vcmp.lt.s32.totalorder %v1201, 0
        %vm1284 = vcmp.lt.s32.totalorder %v1208, 0
        %vm1285 = vcmp.lt.s32.totalorder %v1215, 0
        %vm1286 = vcmp.lt.s32.totalorder %v1222, 0
        %vm1287 = vmand %vm1255, %vm1223
        %vm1288 = vmand %vm1256, %vm1224
        %vm1289 = vmand %vm1257, %vm1225
        %vm1290 = vmand %vm1258, %vm1226
        %vm1291 = vmand %vm1259, %vm1227
        %vm1292 = vmand %vm1260, %vm1228
        %vm1293 = vmand %vm1261, %vm1229
        %vm1294 = vmand %vm1262, %vm1230
        %vm1295 = vmand %vm1263, %vm1231
        %vm1296 = vmand %vm1264, %vm1232
        %vm1297 = vmand %vm1265, %vm1233
        %vm1298 = vmand %vm1266, %vm1234
        %vm1299 = vmand %vm1267, %vm1235
        %vm1300 = vmand %vm1268, %vm1236
        %vm1301 = vmand %vm1269, %vm1237
        %vm1302 = vmand %vm1270, %vm1238
        %vm1303 = vmand %vm1271, %vm1239
        %vm1304 = vmand %vm1272, %vm1240
        %vm1305 = vmand %vm1273, %vm1241
        %vm1306 = vmand %vm1274, %vm1242
        %vm1307 = vmand %vm1275, %vm1243
        %vm1308 = vmand %vm1276, %vm1244
        %vm1309 = vmand %vm1277, %vm1245
        %vm1310 = vmand %vm1278, %vm1246
        %vm1311 = vmand %vm1279, %vm1247
        %vm1312 = vmand %vm1280, %vm1248
        %vm1313 = vmand %vm1281, %vm1249
        %vm1314 = vmand %vm1282, %vm1250
        %vm1315 = vmand %vm1283, %vm1251
        %vm1316 = vmand %vm1284, %vm1252
        %vm1317 = vmand %vm1285, %vm1253
        %vm1318 = vmand %vm1286, %vm1254
        %v1319 = vadd.s32 %v1005, 16
        %v1320 = vadd.s32 %v1012, 16
        %v1321 = vadd.s32 %v1019, 16
        %v1322 = vadd.s32 %v1026, 16
        %v1323 = vadd.s32 %v1033, 16
        %v1324 = vadd.s32 %v1040, 16
        %v1325 = vadd.s32 %v1047, 16
        %v1326 = vadd.s32 %v1054, 16
        %v1327 = vadd.s32 %v1061, 16
        %v1328 = vadd.s32 %v1068, 16
        %v1329 = vadd.s32 %v1075, 16
        %v1330 = vadd.s32 %v1082, 16
        %v1331 = vadd.s32 %v1089, 16
        %v1332 = vadd.s32 %v1096, 16
        %v1333 = vadd.s32 %v1103, 16
        %v1334 = vadd.s32 %v1110, 16
        %v1335 = vadd.s32 %v1117, 16
        %v1336 = vadd.s32 %v1124, 16
        %v1337 = vadd.s32 %v1131, 16
        %v1338 = vadd.s32 %v1138, 16
        %v1339 = vadd.s32 %v1145, 16
        %v1340 = vadd.s32 %v1152, 16
        %v1341 = vadd.s32 %v1159, 16
        %v1342 = vadd.s32 %v1166, 16
        %v1343 = vadd.s32 %v1173, 16
        %v1344 = vadd.s32 %v1180, 16
        %v1345 = vadd.s32 %v1187, 16
        %v1346 = vadd.s32 %v1194, 16
        %v1347 = vadd.s32 %v1201, 16
        %v1348 = vadd.s32 %v1208, 16
        %v1349 = vadd.s32 %v1215, 16
        %v1350 = vadd.s32 %v1222, 16
        %v1351 = vsel %vm1287, %v1319, %v1005
        %v1352 = vsel %vm1288, %v1320, %v1012
        %v1353 = vsel %vm1289, %v1321, %v1019
        %v1354 = vsel %vm1290, %v1322, %v1026
        %v1355 = vsel %vm1291, %v1323, %v1033
        %v1356 = vsel %vm1292, %v1324, %v1040
        %v1357 = vsel %vm1293, %v1325, %v1047
        %v1358 = vsel %vm1294, %v1326, %v1054
        %v1359 = vsel %vm1295, %v1327, %v1061
        %v1360 = vsel %vm1296, %v1328, %v1068
        %v1361 = vsel %vm1297, %v1329, %v1075
        %v1362 = vsel %vm1298, %v1330, %v1082
        %v1363 = vsel %vm1299, %v1331, %v1089
        %v1364 = vsel %vm1300, %v1332, %v1096
        %v1365 = vsel %vm1301, %v1333, %v1103
        %v1366 = vsel %vm1302, %v1334, %v1110
        %v1367 = vsel %vm1303, %v1335, %v1117
        %v1368 = vsel %vm1304, %v1336, %v1124
        %v1369 = vsel %vm1305, %v1337, %v1131
        %v1370 = vsel %vm1306, %v1338, %v1138
        %v1371 = vsel %vm1307, %v1339, %v1145
        %v1372 = vsel %vm1308, %v1340, %v1152
        %v1373 = vsel %vm1309, %v1341, %v1159
        %v1374 = vsel %vm1310, %v1342, %v1166
        %v1375 = vsel %vm1311, %v1343, %v1173
        %v1376 = vsel %vm1312, %v1344, %v1180
        %v1377 = vsel %vm1313, %v1345, %v1187
        %v1378 = vsel %vm1314, %v1346, %v1194
        %v1379 = vsel %vm1315, %v1347, %v1201
        %v1380 = vsel %vm1316, %v1348, %v1208
        %v1381 = vsel %vm1317, %v1349, %v1215
        %v1382 = vsel %vm1318, %v1350, %v1222
        %v1383 = vld [vmem:[#allocation2 + $0x10] sm:$0x8]
        %v1384 = vld [vmem:[#allocation2 + $0x1c] sm:$0xf]
        %v1385 = vld [vmem:[#allocation2 + $0x28] sm:$0xf]
        %v1386 = vld [vmem:[#allocation2 + $0x34] sm:$0xf]
        %v1387 = vld [vmem:[#allocation2 + $0x40] sm:$0xf]
        %v1388 = vld [vmem:[#allocation2 + $0x4c] sm:$0xf]
        %v1389 = vld [vmem:[#allocation2 + $0x58] sm:$0xf]
        %v1390 = vld [vmem:[#allocation2 + $0x64] sm:$0xf]
        %v1391 = vld [vmem:[#allocation2 + $0x70] sm:$0xf]
        %v1392 = vld [vmem:[#allocation2 + $0x7c] sm:$0xf]
        %v1393 = vld [vmem:[#allocation2 + $0x88] sm:$0xf]
        %v1394 = vld [vmem:[#allocation2 + $0x94] sm:$0xf]
        %v1395 = vld [vmem:[#allocation2 + $0xa0] sm:$0xf]
        %v1396 = vld [vmem:[#allocation2 + $0xac] sm:$0xf]
        %v1397 = vld [vmem:[#allocation2 + $0xb8] sm:$0xf]
        %v1398 = vld [vmem:[#allocation2 + $0xc4] sm:$0xf]
        %v1399 = vld [vmem:[#allocation2 + $0xd0] sm:$0xf]
        %v1400 = vld [vmem:[#allocation2 + $0xdc] sm:$0xf]
        %v1401 = vld [vmem:[#allocation2 + $0xe8] sm:$0xf]
        %v1402 = vld [vmem:[#allocation2 + $0xf4] sm:$0xf]
        %v1403 = vld [vmem:[#allocation2 + $0x100] sm:$0xf]
        %v1404 = vld [vmem:[#allocation2 + $0x10c] sm:$0xf]
        %v1405 = vld [vmem:[#allocation2 + $0x118] sm:$0xf]
        %v1406 = vld [vmem:[#allocation2 + $0x124] sm:$0xf]
        %v1407 = vld [vmem:[#allocation2 + $0x130] sm:$0xf]
        %v1408 = vld [vmem:[#allocation2 + $0x13c] sm:$0xf]
        %v1409 = vld [vmem:[#allocation2 + $0x148] sm:$0xf]
        %v1410 = vld [vmem:[#allocation2 + $0x154] sm:$0xf]
        %v1411 = vld [vmem:[#allocation2 + $0x160] sm:$0xf]
        %v1412 = vld [vmem:[#allocation2 + $0x16c] sm:$0xf]
        %v1413 = vld [vmem:[#allocation2 + $0x178] sm:$0xf]
        %v1414 = vld [vmem:[#allocation2 + $0x184] sm:$0xf]
        %v1415 = vld [vmem:[#allocation2 + $0x190] sm:$0xf]
        %vm1416 = vcmp.gt.s32.totalorder %v1351, 0
        %vm1417 = vcmp.gt.s32.totalorder %v1352, 0
        %vm1418 = vcmp.gt.s32.totalorder %v1353, 0
        %vm1419 = vcmp.gt.s32.totalorder %v1354, 0
        %vm1420 = vcmp.gt.s32.totalorder %v1355, 0
        %vm1421 = vcmp.gt.s32.totalorder %v1356, 0
        %vm1422 = vcmp.gt.s32.totalorder %v1357, 0
        %vm1423 = vcmp.gt.s32.totalorder %v1358, 0
        %vm1424 = vcmp.gt.s32.totalorder %v1359, 0
        %vm1425 = vcmp.gt.s32.totalorder %v1360, 0
        %vm1426 = vcmp.gt.s32.totalorder %v1361, 0
        %vm1427 = vcmp.gt.s32.totalorder %v1362, 0
        %vm1428 = vcmp.gt.s32.totalorder %v1363, 0
        %vm1429 = vcmp.gt.s32.totalorder %v1364, 0
        %vm1430 = vcmp.gt.s32.totalorder %v1365, 0
        %vm1431 = vcmp.gt.s32.totalorder %v1366, 0
        %vm1432 = vcmp.gt.s32.totalorder %v1367, 0
        %vm1433 = vcmp.gt.s32.totalorder %v1368, 0
        %vm1434 = vcmp.gt.s32.totalorder %v1369, 0
        %vm1435 = vcmp.gt.s32.totalorder %v1370, 0
        %vm1436 = vcmp.gt.s32.totalorder %v1371, 0
        %vm1437 = vcmp.gt.s32.totalorder %v1372, 0
        %vm1438 = vcmp.gt.s32.totalorder %v1373, 0
        %vm1439 = vcmp.gt.s32.totalorder %v1374, 0
        %vm1440 = vcmp.gt.s32.totalorder %v1375, 0
        %vm1441 = vcmp.gt.s32.totalorder %v1376, 0
        %vm1442 = vcmp.gt.s32.totalorder %v1377, 0
        %vm1443 = vcmp.gt.s32.totalorder %v1378, 0
        %vm1444 = vcmp.gt.s32.totalorder %v1379, 0
        %vm1445 = vcmp.gt.s32.totalorder %v1380, 0
        %vm1446 = vcmp.gt.s32.totalorder %v1381, 0
        %vm1447 = vcmp.gt.s32.totalorder %v1382, 0
        %v1448 = vsel %vm1416, 1, 0
        %v1449 = vsel %vm1417, 1, 0
        %v1450 = vsel %vm1418, 1, 0
        %v1451 = vsel %vm1419, 1, 0
        %v1452 = vsel %vm1420, 1, 0
        %v1453 = vsel %vm1421, 1, 0
        %v1454 = vsel %vm1422, 1, 0
        %v1455 = vsel %vm1423, 1, 0
        %v1456 = vsel %vm1424, 1, 0
        %v1457 = vsel %vm1425, 1, 0
        %v1458 = vsel %vm1426, 1, 0
        %v1459 = vsel %vm1427, 1, 0
        %v1460 = vsel %vm1428, 1, 0
        %v1461 = vsel %vm1429, 1, 0
        %v1462 = vsel %vm1430, 1, 0
        %v1463 = vsel %vm1431, 1, 0
        %v1464 = vsel %vm1432, 1, 0
        %v1465 = vsel %vm1433, 1, 0
        %v1466 = vsel %vm1434, 1, 0
        %v1467 = vsel %vm1435, 1, 0
        %v1468 = vsel %vm1436, 1, 0
        %v1469 = vsel %vm1437, 1, 0
        %v1470 = vsel %vm1438, 1, 0
        %v1471 = vsel %vm1439, 1, 0
        %v1472 = vsel %vm1440, 1, 0
        %v1473 = vsel %vm1441, 1, 0
        %v1474 = vsel %vm1442, 1, 0
        %v1475 = vsel %vm1443, 1, 0
        %v1476 = vsel %vm1444, 1, 0
        %v1477 = vsel %vm1445, 1, 0
        %v1478 = vsel %vm1446, 1, 0
        %v1479 = vsel %vm1447, 1, 0
        %vm1480 = vcmp.eq.s32.totalorder %v1448, 1
        %vm1481 = vcmp.eq.s32.totalorder %v1449, 1
        %vm1482 = vcmp.eq.s32.totalorder %v1450, 1
        %vm1483 = vcmp.eq.s32.totalorder %v1451, 1
        %vm1484 = vcmp.eq.s32.totalorder %v1452, 1
        %vm1485 = vcmp.eq.s32.totalorder %v1453, 1
        %vm1486 = vcmp.eq.s32.totalorder %v1454, 1
        %vm1487 = vcmp.eq.s32.totalorder %v1455, 1
        %vm1488 = vcmp.eq.s32.totalorder %v1456, 1
        %vm1489 = vcmp.eq.s32.totalorder %v1457, 1
        %vm1490 = vcmp.eq.s32.totalorder %v1458, 1
        %vm1491 = vcmp.eq.s32.totalorder %v1459, 1
        %vm1492 = vcmp.eq.s32.totalorder %v1460, 1
        %vm1493 = vcmp.eq.s32.totalorder %v1461, 1
        %vm1494 = vcmp.eq.s32.totalorder %v1462, 1
        %vm1495 = vcmp.eq.s32.totalorder %v1463, 1
        %vm1496 = vcmp.eq.s32.totalorder %v1464, 1
        %vm1497 = vcmp.eq.s32.totalorder %v1465, 1
        %vm1498 = vcmp.eq.s32.totalorder %v1466, 1
        %vm1499 = vcmp.eq.s32.totalorder %v1467, 1
        %vm1500 = vcmp.eq.s32.totalorder %v1468, 1
        %vm1501 = vcmp.eq.s32.totalorder %v1469, 1
        %vm1502 = vcmp.eq.s32.totalorder %v1470, 1
        %vm1503 = vcmp.eq.s32.totalorder %v1471, 1
        %vm1504 = vcmp.eq.s32.totalorder %v1472, 1
        %vm1505 = vcmp.eq.s32.totalorder %v1473, 1
        %vm1506 = vcmp.eq.s32.totalorder %v1474, 1
        %vm1507 = vcmp.eq.s32.totalorder %v1475, 1
        %vm1508 = vcmp.eq.s32.totalorder %v1476, 1
        %vm1509 = vcmp.eq.s32.totalorder %v1477, 1
        %vm1510 = vcmp.eq.s32.totalorder %v1478, 1
        %vm1511 = vcmp.eq.s32.totalorder %v1479, 1
        %vm1512 = vmpackc.low %vm1480, %vm1480
        %vm1513 = vmpackc.low %vm1481, %vm1481
        %vm1514 = vmpackc.low %vm1482, %vm1482
        %vm1515 = vmpackc.low %vm1483, %vm1483
        %vm1516 = vmpackc.low %vm1484, %vm1484
        %vm1517 = vmpackc.low %vm1485, %vm1485
        %vm1518 = vmpackc.low %vm1486, %vm1486
        %vm1519 = vmpackc.low %vm1487, %vm1487
        %vm1520 = vmpackc.low %vm1488, %vm1488
        %vm1521 = vmpackc.low %vm1489, %vm1489
        %vm1522 = vmpackc.low %vm1490, %vm1490
        %vm1523 = vmpackc.low %vm1491, %vm1491
        %vm1524 = vmpackc.low %vm1492, %vm1492
        %vm1525 = vmpackc.low %vm1493, %vm1493
        %vm1526 = vmpackc.low %vm1494, %vm1494
        %vm1527 = vmpackc.low %vm1495, %vm1495
        %vm1528 = vmpackc.low %vm1496, %vm1496
        %vm1529 = vmpackc.low %vm1497, %vm1497
        %vm1530 = vmpackc.low %vm1498, %vm1498
        %vm1531 = vmpackc.low %vm1499, %vm1499
        %vm1532 = vmpackc.low %vm1500, %vm1500
        %vm1533 = vmpackc.low %vm1501, %vm1501
        %vm1534 = vmpackc.low %vm1502, %vm1502
        %vm1535 = vmpackc.low %vm1503, %vm1503
        %vm1536 = vmpackc.low %vm1504, %vm1504
        %vm1537 = vmpackc.low %vm1505, %vm1505
        %vm1538 = vmpackc.low %vm1506, %vm1506
        %vm1539 = vmpackc.low %vm1507, %vm1507
        %vm1540 = vmpackc.low %vm1508, %vm1508
        %vm1541 = vmpackc.low %vm1509, %vm1509
        %vm1542 = vmpackc.low %vm1510, %vm1510
        %vm1543 = vmpackc.low %vm1511, %vm1511
        %v1544 = vsel %vm1512, 65537, 0
        %v1545 = vsel %vm1513, 65537, 0
        %v1546 = vsel %vm1514, 65537, 0
        %v1547 = vsel %vm1515, 65537, 0
        %v1548 = vsel %vm1516, 65537, 0
        %v1549 = vsel %vm1517, 65537, 0
        %v1550 = vsel %vm1518, 65537, 0
        %v1551 = vsel %vm1519, 65537, 0
        %v1552 = vsel %vm1520, 65537, 0
        %v1553 = vsel %vm1521, 65537, 0
        %v1554 = vsel %vm1522, 65537, 0
        %v1555 = vsel %vm1523, 65537, 0
        %v1556 = vsel %vm1524, 65537, 0
        %v1557 = vsel %vm1525, 65537, 0
        %v1558 = vsel %vm1526, 65537, 0
        %v1559 = vsel %vm1527, 65537, 0
        %v1560 = vsel %vm1528, 65537, 0
        %v1561 = vsel %vm1529, 65537, 0
        %v1562 = vsel %vm1530, 65537, 0
        %v1563 = vsel %vm1531, 65537, 0
        %v1564 = vsel %vm1532, 65537, 0
        %v1565 = vsel %vm1533, 65537, 0
        %v1566 = vsel %vm1534, 65537, 0
        %v1567 = vsel %vm1535, 65537, 0
        %v1568 = vsel %vm1536, 65537, 0
        %v1569 = vsel %vm1537, 65537, 0
        %v1570 = vsel %vm1538, 65537, 0
        %v1571 = vsel %vm1539, 65537, 0
        %v1572 = vsel %vm1540, 65537, 0
        %v1573 = vsel %vm1541, 65537, 0
        %v1574 = vsel %vm1542, 65537, 0
        %v1575 = vsel %vm1543, 65537, 0
        %vm1576 = vsmask.f32 3328
        %vm1577 = vsmask.f32 7440
        %vm1578 = vmor %vm1576, %vm1577
        %v1580 = vshll.u32 %v1544, 16
        %v1582 = vrot.slane %v1580, 5
        %v1583 = vshrl.u32 %v1544, 16
        %v1585 = vrot.slane %v1583, 4
        %v1586 = vor.u32 %v1585, %v1582
        %v1587 = vrot.slane %v1586, 4
        %v1589 = vshll.u32 %v1545, 16
        %v1591 = vrot.slane %v1589, 5
        %v1592 = vsel %vm1578, %v1587, %v1591
        %v1593 = vshrl.u32 %v1545, 16
        %v1595 = vrot.slane %v1593, 4
        %v1596 = vor.u32 %v1595, %v1591
        %v1597 = vrot.slane %v1596, 4
        %v1599 = vshll.u32 %v1546, 16
        %v1601 = vrot.slane %v1599, 5
        %v1602 = vsel %vm1578, %v1597, %v1601
        %v1603 = vshrl.u32 %v1546, 16
        %v1605 = vrot.slane %v1603, 4
        %v1606 = vor.u32 %v1605, %v1601
        %v1607 = vrot.slane %v1606, 4
        %v1609 = vshll.u32 %v1547, 16
        %v1611 = vrot.slane %v1609, 5
        %v1612 = vsel %vm1578, %v1607, %v1611
        %v1613 = vshrl.u32 %v1547, 16
        %v1615 = vrot.slane %v1613, 4
        %v1616 = vor.u32 %v1615, %v1611
        %v1617 = vrot.slane %v1616, 4
        %v1619 = vshll.u32 %v1548, 16
        %v1621 = vrot.slane %v1619, 5
        %v1622 = vsel %vm1578, %v1617, %v1621
        %v1623 = vshrl.u32 %v1548, 16
        %v1625 = vrot.slane %v1623, 4
        %v1626 = vor.u32 %v1625, %v1621
        %v1627 = vrot.slane %v1626, 4
        %v1629 = vshll.u32 %v1549, 16
        %v1631 = vrot.slane %v1629, 5
        %v1632 = vsel %vm1578, %v1627, %v1631
        %v1633 = vshrl.u32 %v1549, 16
        %v1635 = vrot.slane %v1633, 4
        %v1636 = vor.u32 %v1635, %v1631
        %v1637 = vrot.slane %v1636, 4
        %v1639 = vshll.u32 %v1550, 16
        %v1641 = vrot.slane %v1639, 5
        %v1642 = vsel %vm1578, %v1637, %v1641
        %v1643 = vshrl.u32 %v1550, 16
        %v1645 = vrot.slane %v1643, 4
        %v1646 = vor.u32 %v1645, %v1641
        %v1647 = vrot.slane %v1646, 4
        %v1649 = vshll.u32 %v1551, 16
        %v1651 = vrot.slane %v1649, 5
        %v1652 = vsel %vm1578, %v1647, %v1651
        %v1653 = vshrl.u32 %v1551, 16
        %v1655 = vrot.slane %v1653, 4
        %v1656 = vor.u32 %v1655, %v1651
        %v1657 = vrot.slane %v1656, 4
        %v1659 = vshll.u32 %v1552, 16
        %v1661 = vrot.slane %v1659, 5
        %v1662 = vsel %vm1578, %v1657, %v1661
        %v1663 = vshrl.u32 %v1552, 16
        %v1665 = vrot.slane %v1663, 4
        %v1666 = vor.u32 %v1665, %v1661
        %v1667 = vrot.slane %v1666, 4
        %v1669 = vshll.u32 %v1553, 16
        %v1671 = vrot.slane %v1669, 5
        %v1672 = vsel %vm1578, %v1667, %v1671
        %v1673 = vshrl.u32 %v1553, 16
        %v1675 = vrot.slane %v1673, 4
        %v1676 = vor.u32 %v1675, %v1671
        %v1677 = vrot.slane %v1676, 4
        %v1679 = vshll.u32 %v1554, 16
        %v1681 = vrot.slane %v1679, 5
        %v1682 = vsel %vm1578, %v1677, %v1681
        %v1683 = vshrl.u32 %v1554, 16
        %v1685 = vrot.slane %v1683, 4
        %v1686 = vor.u32 %v1685, %v1681
        %v1687 = vrot.slane %v1686, 4
        %v1689 = vshll.u32 %v1555, 16
        %v1691 = vrot.slane %v1689, 5
        %v1692 = vsel %vm1578, %v1687, %v1691
        %v1693 = vshrl.u32 %v1555, 16
        %v1695 = vrot.slane %v1693, 4
        %v1696 = vor.u32 %v1695, %v1691
        %v1697 = vrot.slane %v1696, 4
        %v1699 = vshll.u32 %v1556, 16
        %v1701 = vrot.slane %v1699, 5
        %v1702 = vsel %vm1578, %v1697, %v1701
        %v1703 = vshrl.u32 %v1556, 16
        %v1705 = vrot.slane %v1703, 4
        %v1706 = vor.u32 %v1705, %v1701
        %v1707 = vrot.slane %v1706, 4
        %v1709 = vshll.u32 %v1557, 16
        %v1711 = vrot.slane %v1709, 5
        %v1712 = vsel %vm1578, %v1707, %v1711
        %v1713 = vshrl.u32 %v1557, 16
        %v1715 = vrot.slane %v1713, 4
        %v1716 = vor.u32 %v1715, %v1711
        %v1717 = vrot.slane %v1716, 4
        %v1719 = vshll.u32 %v1558, 16
        %v1721 = vrot.slane %v1719, 5
        %v1722 = vsel %vm1578, %v1717, %v1721
        %v1723 = vshrl.u32 %v1558, 16
        %v1725 = vrot.slane %v1723, 4
        %v1726 = vor.u32 %v1725, %v1721
        %v1727 = vrot.slane %v1726, 4
        %v1729 = vshll.u32 %v1559, 16
        %v1731 = vrot.slane %v1729, 5
        %v1732 = vsel %vm1578, %v1727, %v1731
        %v1733 = vshrl.u32 %v1559, 16
        %v1735 = vrot.slane %v1733, 4
        %v1736 = vor.u32 %v1735, %v1731
        %v1737 = vrot.slane %v1736, 4
        %v1739 = vshll.u32 %v1560, 16
        %v1741 = vrot.slane %v1739, 5
        %v1742 = vsel %vm1578, %v1737, %v1741
        %v1743 = vshrl.u32 %v1560, 16
        %v1745 = vrot.slane %v1743, 4
        %v1746 = vor.u32 %v1745, %v1741
        %v1747 = vrot.slane %v1746, 4
        %v1749 = vshll.u32 %v1561, 16
        %v1751 = vrot.slane %v1749, 5
        %v1752 = vsel %vm1578, %v1747, %v1751
        %v1753 = vshrl.u32 %v1561, 16
        %v1755 = vrot.slane %v1753, 4
        %v1756 = vor.u32 %v1755, %v1751
        %v1757 = vrot.slane %v1756, 4
        %v1759 = vshll.u32 %v1562, 16
        %v1761 = vrot.slane %v1759, 5
        %v1762 = vsel %vm1578, %v1757, %v1761
        %v1763 = vshrl.u32 %v1562, 16
        %v1765 = vrot.slane %v1763, 4
        %v1766 = vor.u32 %v1765, %v1761
        %v1767 = vrot.slane %v1766, 4
        %v1769 = vshll.u32 %v1563, 16
        %v1771 = vrot.slane %v1769, 5
        %v1772 = vsel %vm1578, %v1767, %v1771
        %v1773 = vshrl.u32 %v1563, 16
        %v1775 = vrot.slane %v1773, 4
        %v1776 = vor.u32 %v1775, %v1771
        %v1777 = vrot.slane %v1776, 4
        %v1779 = vshll.u32 %v1564, 16
        %v1781 = vrot.slane %v1779, 5
        %v1782 = vsel %vm1578, %v1777, %v1781
        %v1783 = vshrl.u32 %v1564, 16
        %v1785 = vrot.slane %v1783, 4
        %v1786 = vor.u32 %v1785, %v1781
        %v1787 = vrot.slane %v1786, 4
        %v1789 = vshll.u32 %v1565, 16
        %v1791 = vrot.slane %v1789, 5
        %v1792 = vsel %vm1578, %v1787, %v1791
        %v1793 = vshrl.u32 %v1565, 16
        %v1795 = vrot.slane %v1793, 4
        %v1796 = vor.u32 %v1795, %v1791
        %v1797 = vrot.slane %v1796, 4
        %v1799 = vshll.u32 %v1566, 16
        %v1801 = vrot.slane %v1799, 5
        %v1802 = vsel %vm1578, %v1797, %v1801
        %v1803 = vshrl.u32 %v1566, 16
        %v1805 = vrot.slane %v1803, 4
        %v1806 = vor.u32 %v1805, %v1801
        %v1807 = vrot.slane %v1806, 4
        %v1809 = vshll.u32 %v1567, 16
        %v1811 = vrot.slane %v1809, 5
        %v1812 = vsel %vm1578, %v1807, %v1811
        %v1813 = vshrl.u32 %v1567, 16
        %v1815 = vrot.slane %v1813, 4
        %v1816 = vor.u32 %v1815, %v1811
        %v1817 = vrot.slane %v1816, 4
        %v1819 = vshll.u32 %v1568, 16
        %v1821 = vrot.slane %v1819, 5
        %v1822 = vsel %vm1578, %v1817, %v1821
        %v1823 = vshrl.u32 %v1568, 16
        %v1825 = vrot.slane %v1823, 4
        %v1826 = vor.u32 %v1825, %v1821
        %v1827 = vrot.slane %v1826, 4
        %v1829 = vshll.u32 %v1569, 16
        %v1831 = vrot.slane %v1829, 5
        %v1832 = vsel %vm1578, %v1827, %v1831
        %v1833 = vshrl.u32 %v1569, 16
        %v1835 = vrot.slane %v1833, 4
        %v1836 = vor.u32 %v1835, %v1831
        %v1837 = vrot.slane %v1836, 4
        %v1839 = vshll.u32 %v1570, 16
        %v1841 = vrot.slane %v1839, 5
        %v1842 = vsel %vm1578, %v1837, %v1841
        %v1843 = vshrl.u32 %v1570, 16
        %v1845 = vrot.slane %v1843, 4
        %v1846 = vor.u32 %v1845, %v1841
        %v1847 = vrot.slane %v1846, 4
        %v1849 = vshll.u32 %v1571, 16
        %v1851 = vrot.slane %v1849, 5
        %v1852 = vsel %vm1578, %v1847, %v1851
        %v1853 = vshrl.u32 %v1571, 16
        %v1855 = vrot.slane %v1853, 4
        %v1856 = vor.u32 %v1855, %v1851
        %v1857 = vrot.slane %v1856, 4
        %v1859 = vshll.u32 %v1572, 16
        %v1861 = vrot.slane %v1859, 5
        %v1862 = vsel %vm1578, %v1857, %v1861
        %v1863 = vshrl.u32 %v1572, 16
        %v1865 = vrot.slane %v1863, 4
        %v1866 = vor.u32 %v1865, %v1861
        %v1867 = vrot.slane %v1866, 4
        %v1869 = vshll.u32 %v1573, 16
        %v1871 = vrot.slane %v1869, 5
        %v1872 = vsel %vm1578, %v1867, %v1871
        %v1873 = vshrl.u32 %v1573, 16
        %v1875 = vrot.slane %v1873, 4
        %v1876 = vor.u32 %v1875, %v1871
        %v1877 = vrot.slane %v1876, 4
        %v1879 = vshll.u32 %v1574, 16
        %v1881 = vrot.slane %v1879, 5
        %v1882 = vsel %vm1578, %v1877, %v1881
        %v1883 = vshrl.u32 %v1574, 16
        %v1885 = vrot.slane %v1883, 4
        %v1886 = vor.u32 %v1885, %v1881
        %v1887 = vrot.slane %v1886, 4
        %v1889 = vshll.u32 %v1575, 16
        %v1891 = vrot.slane %v1889, 5
        %v1892 = vsel %vm1578, %v1887, %v1891
        %v1893 = vshrl.u32 %v1575, 16
        %v1895 = vrot.slane %v1893, 4
        %v1896 = vor.u32 %v1895, %v1891
        %v1897 = vrot.slane %v1896, 4
        %vm1898 = vcmp.ne.s16.totalorder %v1582, 0
        %vm1899 = vcmp.ne.s16.totalorder %v1592, 0
        %vm1900 = vcmp.ne.s16.totalorder %v1602, 0
        %vm1901 = vcmp.ne.s16.totalorder %v1612, 0
        %vm1902 = vcmp.ne.s16.totalorder %v1622, 0
        %vm1903 = vcmp.ne.s16.totalorder %v1632, 0
        %vm1904 = vcmp.ne.s16.totalorder %v1642, 0
        %vm1905 = vcmp.ne.s16.totalorder %v1652, 0
        %vm1906 = vcmp.ne.s16.totalorder %v1662, 0
        %vm1907 = vcmp.ne.s16.totalorder %v1672, 0
        %vm1908 = vcmp.ne.s16.totalorder %v1682, 0
        %vm1909 = vcmp.ne.s16.totalorder %v1692, 0
        %vm1910 = vcmp.ne.s16.totalorder %v1702, 0
        %vm1911 = vcmp.ne.s16.totalorder %v1712, 0
        %vm1912 = vcmp.ne.s16.totalorder %v1722, 0
        %vm1913 = vcmp.ne.s16.totalorder %v1732, 0
        %vm1914 = vcmp.ne.s16.totalorder %v1742, 0
        %vm1915 = vcmp.ne.s16.totalorder %v1752, 0
        %vm1916 = vcmp.ne.s16.totalorder %v1762, 0
        %vm1917 = vcmp.ne.s16.totalorder %v1772, 0
        %vm1918 = vcmp.ne.s16.totalorder %v1782, 0
        %vm1919 = vcmp.ne.s16.totalorder %v1792, 0
        %vm1920 = vcmp.ne.s16.totalorder %v1802, 0
        %vm1921 = vcmp.ne.s16.totalorder %v1812, 0
        %vm1922 = vcmp.ne.s16.totalorder %v1822, 0
        %vm1923 = vcmp.ne.s16.totalorder %v1832, 0
        %vm1924 = vcmp.ne.s16.totalorder %v1842, 0
        %vm1925 = vcmp.ne.s16.totalorder %v1852, 0
        %vm1926 = vcmp.ne.s16.totalorder %v1862, 0
        %vm1927 = vcmp.ne.s16.totalorder %v1872, 0
        %vm1928 = vcmp.ne.s16.totalorder %v1882, 0
        %vm1929 = vcmp.ne.s16.totalorder %v1892, 0
        %vm1930 = vcmp.ne.s16.totalorder %v1897, 0
        %v1931 = vsel %vm1898, %v1383, 0
        %v1932 = vsel %vm1899, %v1384, 0
        %v1933 = vsel %vm1900, %v1385, 0
        %v1934 = vsel %vm1901, %v1386, 0
        %v1935 = vsel %vm1902, %v1387, 0
        %v1936 = vsel %vm1903, %v1388, 0
        %v1937 = vsel %vm1904, %v1389, 0
        %v1938 = vsel %vm1905, %v1390, 0
        %v1939 = vsel %vm1906, %v1391, 0
        %v1940 = vsel %vm1907, %v1392, 0
        %v1941 = vsel %vm1908, %v1393, 0
        %v1942 = vsel %vm1909, %v1394, 0
        %v1943 = vsel %vm1910, %v1395, 0
        %v1944 = vsel %vm1911, %v1396, 0
        %v1945 = vsel %vm1912, %v1397, 0
        %v1946 = vsel %vm1913, %v1398, 0
        %v1947 = vsel %vm1914, %v1399, 0
        %v1948 = vsel %vm1915, %v1400, 0
        %v1949 = vsel %vm1916, %v1401, 0
        %v1950 = vsel %vm1917, %v1402, 0
        %v1951 = vsel %vm1918, %v1403, 0
        %v1952 = vsel %vm1919, %v1404, 0
        %v1953 = vsel %vm1920, %v1405, 0
        %v1954 = vsel %vm1921, %v1406, 0
        %v1955 = vsel %vm1922, %v1407, 0
        %v1956 = vsel %vm1923, %v1408, 0
        %v1957 = vsel %vm1924, %v1409, 0
        %v1958 = vsel %vm1925, %v1410, 0
        %v1959 = vsel %vm1926, %v1411, 0
        %v1960 = vsel %vm1927, %v1412, 0
        %v1961 = vsel %vm1928, %v1413, 0
        %v1962 = vsel %vm1929, %v1414, 0
        %v1963 = vsel %vm1930, %v1415, 0
        %vm1964 = vsmask.f32 256
        %vm1965 = vsmask.f32 4368
        %vm1966 = vmor %vm1964, %vm1965
        %v1968 = vshrl.u32 %v1931, 16
        %v1970 = vrot.slane %v1968, 7
        %v1971 = vrot.slane %v1970, 4
        %v1973 = vshrl.u32 %v1932, 16
        %v1975 = vrot.slane %v1973, 7
        %v1976 = vshll.u32 %v1932, 16
        %v1978 = vor.u32 %v1975, %v1976
        %v1979 = vsel %vm1966, %v1971, %v1978
        %v1980 = vrot.slane %v1975, 4
        %v1982 = vshrl.u32 %v1933, 16
        %v1984 = vrot.slane %v1982, 7
        %v1985 = vshll.u32 %v1933, 16
        %v1987 = vor.u32 %v1984, %v1985
        %v1988 = vsel %vm1966, %v1980, %v1987
        %v1989 = vrot.slane %v1984, 4
        %v1991 = vshrl.u32 %v1934, 16
        %v1993 = vrot.slane %v1991, 7
        %v1994 = vshll.u32 %v1934, 16
        %v1996 = vor.u32 %v1993, %v1994
        %v1997 = vsel %vm1966, %v1989, %v1996
        %v1998 = vrot.slane %v1993, 4
        %v2000 = vshrl.u32 %v1935, 16
        %v2002 = vrot.slane %v2000, 7
        %v2003 = vshll.u32 %v1935, 16
        %v2005 = vor.u32 %v2002, %v2003
        %v2006 = vsel %vm1966, %v1998, %v2005
        %v2007 = vrot.slane %v2002, 4
        %v2009 = vshrl.u32 %v1936, 16
        %v2011 = vrot.slane %v2009, 7
        %v2012 = vshll.u32 %v1936, 16
        %v2014 = vor.u32 %v2011, %v2012
        %v2015 = vsel %vm1966, %v2007, %v2014
        %v2016 = vrot.slane %v2011, 4
        %v2018 = vshrl.u32 %v1937, 16
        %v2020 = vrot.slane %v2018, 7
        %v2021 = vshll.u32 %v1937, 16
        %v2023 = vor.u32 %v2020, %v2021
        %v2024 = vsel %vm1966, %v2016, %v2023
        %v2025 = vrot.slane %v2020, 4
        %v2027 = vshrl.u32 %v1938, 16
        %v2029 = vrot.slane %v2027, 7
        %v2030 = vshll.u32 %v1938, 16
        %v2032 = vor.u32 %v2029, %v2030
        %v2033 = vsel %vm1966, %v2025, %v2032
        %v2034 = vrot.slane %v2029, 4
        %v2036 = vshrl.u32 %v1939, 16
        %v2038 = vrot.slane %v2036, 7
        %v2039 = vshll.u32 %v1939, 16
        %v2041 = vor.u32 %v2038, %v2039
        %v2042 = vsel %vm1966, %v2034, %v2041
        %v2043 = vrot.slane %v2038, 4
        %v2045 = vshrl.u32 %v1940, 16
        %v2047 = vrot.slane %v2045, 7
        %v2048 = vshll.u32 %v1940, 16
        %v2050 = vor.u32 %v2047, %v2048
        %v2051 = vsel %vm1966, %v2043, %v2050
        %v2052 = vrot.slane %v2047, 4
        %v2054 = vshrl.u32 %v1941, 16
        %v2056 = vrot.slane %v2054, 7
        %v2057 = vshll.u32 %v1941, 16
        %v2059 = vor.u32 %v2056, %v2057
        %v2060 = vsel %vm1966, %v2052, %v2059
        %v2061 = vrot.slane %v2056, 4
        %v2063 = vshrl.u32 %v1942, 16
        %v2065 = vrot.slane %v2063, 7
        %v2066 = vshll.u32 %v1942, 16
        %v2068 = vor.u32 %v2065, %v2066
        %v2069 = vsel %vm1966, %v2061, %v2068
        %v2070 = vrot.slane %v2065, 4
        %v2072 = vshrl.u32 %v1943, 16
        %v2074 = vrot.slane %v2072, 7
        %v2075 = vshll.u32 %v1943, 16
        %v2077 = vor.u32 %v2074, %v2075
        %v2078 = vsel %vm1966, %v2070, %v2077
        %v2079 = vrot.slane %v2074, 4
        %v2081 = vshrl.u32 %v1944, 16
        %v2083 = vrot.slane %v2081, 7
        %v2084 = vshll.u32 %v1944, 16
        %v2086 = vor.u32 %v2083, %v2084
        %v2087 = vsel %vm1966, %v2079, %v2086
        %v2088 = vrot.slane %v2083, 4
        %v2090 = vshrl.u32 %v1945, 16
        %v2092 = vrot.slane %v2090, 7
        %v2093 = vshll.u32 %v1945, 16
        %v2095 = vor.u32 %v2092, %v2093
        %v2096 = vsel %vm1966, %v2088, %v2095
        %v2097 = vrot.slane %v2092, 4
        %v2099 = vshrl.u32 %v1946, 16
        %v2101 = vrot.slane %v2099, 7
        %v2102 = vshll.u32 %v1946, 16
        %v2104 = vor.u32 %v2101, %v2102
        %v2105 = vsel %vm1966, %v2097, %v2104
        %v2106 = vrot.slane %v2101, 4
        %v2108 = vshrl.u32 %v1947, 16
        %v2110 = vrot.slane %v2108, 7
        %v2111 = vshll.u32 %v1947, 16
        %v2113 = vor.u32 %v2110, %v2111
        %v2114 = vsel %vm1966, %v2106, %v2113
        %v2115 = vrot.slane %v2110, 4
        %v2117 = vshrl.u32 %v1948, 16
        %v2119 = vrot.slane %v2117, 7
        %v2120 = vshll.u32 %v1948, 16
        %v2122 = vor.u32 %v2119, %v2120
        %v2123 = vsel %vm1966, %v2115, %v2122
        %v2124 = vrot.slane %v2119, 4
        %v2126 = vshrl.u32 %v1949, 16
        %v2128 = vrot.slane %v2126, 7
        %v2129 = vshll.u32 %v1949, 16
        %v2131 = vor.u32 %v2128, %v2129
        %v2132 = vsel %vm1966, %v2124, %v2131
        %v2133 = vrot.slane %v2128, 4
        %v2135 = vshrl.u32 %v1950, 16
        %v2137 = vrot.slane %v2135, 7
        %v2138 = vshll.u32 %v1950, 16
        %v2140 = vor.u32 %v2137, %v2138
        %v2141 = vsel %vm1966, %v2133, %v2140
        %v2142 = vrot.slane %v2137, 4
        %v2144 = vshrl.u32 %v1951, 16
        %v2146 = vrot.slane %v2144, 7
        %v2147 = vshll.u32 %v1951, 16
        %v2149 = vor.u32 %v2146, %v2147
        %v2150 = vsel %vm1966, %v2142, %v2149
        %v2151 = vrot.slane %v2146, 4
        %v2153 = vshrl.u32 %v1952, 16
        %v2155 = vrot.slane %v2153, 7
        %v2156 = vshll.u32 %v1952, 16
        %v2158 = vor.u32 %v2155, %v2156
        %v2159 = vsel %vm1966, %v2151, %v2158
        %v2160 = vrot.slane %v2155, 4
        %v2162 = vshrl.u32 %v1953, 16
        %v2164 = vrot.slane %v2162, 7
        %v2165 = vshll.u32 %v1953, 16
        %v2167 = vor.u32 %v2164, %v2165
        %v2168 = vsel %vm1966, %v2160, %v2167
        %v2169 = vrot.slane %v2164, 4
        %v2171 = vshrl.u32 %v1954, 16
        %v2173 = vrot.slane %v2171, 7
        %v2174 = vshll.u32 %v1954, 16
        %v2176 = vor.u32 %v2173, %v2174
        %v2177 = vsel %vm1966, %v2169, %v2176
        %v2178 = vrot.slane %v2173, 4
        %v2180 = vshrl.u32 %v1955, 16
        %v2182 = vrot.slane %v2180, 7
        %v2183 = vshll.u32 %v1955, 16
        %v2185 = vor.u32 %v2182, %v2183
        %v2186 = vsel %vm1966, %v2178, %v2185
        %v2187 = vrot.slane %v2182, 4
        %v2189 = vshrl.u32 %v1956, 16
        %v2191 = vrot.slane %v2189, 7
        %v2192 = vshll.u32 %v1956, 16
        %v2194 = vor.u32 %v2191, %v2192
        %v2195 = vsel %vm1966, %v2187, %v2194
        %v2196 = vrot.slane %v2191, 4
        %v2198 = vshrl.u32 %v1957, 16
        %v2200 = vrot.slane %v2198, 7
        %v2201 = vshll.u32 %v1957, 16
        %v2203 = vor.u32 %v2200, %v2201
        %v2204 = vsel %vm1966, %v2196, %v2203
        %v2205 = vrot.slane %v2200, 4
        %v2207 = vshrl.u32 %v1958, 16
        %v2209 = vrot.slane %v2207, 7
        %v2210 = vshll.u32 %v1958, 16
        %v2212 = vor.u32 %v2209, %v2210
        %v2213 = vsel %vm1966, %v2205, %v2212
        %v2214 = vrot.slane %v2209, 4
        %v2216 = vshrl.u32 %v1959, 16
        %v2218 = vrot.slane %v2216, 7
        %v2219 = vshll.u32 %v1959, 16
        %v2221 = vor.u32 %v2218, %v2219
        %v2222 = vsel %vm1966, %v2214, %v2221
        %v2223 = vrot.slane %v2218, 4
        %v2225 = vshrl.u32 %v1960, 16
        %v2227 = vrot.slane %v2225, 7
        %v2228 = vshll.u32 %v1960, 16
        %v2230 = vor.u32 %v2227, %v2228
        %v2231 = vsel %vm1966, %v2223, %v2230
        %v2232 = vrot.slane %v2227, 4
        %v2234 = vshrl.u32 %v1961, 16
        %v2236 = vrot.slane %v2234, 7
        %v2237 = vshll.u32 %v1961, 16
        %v2239 = vor.u32 %v2236, %v2237
        %v2240 = vsel %vm1966, %v2232, %v2239
        %v2241 = vrot.slane %v2236, 4
        %v2243 = vshrl.u32 %v1962, 16
        %v2245 = vrot.slane %v2243, 7
        %v2246 = vshll.u32 %v1962, 16
        %v2248 = vor.u32 %v2245, %v2246
        %v2249 = vsel %vm1966, %v2241, %v2248
        %v2250 = vrot.slane %v2245, 4
        %v2252 = vshrl.u32 %v1963, 16
        %v2254 = vrot.slane %v2252, 7
        %v2255 = vshll.u32 %v1963, 16
        %v2257 = vor.u32 %v2254, %v2255
        %v2258 = vsel %vm1966, %v2250, %v2257
        %2291 = vst [vmem:[#allocation2 + $0x18] sm:$0xf] %v1979
        %2292 = vst [vmem:[#allocation2 + $0x24] sm:$0xf] %v1988
        %2293 = vst [vmem:[#allocation2 + $0x30] sm:$0xf] %v1997
        %2294 = vst [vmem:[#allocation2 + $0x3c] sm:$0xf] %v2006
        %2295 = vst [vmem:[#allocation2 + $0x48] sm:$0xf] %v2015
        %2296 = vst [vmem:[#allocation2 + $0x54] sm:$0xf] %v2024
        %2297 = vst [vmem:[#allocation2 + $0x60] sm:$0xf] %v2033
        %2298 = vst [vmem:[#allocation2 + $0x6c] sm:$0xf] %v2042
        %2299 = vst [vmem:[#allocation2 + $0x78] sm:$0xf] %v2051
        %2300 = vst [vmem:[#allocation2 + $0x84] sm:$0xf] %v2060
        %2301 = vst [vmem:[#allocation2 + $0x90] sm:$0xf] %v2069
        %2302 = vst [vmem:[#allocation2 + $0x9c] sm:$0xf] %v2078
        %2303 = vst [vmem:[#allocation2 + $0xa8] sm:$0xf] %v2087
        %2304 = vst [vmem:[#allocation2 + $0xb4] sm:$0xf] %v2096
        %2305 = vst [vmem:[#allocation2 + $0xc0] sm:$0xf] %v2105
        %2306 = vst [vmem:[#allocation2 + $0xcc] sm:$0xf] %v2114
        %2307 = vst [vmem:[#allocation2 + $0xd8] sm:$0xf] %v2123
        %2308 = vst [vmem:[#allocation2 + $0xe4] sm:$0xf] %v2132
        %2309 = vst [vmem:[#allocation2 + $0xf0] sm:$0xf] %v2141
        %2310 = vst [vmem:[#allocation2 + $0xfc] sm:$0xf] %v2150
        %2311 = vst [vmem:[#allocation2 + $0x108] sm:$0xf] %v2159
        %2312 = vst [vmem:[#allocation2 + $0x114] sm:$0xf] %v2168
        %2313 = vst [vmem:[#allocation2 + $0x120] sm:$0xf] %v2177
        %2314 = vst [vmem:[#allocation2 + $0x12c] sm:$0xf] %v2186
        %2315 = vst [vmem:[#allocation2 + $0x138] sm:$0xf] %v2195
        %2316 = vst [vmem:[#allocation2 + $0x144] sm:$0xf] %v2204
        %2317 = vst [vmem:[#allocation2 + $0x150] sm:$0xf] %v2213
        %2318 = vst [vmem:[#allocation2 + $0x15c] sm:$0xf] %v2222
        %2319 = vst [vmem:[#allocation2 + $0x168] sm:$0xf] %v2231
        %2320 = vst [vmem:[#allocation2 + $0x174] sm:$0xf] %v2240
        %2321 = vst [vmem:[#allocation2 + $0x180] sm:$0xf] %v2249
        %2322 = vst [vmem:[#allocation2 + $0x18c] sm:$0xf] %v2258
        %v2323 = vld [vmem:[#allocation2 + $0x1c] sm:$0xf]
        %v2324 = vld [vmem:[#allocation2 + $0x28] sm:$0xf]
        %v2325 = vld [vmem:[#allocation2 + $0x34] sm:$0xf]
        %v2326 = vld [vmem:[#allocation2 + $0x40] sm:$0xf]
        %v2327 = vld [vmem:[#allocation2 + $0x4c] sm:$0xf]
        %v2328 = vld [vmem:[#allocation2 + $0x58] sm:$0xf]
        %v2329 = vld [vmem:[#allocation2 + $0x64] sm:$0xf]
        %v2330 = vld [vmem:[#allocation2 + $0x70] sm:$0xf]
        %v2331 = vld [vmem:[#allocation2 + $0x7c] sm:$0xf]
        %v2332 = vld [vmem:[#allocation2 + $0x88] sm:$0xf]
        %v2333 = vld [vmem:[#allocation2 + $0x94] sm:$0xf]
        %v2334 = vld [vmem:[#allocation2 + $0xa0] sm:$0xf]
        %v2335 = vld [vmem:[#allocation2 + $0xac] sm:$0xf]
        %v2336 = vld [vmem:[#allocation2 + $0xb8] sm:$0xf]
        %v2337 = vld [vmem:[#allocation2 + $0xc4] sm:$0xf]
        %v2338 = vld [vmem:[#allocation2 + $0xd0] sm:$0xf]
        %v2339 = vld [vmem:[#allocation2 + $0xdc] sm:$0xf]
        %v2340 = vld [vmem:[#allocation2 + $0xe8] sm:$0xf]
        %v2341 = vld [vmem:[#allocation2 + $0xf4] sm:$0xf]
        %v2342 = vld [vmem:[#allocation2 + $0x100] sm:$0xf]
        %v2343 = vld [vmem:[#allocation2 + $0x10c] sm:$0xf]
        %v2344 = vld [vmem:[#allocation2 + $0x118] sm:$0xf]
        %v2345 = vld [vmem:[#allocation2 + $0x124] sm:$0xf]
        %v2346 = vld [vmem:[#allocation2 + $0x130] sm:$0xf]
        %v2347 = vld [vmem:[#allocation2 + $0x13c] sm:$0xf]
        %v2348 = vld [vmem:[#allocation2 + $0x148] sm:$0xf]
        %v2349 = vld [vmem:[#allocation2 + $0x154] sm:$0xf]
        %v2350 = vld [vmem:[#allocation2 + $0x160] sm:$0xf]
        %v2351 = vld [vmem:[#allocation2 + $0x16c] sm:$0xf]
        %v2352 = vld [vmem:[#allocation2 + $0x178] sm:$0xf]
        %v2353 = vld [vmem:[#allocation2 + $0x184] sm:$0xf]
        %v2354 = vld [vmem:[#allocation2 + $0x190] sm:$0xf]
        %v2355 = vld [vmem:[#allocation2 + $0x19c] sm:$0x1]
        %vm2356 = vcmp.lt.s32.totalorder %v1351, 15
        %vm2357 = vcmp.lt.s32.totalorder %v1352, 15
        %vm2358 = vcmp.lt.s32.totalorder %v1353, 15
        %vm2359 = vcmp.lt.s32.totalorder %v1354, 15
        %vm2360 = vcmp.lt.s32.totalorder %v1355, 15
        %vm2361 = vcmp.lt.s32.totalorder %v1356, 15
        %vm2362 = vcmp.lt.s32.totalorder %v1357, 15
        %vm2363 = vcmp.lt.s32.totalorder %v1358, 15
        %vm2364 = vcmp.lt.s32.totalorder %v1359, 15
        %vm2365 = vcmp.lt.s32.totalorder %v1360, 15
        %vm2366 = vcmp.lt.s32.totalorder %v1361, 15
        %vm2367 = vcmp.lt.s32.totalorder %v1362, 15
        %vm2368 = vcmp.lt.s32.totalorder %v1363, 15
        %vm2369 = vcmp.lt.s32.totalorder %v1364, 15
        %vm2370 = vcmp.lt.s32.totalorder %v1365, 15
        %vm2371 = vcmp.lt.s32.totalorder %v1366, 15
        %vm2372 = vcmp.lt.s32.totalorder %v1367, 15
        %vm2373 = vcmp.lt.s32.totalorder %v1368, 15
        %vm2374 = vcmp.lt.s32.totalorder %v1369, 15
        %vm2375 = vcmp.lt.s32.totalorder %v1370, 15
        %vm2376 = vcmp.lt.s32.totalorder %v1371, 15
        %vm2377 = vcmp.lt.s32.totalorder %v1372, 15
        %vm2378 = vcmp.lt.s32.totalorder %v1373, 15
        %vm2379 = vcmp.lt.s32.totalorder %v1374, 15
        %vm2380 = vcmp.lt.s32.totalorder %v1375, 15
        %vm2381 = vcmp.lt.s32.totalorder %v1376, 15
        %vm2382 = vcmp.lt.s32.totalorder %v1377, 15
        %vm2383 = vcmp.lt.s32.totalorder %v1378, 15
        %vm2384 = vcmp.lt.s32.totalorder %v1379, 15
        %vm2385 = vcmp.lt.s32.totalorder %v1380, 15
        %vm2386 = vcmp.lt.s32.totalorder %v1381, 15
        %vm2387 = vcmp.lt.s32.totalorder %v1382, 15
        %v2388 = vsel %vm2356, 1, 0
        %v2389 = vsel %vm2357, 1, 0
        %v2390 = vsel %vm2358, 1, 0
        %v2391 = vsel %vm2359, 1, 0
        %v2392 = vsel %vm2360, 1, 0
        %v2393 = vsel %vm2361, 1, 0
        %v2394 = vsel %vm2362, 1, 0
        %v2395 = vsel %vm2363, 1, 0
        %v2396 = vsel %vm2364, 1, 0
        %v2397 = vsel %vm2365, 1, 0
        %v2398 = vsel %vm2366, 1, 0
        %v2399 = vsel %vm2367, 1, 0
        %v2400 = vsel %vm2368, 1, 0
        %v2401 = vsel %vm2369, 1, 0
        %v2402 = vsel %vm2370, 1, 0
        %v2403 = vsel %vm2371, 1, 0
        %v2404 = vsel %vm2372, 1, 0
        %v2405 = vsel %vm2373, 1, 0
        %v2406 = vsel %vm2374, 1, 0
        %v2407 = vsel %vm2375, 1, 0
        %v2408 = vsel %vm2376, 1, 0
        %v2409 = vsel %vm2377, 1, 0
        %v2410 = vsel %vm2378, 1, 0
        %v2411 = vsel %vm2379, 1, 0
        %v2412 = vsel %vm2380, 1, 0
        %v2413 = vsel %vm2381, 1, 0
        %v2414 = vsel %vm2382, 1, 0
        %v2415 = vsel %vm2383, 1, 0
        %v2416 = vsel %vm2384, 1, 0
        %v2417 = vsel %vm2385, 1, 0
        %v2418 = vsel %vm2386, 1, 0
        %v2419 = vsel %vm2387, 1, 0
        %vm2420 = vcmp.eq.s32.totalorder %v2388, 1
        %vm2421 = vcmp.eq.s32.totalorder %v2389, 1
        %vm2422 = vcmp.eq.s32.totalorder %v2390, 1
        %vm2423 = vcmp.eq.s32.totalorder %v2391, 1
        %vm2424 = vcmp.eq.s32.totalorder %v2392, 1
        %vm2425 = vcmp.eq.s32.totalorder %v2393, 1
        %vm2426 = vcmp.eq.s32.totalorder %v2394, 1
        %vm2427 = vcmp.eq.s32.totalorder %v2395, 1
        %vm2428 = vcmp.eq.s32.totalorder %v2396, 1
        %vm2429 = vcmp.eq.s32.totalorder %v2397, 1
        %vm2430 = vcmp.eq.s32.totalorder %v2398, 1
        %vm2431 = vcmp.eq.s32.totalorder %v2399, 1
        %vm2432 = vcmp.eq.s32.totalorder %v2400, 1
        %vm2433 = vcmp.eq.s32.totalorder %v2401, 1
        %vm2434 = vcmp.eq.s32.totalorder %v2402, 1
        %vm2435 = vcmp.eq.s32.totalorder %v2403, 1
        %vm2436 = vcmp.eq.s32.totalorder %v2404, 1
        %vm2437 = vcmp.eq.s32.totalorder %v2405, 1
        %vm2438 = vcmp.eq.s32.totalorder %v2406, 1
        %vm2439 = vcmp.eq.s32.totalorder %v2407, 1
        %vm2440 = vcmp.eq.s32.totalorder %v2408, 1
        %vm2441 = vcmp.eq.s32.totalorder %v2409, 1
        %vm2442 = vcmp.eq.s32.totalorder %v2410, 1
        %vm2443 = vcmp.eq.s32.totalorder %v2411, 1
        %vm2444 = vcmp.eq.s32.totalorder %v2412, 1
        %vm2445 = vcmp.eq.s32.totalorder %v2413, 1
        %vm2446 = vcmp.eq.s32.totalorder %v2414, 1
        %vm2447 = vcmp.eq.s32.totalorder %v2415, 1
        %vm2448 = vcmp.eq.s32.totalorder %v2416, 1
        %vm2449 = vcmp.eq.s32.totalorder %v2417, 1
        %vm2450 = vcmp.eq.s32.totalorder %v2418, 1
        %vm2451 = vcmp.eq.s32.totalorder %v2419, 1
        %vm2452 = vmpackc.low %vm2420, %vm2420
        %vm2453 = vmpackc.low %vm2421, %vm2421
        %vm2454 = vmpackc.low %vm2422, %vm2422
        %vm2455 = vmpackc.low %vm2423, %vm2423
        %vm2456 = vmpackc.low %vm2424, %vm2424
        %vm2457 = vmpackc.low %vm2425, %vm2425
        %vm2458 = vmpackc.low %vm2426, %vm2426
        %vm2459 = vmpackc.low %vm2427, %vm2427
        %vm2460 = vmpackc.low %vm2428, %vm2428
        %vm2461 = vmpackc.low %vm2429, %vm2429
        %vm2462 = vmpackc.low %vm2430, %vm2430
        %vm2463 = vmpackc.low %vm2431, %vm2431
        %vm2464 = vmpackc.low %vm2432, %vm2432
        %vm2465 = vmpackc.low %vm2433, %vm2433
        %vm2466 = vmpackc.low %vm2434, %vm2434
        %vm2467 = vmpackc.low %vm2435, %vm2435
        %vm2468 = vmpackc.low %vm2436, %vm2436
        %vm2469 = vmpackc.low %vm2437, %vm2437
        %vm2470 = vmpackc.low %vm2438, %vm2438
        %vm2471 = vmpackc.low %vm2439, %vm2439
        %vm2472 = vmpackc.low %vm2440, %vm2440
        %vm2473 = vmpackc.low %vm2441, %vm2441
        %vm2474 = vmpackc.low %vm2442, %vm2442
        %vm2475 = vmpackc.low %vm2443, %vm2443
        %vm2476 = vmpackc.low %vm2444, %vm2444
        %vm2477 = vmpackc.low %vm2445, %vm2445
        %vm2478 = vmpackc.low %vm2446, %vm2446
        %vm2479 = vmpackc.low %vm2447, %vm2447
        %vm2480 = vmpackc.low %vm2448, %vm2448
        %vm2481 = vmpackc.low %vm2449, %vm2449
        %vm2482 = vmpackc.low %vm2450, %vm2450
        %vm2483 = vmpackc.low %vm2451, %vm2451
        %v2484 = vsel %vm2452, 65537, 0
        %v2485 = vsel %vm2453, 65537, 0
        %v2486 = vsel %vm2454, 65537, 0
        %v2487 = vsel %vm2455, 65537, 0
        %v2488 = vsel %vm2456, 65537, 0
        %v2489 = vsel %vm2457, 65537, 0
        %v2490 = vsel %vm2458, 65537, 0
        %v2491 = vsel %vm2459, 65537, 0
        %v2492 = vsel %vm2460, 65537, 0
        %v2493 = vsel %vm2461, 65537, 0
        %v2494 = vsel %vm2462, 65537, 0
        %v2495 = vsel %vm2463, 65537, 0
        %v2496 = vsel %vm2464, 65537, 0
        %v2497 = vsel %vm2465, 65537, 0
        %v2498 = vsel %vm2466, 65537, 0
        %v2499 = vsel %vm2467, 65537, 0
        %v2500 = vsel %vm2468, 65537, 0
        %v2501 = vsel %vm2469, 65537, 0
        %v2502 = vsel %vm2470, 65537, 0
        %v2503 = vsel %vm2471, 65537, 0
        %v2504 = vsel %vm2472, 65537, 0
        %v2505 = vsel %vm2473, 65537, 0
        %v2506 = vsel %vm2474, 65537, 0
        %v2507 = vsel %vm2475, 65537, 0
        %v2508 = vsel %vm2476, 65537, 0
        %v2509 = vsel %vm2477, 65537, 0
        %v2510 = vsel %vm2478, 65537, 0
        %v2511 = vsel %vm2479, 65537, 0
        %v2512 = vsel %vm2480, 65537, 0
        %v2513 = vsel %vm2481, 65537, 0
        %v2514 = vsel %vm2482, 65537, 0
        %v2515 = vsel %vm2483, 65537, 0
        %v2517 = vshrl.u32 %v2484, 16
        %v2519 = vrot.slane %v2517, 7
        %v2520 = vshll.u32 %v2484, 16
        %v2522 = vor.u32 %v2519, %v2520
        %v2523 = vrot.slane %v2519, 4
        %v2525 = vshrl.u32 %v2485, 16
        %v2527 = vrot.slane %v2525, 7
        %v2528 = vshll.u32 %v2485, 16
        %v2530 = vor.u32 %v2527, %v2528
        %v2531 = vsel %vm1966, %v2523, %v2530
        %v2532 = vrot.slane %v2527, 4
        %v2534 = vshrl.u32 %v2486, 16
        %v2536 = vrot.slane %v2534, 7
        %v2537 = vshll.u32 %v2486, 16
        %v2539 = vor.u32 %v2536, %v2537
        %v2540 = vsel %vm1966, %v2532, %v2539
        %v2541 = vrot.slane %v2536, 4
        %v2543 = vshrl.u32 %v2487, 16
        %v2545 = vrot.slane %v2543, 7
        %v2546 = vshll.u32 %v2487, 16
        %v2548 = vor.u32 %v2545, %v2546
        %v2549 = vsel %vm1966, %v2541, %v2548
        %v2550 = vrot.slane %v2545, 4
        %v2552 = vshrl.u32 %v2488, 16
        %v2554 = vrot.slane %v2552, 7
        %v2555 = vshll.u32 %v2488, 16
        %v2557 = vor.u32 %v2554, %v2555
        %v2558 = vsel %vm1966, %v2550, %v2557
        %v2559 = vrot.slane %v2554, 4
        %v2561 = vshrl.u32 %v2489, 16
        %v2563 = vrot.slane %v2561, 7
        %v2564 = vshll.u32 %v2489, 16
        %v2566 = vor.u32 %v2563, %v2564
        %v2567 = vsel %vm1966, %v2559, %v2566
        %v2568 = vrot.slane %v2563, 4
        %v2570 = vshrl.u32 %v2490, 16
        %v2572 = vrot.slane %v2570, 7
        %v2573 = vshll.u32 %v2490, 16
        %v2575 = vor.u32 %v2572, %v2573
        %v2576 = vsel %vm1966, %v2568, %v2575
        %v2577 = vrot.slane %v2572, 4
        %v2579 = vshrl.u32 %v2491, 16
        %v2581 = vrot.slane %v2579, 7
        %v2582 = vshll.u32 %v2491, 16
        %v2584 = vor.u32 %v2581, %v2582
        %v2585 = vsel %vm1966, %v2577, %v2584
        %v2586 = vrot.slane %v2581, 4
        %v2588 = vshrl.u32 %v2492, 16
        %v2590 = vrot.slane %v2588, 7
        %v2591 = vshll.u32 %v2492, 16
        %v2593 = vor.u32 %v2590, %v2591
        %v2594 = vsel %vm1966, %v2586, %v2593
        %v2595 = vrot.slane %v2590, 4
        %v2597 = vshrl.u32 %v2493, 16
        %v2599 = vrot.slane %v2597, 7
        %v2600 = vshll.u32 %v2493, 16
        %v2602 = vor.u32 %v2599, %v2600
        %v2603 = vsel %vm1966, %v2595, %v2602
        %v2604 = vrot.slane %v2599, 4
        %v2606 = vshrl.u32 %v2494, 16
        %v2608 = vrot.slane %v2606, 7
        %v2609 = vshll.u32 %v2494, 16
        %v2611 = vor.u32 %v2608, %v2609
        %v2612 = vsel %vm1966, %v2604, %v2611
        %v2613 = vrot.slane %v2608, 4
        %v2615 = vshrl.u32 %v2495, 16
        %v2617 = vrot.slane %v2615, 7
        %v2618 = vshll.u32 %v2495, 16
        %v2620 = vor.u32 %v2617, %v2618
        %v2621 = vsel %vm1966, %v2613, %v2620
        %v2622 = vrot.slane %v2617, 4
        %v2624 = vshrl.u32 %v2496, 16
        %v2626 = vrot.slane %v2624, 7
        %v2627 = vshll.u32 %v2496, 16
        %v2629 = vor.u32 %v2626, %v2627
        %v2630 = vsel %vm1966, %v2622, %v2629
        %v2631 = vrot.slane %v2626, 4
        %v2633 = vshrl.u32 %v2497, 16
        %v2635 = vrot.slane %v2633, 7
        %v2636 = vshll.u32 %v2497, 16
        %v2638 = vor.u32 %v2635, %v2636
        %v2639 = vsel %vm1966, %v2631, %v2638
        %v2640 = vrot.slane %v2635, 4
        %v2642 = vshrl.u32 %v2498, 16
        %v2644 = vrot.slane %v2642, 7
        %v2645 = vshll.u32 %v2498, 16
        %v2647 = vor.u32 %v2644, %v2645
        %v2648 = vsel %vm1966, %v2640, %v2647
        %v2649 = vrot.slane %v2644, 4
        %v2651 = vshrl.u32 %v2499, 16
        %v2653 = vrot.slane %v2651, 7
        %v2654 = vshll.u32 %v2499, 16
        %v2656 = vor.u32 %v2653, %v2654
        %v2657 = vsel %vm1966, %v2649, %v2656
        %v2658 = vrot.slane %v2653, 4
        %v2660 = vshrl.u32 %v2500, 16
        %v2662 = vrot.slane %v2660, 7
        %v2663 = vshll.u32 %v2500, 16
        %v2665 = vor.u32 %v2662, %v2663
        %v2666 = vsel %vm1966, %v2658, %v2665
        %v2667 = vrot.slane %v2662, 4
        %v2669 = vshrl.u32 %v2501, 16
        %v2671 = vrot.slane %v2669, 7
        %v2672 = vshll.u32 %v2501, 16
        %v2674 = vor.u32 %v2671, %v2672
        %v2675 = vsel %vm1966, %v2667, %v2674
        %v2676 = vrot.slane %v2671, 4
        %v2678 = vshrl.u32 %v2502, 16
        %v2680 = vrot.slane %v2678, 7
        %v2681 = vshll.u32 %v2502, 16
        %v2683 = vor.u32 %v2680, %v2681
        %v2684 = vsel %vm1966, %v2676, %v2683
        %v2685 = vrot.slane %v2680, 4
        %v2687 = vshrl.u32 %v2503, 16
        %v2689 = vrot.slane %v2687, 7
        %v2690 = vshll.u32 %v2503, 16
        %v2692 = vor.u32 %v2689, %v2690
        %v2693 = vsel %vm1966, %v2685, %v2692
        %v2694 = vrot.slane %v2689, 4
        %v2696 = vshrl.u32 %v2504, 16
        %v2698 = vrot.slane %v2696, 7
        %v2699 = vshll.u32 %v2504, 16
        %v2701 = vor.u32 %v2698, %v2699
        %v2702 = vsel %vm1966, %v2694, %v2701
        %v2703 = vrot.slane %v2698, 4
        %v2705 = vshrl.u32 %v2505, 16
        %v2707 = vrot.slane %v2705, 7
        %v2708 = vshll.u32 %v2505, 16
        %v2710 = vor.u32 %v2707, %v2708
        %v2711 = vsel %vm1966, %v2703, %v2710
        %v2712 = vrot.slane %v2707, 4
        %v2714 = vshrl.u32 %v2506, 16
        %v2716 = vrot.slane %v2714, 7
        %v2717 = vshll.u32 %v2506, 16
        %v2719 = vor.u32 %v2716, %v2717
        %v2720 = vsel %vm1966, %v2712, %v2719
        %v2721 = vrot.slane %v2716, 4
        %v2723 = vshrl.u32 %v2507, 16
        %v2725 = vrot.slane %v2723, 7
        %v2726 = vshll.u32 %v2507, 16
        %v2728 = vor.u32 %v2725, %v2726
        %v2729 = vsel %vm1966, %v2721, %v2728
        %v2730 = vrot.slane %v2725, 4
        %v2732 = vshrl.u32 %v2508, 16
        %v2734 = vrot.slane %v2732, 7
        %v2735 = vshll.u32 %v2508, 16
        %v2737 = vor.u32 %v2734, %v2735
        %v2738 = vsel %vm1966, %v2730, %v2737
        %v2739 = vrot.slane %v2734, 4
        %v2741 = vshrl.u32 %v2509, 16
        %v2743 = vrot.slane %v2741, 7
        %v2744 = vshll.u32 %v2509, 16
        %v2746 = vor.u32 %v2743, %v2744
        %v2747 = vsel %vm1966, %v2739, %v2746
        %v2748 = vrot.slane %v2743, 4
        %v2750 = vshrl.u32 %v2510, 16
        %v2752 = vrot.slane %v2750, 7
        %v2753 = vshll.u32 %v2510, 16
        %v2755 = vor.u32 %v2752, %v2753
        %v2756 = vsel %vm1966, %v2748, %v2755
        %v2757 = vrot.slane %v2752, 4
        %v2759 = vshrl.u32 %v2511, 16
        %v2761 = vrot.slane %v2759, 7
        %v2762 = vshll.u32 %v2511, 16
        %v2764 = vor.u32 %v2761, %v2762
        %v2765 = vsel %vm1966, %v2757, %v2764
        %v2766 = vrot.slane %v2761, 4
        %v2768 = vshrl.u32 %v2512, 16
        %v2770 = vrot.slane %v2768, 7
        %v2771 = vshll.u32 %v2512, 16
        %v2773 = vor.u32 %v2770, %v2771
        %v2774 = vsel %vm1966, %v2766, %v2773
        %v2775 = vrot.slane %v2770, 4
        %v2777 = vshrl.u32 %v2513, 16
        %v2779 = vrot.slane %v2777, 7
        %v2780 = vshll.u32 %v2513, 16
        %v2782 = vor.u32 %v2779, %v2780
        %v2783 = vsel %vm1966, %v2775, %v2782
        %v2784 = vrot.slane %v2779, 4
        %v2786 = vshrl.u32 %v2514, 16
        %v2788 = vrot.slane %v2786, 7
        %v2789 = vshll.u32 %v2514, 16
        %v2791 = vor.u32 %v2788, %v2789
        %v2792 = vsel %vm1966, %v2784, %v2791
        %v2793 = vrot.slane %v2788, 4
        %v2795 = vshrl.u32 %v2515, 16
        %v2797 = vrot.slane %v2795, 7
        %v2798 = vshll.u32 %v2515, 16
        %v2800 = vor.u32 %v2797, %v2798
        %v2801 = vsel %vm1966, %v2793, %v2800
        %v2802 = vrot.slane %v2797, 4
        %vm2803 = vcmp.ne.s16.totalorder %v2522, 0
        %vm2804 = vcmp.ne.s16.totalorder %v2531, 0
        %vm2805 = vcmp.ne.s16.totalorder %v2540, 0
        %vm2806 = vcmp.ne.s16.totalorder %v2549, 0
        %vm2807 = vcmp.ne.s16.totalorder %v2558, 0
        %vm2808 = vcmp.ne.s16.totalorder %v2567, 0
        %vm2809 = vcmp.ne.s16.totalorder %v2576, 0
        %vm2810 = vcmp.ne.s16.totalorder %v2585, 0
        %vm2811 = vcmp.ne.s16.totalorder %v2594, 0
        %vm2812 = vcmp.ne.s16.totalorder %v2603, 0
        %vm2813 = vcmp.ne.s16.totalorder %v2612, 0
        %vm2814 = vcmp.ne.s16.totalorder %v2621, 0
        %vm2815 = vcmp.ne.s16.totalorder %v2630, 0
        %vm2816 = vcmp.ne.s16.totalorder %v2639, 0
        %vm2817 = vcmp.ne.s16.totalorder %v2648, 0
        %vm2818 = vcmp.ne.s16.totalorder %v2657, 0
        %vm2819 = vcmp.ne.s16.totalorder %v2666, 0
        %vm2820 = vcmp.ne.s16.totalorder %v2675, 0
        %vm2821 = vcmp.ne.s16.totalorder %v2684, 0
        %vm2822 = vcmp.ne.s16.totalorder %v2693, 0
        %vm2823 = vcmp.ne.s16.totalorder %v2702, 0
        %vm2824 = vcmp.ne.s16.totalorder %v2711, 0
        %vm2825 = vcmp.ne.s16.totalorder %v2720, 0
        %vm2826 = vcmp.ne.s16.totalorder %v2729, 0
        %vm2827 = vcmp.ne.s16.totalorder %v2738, 0
        %vm2828 = vcmp.ne.s16.totalorder %v2747, 0
        %vm2829 = vcmp.ne.s16.totalorder %v2756, 0
        %vm2830 = vcmp.ne.s16.totalorder %v2765, 0
        %vm2831 = vcmp.ne.s16.totalorder %v2774, 0
        %vm2832 = vcmp.ne.s16.totalorder %v2783, 0
        %vm2833 = vcmp.ne.s16.totalorder %v2792, 0
        %vm2834 = vcmp.ne.s16.totalorder %v2801, 0
        %vm2835 = vcmp.ne.s16.totalorder %v2802, 0
        %v2836 = vsel %vm2803, %v2323, 0
        %v2837 = vsel %vm2804, %v2324, 0
        %v2838 = vsel %vm2805, %v2325, 0
        %v2839 = vsel %vm2806, %v2326, 0
        %v2840 = vsel %vm2807, %v2327, 0
        %v2841 = vsel %vm2808, %v2328, 0
        %v2842 = vsel %vm2809, %v2329, 0
        %v2843 = vsel %vm2810, %v2330, 0
        %v2844 = vsel %vm2811, %v2331, 0
        %v2845 = vsel %vm2812, %v2332, 0
        %v2846 = vsel %vm2813, %v2333, 0
        %v2847 = vsel %vm2814, %v2334, 0
        %v2848 = vsel %vm2815, %v2335, 0
        %v2849 = vsel %vm2816, %v2336, 0
        %v2850 = vsel %vm2817, %v2337, 0
        %v2851 = vsel %vm2818, %v2338, 0
        %v2852 = vsel %vm2819, %v2339, 0
        %v2853 = vsel %vm2820, %v2340, 0
        %v2854 = vsel %vm2821, %v2341, 0
        %v2855 = vsel %vm2822, %v2342, 0
        %v2856 = vsel %vm2823, %v2343, 0
        %v2857 = vsel %vm2824, %v2344, 0
        %v2858 = vsel %vm2825, %v2345, 0
        %v2859 = vsel %vm2826, %v2346, 0
        %v2860 = vsel %vm2827, %v2347, 0
        %v2861 = vsel %vm2828, %v2348, 0
        %v2862 = vsel %vm2829, %v2349, 0
        %v2863 = vsel %vm2830, %v2350, 0
        %v2864 = vsel %vm2831, %v2351, 0
        %v2865 = vsel %vm2832, %v2352, 0
        %v2866 = vsel %vm2833, %v2353, 0
        %v2867 = vsel %vm2834, %v2354, 0
        %v2868 = vsel %vm2835, %v2355, 0
        %v2870 = vshrl.u32 %v2836, 16
        %v2872 = vrot.slane %v2870, 4
        %v2873 = vshll.u32 %v2836, 16
        %v2875 = vrot.slane %v2873, 5
        %v2876 = vor.u32 %v2872, %v2875
        %v2877 = vrot.slane %v2876, 4
        %v2879 = vshll.u32 %v2837, 16
        %v2881 = vrot.slane %v2879, 5
        %v2882 = vsel %vm1578, %v2877, %v2881
        %v2883 = vshrl.u32 %v2837, 16
        %v2885 = vrot.slane %v2883, 4
        %v2886 = vor.u32 %v2885, %v2881
        %v2887 = vrot.slane %v2886, 4
        %v2889 = vshll.u32 %v2838, 16
        %v2891 = vrot.slane %v2889, 5
        %v2892 = vsel %vm1578, %v2887, %v2891
        %v2893 = vshrl.u32 %v2838, 16
        %v2895 = vrot.slane %v2893, 4
        %v2896 = vor.u32 %v2895, %v2891
        %v2897 = vrot.slane %v2896, 4
        %v2899 = vshll.u32 %v2839, 16
        %v2901 = vrot.slane %v2899, 5
        %v2902 = vsel %vm1578, %v2897, %v2901
        %v2903 = vshrl.u32 %v2839, 16
        %v2905 = vrot.slane %v2903, 4
        %v2906 = vor.u32 %v2905, %v2901
        %v2907 = vrot.slane %v2906, 4
        %v2909 = vshll.u32 %v2840, 16
        %v2911 = vrot.slane %v2909, 5
        %v2912 = vsel %vm1578, %v2907, %v2911
        %v2913 = vshrl.u32 %v2840, 16
        %v2915 = vrot.slane %v2913, 4
        %v2916 = vor.u32 %v2915, %v2911
        %v2917 = vrot.slane %v2916, 4
        %v2919 = vshll.u32 %v2841, 16
        %v2921 = vrot.slane %v2919, 5
        %v2922 = vsel %vm1578, %v2917, %v2921
        %v2923 = vshrl.u32 %v2841, 16
        %v2925 = vrot.slane %v2923, 4
        %v2926 = vor.u32 %v2925, %v2921
        %v2927 = vrot.slane %v2926, 4
        %v2929 = vshll.u32 %v2842, 16
        %v2931 = vrot.slane %v2929, 5
        %v2932 = vsel %vm1578, %v2927, %v2931
        %v2933 = vshrl.u32 %v2842, 16
        %v2935 = vrot.slane %v2933, 4
        %v2936 = vor.u32 %v2935, %v2931
        %v2937 = vrot.slane %v2936, 4
        %v2939 = vshll.u32 %v2843, 16
        %v2941 = vrot.slane %v2939, 5
        %v2942 = vsel %vm1578, %v2937, %v2941
        %v2943 = vshrl.u32 %v2843, 16
        %v2945 = vrot.slane %v2943, 4
        %v2946 = vor.u32 %v2945, %v2941
        %v2947 = vrot.slane %v2946, 4
        %v2949 = vshll.u32 %v2844, 16
        %v2951 = vrot.slane %v2949, 5
        %v2952 = vsel %vm1578, %v2947, %v2951
        %v2953 = vshrl.u32 %v2844, 16
        %v2955 = vrot.slane %v2953, 4
        %v2956 = vor.u32 %v2955, %v2951
        %v2957 = vrot.slane %v2956, 4
        %v2959 = vshll.u32 %v2845, 16
        %v2961 = vrot.slane %v2959, 5
        %v2962 = vsel %vm1578, %v2957, %v2961
        %v2963 = vshrl.u32 %v2845, 16
        %v2965 = vrot.slane %v2963, 4
        %v2966 = vor.u32 %v2965, %v2961
        %v2967 = vrot.slane %v2966, 4
        %v2969 = vshll.u32 %v2846, 16
        %v2971 = vrot.slane %v2969, 5
        %v2972 = vsel %vm1578, %v2967, %v2971
        %v2973 = vshrl.u32 %v2846, 16
        %v2975 = vrot.slane %v2973, 4
        %v2976 = vor.u32 %v2975, %v2971
        %v2977 = vrot.slane %v2976, 4
        %v2979 = vshll.u32 %v2847, 16
        %v2981 = vrot.slane %v2979, 5
        %v2982 = vsel %vm1578, %v2977, %v2981
        %v2983 = vshrl.u32 %v2847, 16
        %v2985 = vrot.slane %v2983, 4
        %v2986 = vor.u32 %v2985, %v2981
        %v2987 = vrot.slane %v2986, 4
        %v2989 = vshll.u32 %v2848, 16
        %v2991 = vrot.slane %v2989, 5
        %v2992 = vsel %vm1578, %v2987, %v2991
        %v2993 = vshrl.u32 %v2848, 16
        %v2995 = vrot.slane %v2993, 4
        %v2996 = vor.u32 %v2995, %v2991
        %v2997 = vrot.slane %v2996, 4
        %v2999 = vshll.u32 %v2849, 16
        %v3001 = vrot.slane %v2999, 5
        %v3002 = vsel %vm1578, %v2997, %v3001
        %v3003 = vshrl.u32 %v2849, 16
        %v3005 = vrot.slane %v3003, 4
        %v3006 = vor.u32 %v3005, %v3001
        %v3007 = vrot.slane %v3006, 4
        %v3009 = vshll.u32 %v2850, 16
        %v3011 = vrot.slane %v3009, 5
        %v3012 = vsel %vm1578, %v3007, %v3011
        %v3013 = vshrl.u32 %v2850, 16
        %v3015 = vrot.slane %v3013, 4
        %v3016 = vor.u32 %v3015, %v3011
        %v3017 = vrot.slane %v3016, 4
        %v3019 = vshll.u32 %v2851, 16
        %v3021 = vrot.slane %v3019, 5
        %v3022 = vsel %vm1578, %v3017, %v3021
        %v3023 = vshrl.u32 %v2851, 16
        %v3025 = vrot.slane %v3023, 4
        %v3026 = vor.u32 %v3025, %v3021
        %v3027 = vrot.slane %v3026, 4
        %v3029 = vshll.u32 %v2852, 16
        %v3031 = vrot.slane %v3029, 5
        %v3032 = vsel %vm1578, %v3027, %v3031
        %v3033 = vshrl.u32 %v2852, 16
        %v3035 = vrot.slane %v3033, 4
        %v3036 = vor.u32 %v3035, %v3031
        %v3037 = vrot.slane %v3036, 4
        %v3039 = vshll.u32 %v2853, 16
        %v3041 = vrot.slane %v3039, 5
        %v3042 = vsel %vm1578, %v3037, %v3041
        %v3043 = vshrl.u32 %v2853, 16
        %v3045 = vrot.slane %v3043, 4
        %v3046 = vor.u32 %v3045, %v3041
        %v3047 = vrot.slane %v3046, 4
        %v3049 = vshll.u32 %v2854, 16
        %v3051 = vrot.slane %v3049, 5
        %v3052 = vsel %vm1578, %v3047, %v3051
        %v3053 = vshrl.u32 %v2854, 16
        %v3055 = vrot.slane %v3053, 4
        %v3056 = vor.u32 %v3055, %v3051
        %v3057 = vrot.slane %v3056, 4
        %v3059 = vshll.u32 %v2855, 16
        %v3061 = vrot.slane %v3059, 5
        %v3062 = vsel %vm1578, %v3057, %v3061
        %v3063 = vshrl.u32 %v2855, 16
        %v3065 = vrot.slane %v3063, 4
        %v3066 = vor.u32 %v3065, %v3061
        %v3067 = vrot.slane %v3066, 4
        %v3069 = vshll.u32 %v2856, 16
        %v3071 = vrot.slane %v3069, 5
        %v3072 = vsel %vm1578, %v3067, %v3071
        %v3073 = vshrl.u32 %v2856, 16
        %v3075 = vrot.slane %v3073, 4
        %v3076 = vor.u32 %v3075, %v3071
        %v3077 = vrot.slane %v3076, 4
        %v3079 = vshll.u32 %v2857, 16
        %v3081 = vrot.slane %v3079, 5
        %v3082 = vsel %vm1578, %v3077, %v3081
        %v3083 = vshrl.u32 %v2857, 16
        %v3085 = vrot.slane %v3083, 4
        %v3086 = vor.u32 %v3085, %v3081
        %v3087 = vrot.slane %v3086, 4
        %v3089 = vshll.u32 %v2858, 16
        %v3091 = vrot.slane %v3089, 5
        %v3092 = vsel %vm1578, %v3087, %v3091
        %v3093 = vshrl.u32 %v2858, 16
        %v3095 = vrot.slane %v3093, 4
        %v3096 = vor.u32 %v3095, %v3091
        %v3097 = vrot.slane %v3096, 4
        %v3099 = vshll.u32 %v2859, 16
        %v3101 = vrot.slane %v3099, 5
        %v3102 = vsel %vm1578, %v3097, %v3101
        %v3103 = vshrl.u32 %v2859, 16
        %v3105 = vrot.slane %v3103, 4
        %v3106 = vor.u32 %v3105, %v3101
        %v3107 = vrot.slane %v3106, 4
        %v3109 = vshll.u32 %v2860, 16
        %v3111 = vrot.slane %v3109, 5
        %v3112 = vsel %vm1578, %v3107, %v3111
        %v3113 = vshrl.u32 %v2860, 16
        %v3115 = vrot.slane %v3113, 4
        %v3116 = vor.u32 %v3115, %v3111
        %v3117 = vrot.slane %v3116, 4
        %v3119 = vshll.u32 %v2861, 16
        %v3121 = vrot.slane %v3119, 5
        %v3122 = vsel %vm1578, %v3117, %v3121
        %v3123 = vshrl.u32 %v2861, 16
        %v3125 = vrot.slane %v3123, 4
        %v3126 = vor.u32 %v3125, %v3121
        %v3127 = vrot.slane %v3126, 4
        %v3129 = vshll.u32 %v2862, 16
        %v3131 = vrot.slane %v3129, 5
        %v3132 = vsel %vm1578, %v3127, %v3131
        %v3133 = vshrl.u32 %v2862, 16
        %v3135 = vrot.slane %v3133, 4
        %v3136 = vor.u32 %v3135, %v3131
        %v3137 = vrot.slane %v3136, 4
        %v3139 = vshll.u32 %v2863, 16
        %v3141 = vrot.slane %v3139, 5
        %v3142 = vsel %vm1578, %v3137, %v3141
        %v3143 = vshrl.u32 %v2863, 16
        %v3145 = vrot.slane %v3143, 4
        %v3146 = vor.u32 %v3145, %v3141
        %v3147 = vrot.slane %v3146, 4
        %v3149 = vshll.u32 %v2864, 16
        %v3151 = vrot.slane %v3149, 5
        %v3152 = vsel %vm1578, %v3147, %v3151
        %v3153 = vshrl.u32 %v2864, 16
        %v3155 = vrot.slane %v3153, 4
        %v3156 = vor.u32 %v3155, %v3151
        %v3157 = vrot.slane %v3156, 4
        %v3159 = vshll.u32 %v2865, 16
        %v3161 = vrot.slane %v3159, 5
        %v3162 = vsel %vm1578, %v3157, %v3161
        %v3163 = vshrl.u32 %v2865, 16
        %v3165 = vrot.slane %v3163, 4
        %v3166 = vor.u32 %v3165, %v3161
        %v3167 = vrot.slane %v3166, 4
        %v3169 = vshll.u32 %v2866, 16
        %v3171 = vrot.slane %v3169, 5
        %v3172 = vsel %vm1578, %v3167, %v3171
        %v3173 = vshrl.u32 %v2866, 16
        %v3175 = vrot.slane %v3173, 4
        %v3176 = vor.u32 %v3175, %v3171
        %v3177 = vrot.slane %v3176, 4
        %v3179 = vshll.u32 %v2867, 16
        %v3181 = vrot.slane %v3179, 5
        %v3182 = vsel %vm1578, %v3177, %v3181
        %v3183 = vshrl.u32 %v2867, 16
        %v3185 = vrot.slane %v3183, 4
        %v3186 = vor.u32 %v3185, %v3181
        %v3187 = vrot.slane %v3186, 4
        %v3189 = vshll.u32 %v2868, 16
        %v3191 = vrot.slane %v3189, 5
        %v3192 = vsel %vm1578, %v3187, %v3191
        %3225 = vst [vmem:[#allocation2 + $0x20] sm:$0xf] %v2882
        %3226 = vst [vmem:[#allocation2 + $0x2c] sm:$0xf] %v2892
        %3227 = vst [vmem:[#allocation2 + $0x38] sm:$0xf] %v2902
        %3228 = vst [vmem:[#allocation2 + $0x44] sm:$0xf] %v2912
        %3229 = vst [vmem:[#allocation2 + $0x50] sm:$0xf] %v2922
        %3230 = vst [vmem:[#allocation2 + $0x5c] sm:$0xf] %v2932
        %3231 = vst [vmem:[#allocation2 + $0x68] sm:$0xf] %v2942
        %3232 = vst [vmem:[#allocation2 + $0x74] sm:$0xf] %v2952
        %3233 = vst [vmem:[#allocation2 + $0x80] sm:$0xf] %v2962
        %3234 = vst [vmem:[#allocation2 + $0x8c] sm:$0xf] %v2972
        %3235 = vst [vmem:[#allocation2 + $0x98] sm:$0xf] %v2982
        %3236 = vst [vmem:[#allocation2 + $0xa4] sm:$0xf] %v2992
        %3237 = vst [vmem:[#allocation2 + $0xb0] sm:$0xf] %v3002
        %3238 = vst [vmem:[#allocation2 + $0xbc] sm:$0xf] %v3012
        %3239 = vst [vmem:[#allocation2 + $0xc8] sm:$0xf] %v3022
        %3240 = vst [vmem:[#allocation2 + $0xd4] sm:$0xf] %v3032
        %3241 = vst [vmem:[#allocation2 + $0xe0] sm:$0xf] %v3042
        %3242 = vst [vmem:[#allocation2 + $0xec] sm:$0xf] %v3052
        %3243 = vst [vmem:[#allocation2 + $0xf8] sm:$0xf] %v3062
        %3244 = vst [vmem:[#allocation2 + $0x104] sm:$0xf] %v3072
        %3245 = vst [vmem:[#allocation2 + $0x110] sm:$0xf] %v3082
        %3246 = vst [vmem:[#allocation2 + $0x11c] sm:$0xf] %v3092
        %3247 = vst [vmem:[#allocation2 + $0x128] sm:$0xf] %v3102
        %3248 = vst [vmem:[#allocation2 + $0x134] sm:$0xf] %v3112
        %3249 = vst [vmem:[#allocation2 + $0x140] sm:$0xf] %v3122
        %3250 = vst [vmem:[#allocation2 + $0x14c] sm:$0xf] %v3132
        %3251 = vst [vmem:[#allocation2 + $0x158] sm:$0xf] %v3142
        %3252 = vst [vmem:[#allocation2 + $0x164] sm:$0xf] %v3152
        %3253 = vst [vmem:[#allocation2 + $0x170] sm:$0xf] %v3162
        %3254 = vst [vmem:[#allocation2 + $0x17c] sm:$0xf] %v3172
        %3255 = vst [vmem:[#allocation2 + $0x188] sm:$0xf] %v3182
        %3256 = vst [vmem:[#allocation2 + $0x194] sm:$0xf] %v3192
        %v3257 = vld [vmem:[#allocation2] sm:$0xff]
        %v3258 = vld [vmem:[#allocation2 + $0x8] sm:$0xf]
        %v3259 = vld [vmem:[#allocation2 + $0xc] sm:$0xff]
        %v3260 = vld [vmem:[#allocation2 + $0x14] sm:$0xf]
        %v3261 = vld [vmem:[#allocation2 + $0x18] sm:$0xff]
        %v3262 = vld [vmem:[#allocation2 + $0x20] sm:$0xf]
        %v3263 = vld [vmem:[#allocation2 + $0x24] sm:$0xff]
        %v3264 = vld [vmem:[#allocation2 + $0x2c] sm:$0xf]
        %v3265 = vld [vmem:[#allocation2 + $0x30] sm:$0xff]
        %v3266 = vld [vmem:[#allocation2 + $0x38] sm:$0xf]
        %v3267 = vld [vmem:[#allocation2 + $0x3c] sm:$0xff]
        %v3268 = vld [vmem:[#allocation2 + $0x44] sm:$0xf]
        %v3269 = vld [vmem:[#allocation2 + $0x48] sm:$0xff]
        %v3270 = vld [vmem:[#allocation2 + $0x50] sm:$0xf]
        %v3271 = vld [vmem:[#allocation2 + $0x54] sm:$0xff]
        %v3272 = vld [vmem:[#allocation2 + $0x5c] sm:$0xf]
        %v3273 = vld [vmem:[#allocation2 + $0x60] sm:$0xff]
        %v3274 = vld [vmem:[#allocation2 + $0x68] sm:$0xf]
        %v3275 = vld [vmem:[#allocation2 + $0x6c] sm:$0xff]
        %v3276 = vld [vmem:[#allocation2 + $0x74] sm:$0xf]
        %v3277 = vld [vmem:[#allocation2 + $0x78] sm:$0xff]
        %v3278 = vld [vmem:[#allocation2 + $0x80] sm:$0xf]
        %v3279 = vld [vmem:[#allocation2 + $0x84] sm:$0xff]
        %v3280 = vld [vmem:[#allocation2 + $0x8c] sm:$0xf]
        %v3281 = vld [vmem:[#allocation2 + $0x90] sm:$0xff]
        %v3282 = vld [vmem:[#allocation2 + $0x98] sm:$0xf]
        %v3283 = vld [vmem:[#allocation2 + $0x9c] sm:$0xff]
        %v3284 = vld [vmem:[#allocation2 + $0xa4] sm:$0xf]
        %v3285 = vld [vmem:[#allocation2 + $0xa8] sm:$0xff]
        %v3286 = vld [vmem:[#allocation2 + $0xb0] sm:$0xf]
        %v3287 = vld [vmem:[#allocation2 + $0xb4] sm:$0xff]
        %v3288 = vld [vmem:[#allocation2 + $0xbc] sm:$0xf]
        %v3289 = vld [vmem:[#allocation2 + $0xc0] sm:$0xff]
        %v3290 = vld [vmem:[#allocation2 + $0xc8] sm:$0xf]
        %v3291 = vld [vmem:[#allocation2 + $0xcc] sm:$0xff]
        %v3292 = vld [vmem:[#allocation2 + $0xd4] sm:$0xf]
        %v3293 = vld [vmem:[#allocation2 + $0xd8] sm:$0xff]
        %v3294 = vld [vmem:[#allocation2 + $0xe0] sm:$0xf]
        %v3295 = vld [vmem:[#allocation2 + $0xe4] sm:$0xff]
        %v3296 = vld [vmem:[#allocation2 + $0xec] sm:$0xf]
        %v3297 = vld [vmem:[#allocation2 + $0xf0] sm:$0xff]
        %v3298 = vld [vmem:[#allocation2 + $0xf8] sm:$0xf]
        %v3299 = vld [vmem:[#allocation2 + $0xfc] sm:$0xff]
        %v3300 = vld [vmem:[#allocation2 + $0x104] sm:$0xf]
        %v3301 = vld [vmem:[#allocation2 + $0x108] sm:$0xff]
        %v3302 = vld [vmem:[#allocation2 + $0x110] sm:$0xf]
        %v3303 = vld [vmem:[#allocation2 + $0x114] sm:$0xff]
        %v3304 = vld [vmem:[#allocation2 + $0x11c] sm:$0xf]
        %v3305 = vld [vmem:[#allocation2 + $0x120] sm:$0xff]
        %v3306 = vld [vmem:[#allocation2 + $0x128] sm:$0xf]
        %v3307 = vld [vmem:[#allocation2 + $0x12c] sm:$0xff]
        %v3308 = vld [vmem:[#allocation2 + $0x134] sm:$0xf]
        %v3309 = vld [vmem:[#allocation2 + $0x138] sm:$0xff]
        %v3310 = vld [vmem:[#allocation2 + $0x140] sm:$0xf]
        %v3311 = vld [vmem:[#allocation2 + $0x144] sm:$0xff]
        %v3312 = vld [vmem:[#allocation2 + $0x14c] sm:$0xf]
        %v3313 = vld [vmem:[#allocation2 + $0x150] sm:$0xff]
        %v3314 = vld [vmem:[#allocation2 + $0x158] sm:$0xf]
        %v3315 = vld [vmem:[#allocation2 + $0x15c] sm:$0xff]
        %v3316 = vld [vmem:[#allocation2 + $0x164] sm:$0xf]
        %v3317 = vld [vmem:[#allocation2 + $0x168] sm:$0xff]
        %v3318 = vld [vmem:[#allocation2 + $0x170] sm:$0xf]
        %v3319 = vld [vmem:[#allocation2 + $0x174] sm:$0xff]
        %v3320 = vld [vmem:[#allocation2 + $0x17c] sm:$0xf]
        %v3321 = vld [vmem:[#allocation8] sm:$0xf]
        %v3322 = vld [vmem:[#allocation8 + $0x4] sm:$0xf]
        %v3323 = vld [vmem:[#allocation8 + $0x8] sm:$0xf]
        %v3324 = vld [vmem:[#allocation8 + $0xc] sm:$0xf]
        %v3325 = vld [vmem:[#allocation8 + $0x10] sm:$0xf]
        %v3326 = vld [vmem:[#allocation8 + $0x14] sm:$0xf]
        %v3327 = vld [vmem:[#allocation8 + $0x18] sm:$0xf]
        %v3328 = vld [vmem:[#allocation8 + $0x1c] sm:$0xf]
        %v3329 = vld [vmem:[#allocation8 + $0x20] sm:$0xf]
        %v3330 = vld [vmem:[#allocation8 + $0x24] sm:$0xf]
        %v3331 = vld [vmem:[#allocation8 + $0x28] sm:$0xf]
        %v3332 = vld [vmem:[#allocation8 + $0x2c] sm:$0xf]
        %v3333 = vld [vmem:[#allocation8 + $0x30] sm:$0xf]
        %v3334 = vld [vmem:[#allocation8 + $0x34] sm:$0xf]
        %v3335 = vld [vmem:[#allocation8 + $0x38] sm:$0xf]
        %v3336 = vld [vmem:[#allocation8 + $0x3c] sm:$0xf]
        %v3337 = vld [vmem:[#allocation8 + $0x40] sm:$0xf]
        %v3338 = vld [vmem:[#allocation8 + $0x44] sm:$0xf]
        %v3339 = vld [vmem:[#allocation8 + $0x48] sm:$0xf]
        %v3340 = vld [vmem:[#allocation8 + $0x4c] sm:$0xf]
        %v3341 = vld [vmem:[#allocation8 + $0x50] sm:$0xf]
        %v3342 = vld [vmem:[#allocation8 + $0x54] sm:$0xf]
        %v3343 = vld [vmem:[#allocation8 + $0x58] sm:$0xf]
        %v3344 = vld [vmem:[#allocation8 + $0x5c] sm:$0xf]
        %v3345 = vld [vmem:[#allocation8 + $0x60] sm:$0xf]
        %v3346 = vld [vmem:[#allocation8 + $0x64] sm:$0xf]
        %v3347 = vld [vmem:[#allocation8 + $0x68] sm:$0xf]
        %v3348 = vld [vmem:[#allocation8 + $0x6c] sm:$0xf]
        %v3349 = vld [vmem:[#allocation8 + $0x70] sm:$0xf]
        %v3350 = vld [vmem:[#allocation8 + $0x74] sm:$0xf]
        %v3351 = vld [vmem:[#allocation8 + $0x78] sm:$0xf]
        %v3352 = vld [vmem:[#allocation8 + $0x7c] sm:$0xf]
        %v3353 = vld [vmem:[#allocation8 + $0x80] sm:$0xf]
        %v3354 = vld [vmem:[#allocation8 + $0x84] sm:$0xf]
        %v3355 = vld [vmem:[#allocation8 + $0x88] sm:$0xf]
        %v3356 = vld [vmem:[#allocation8 + $0x8c] sm:$0xf]
        %v3357 = vld [vmem:[#allocation8 + $0x90] sm:$0xf]
        %v3358 = vld [vmem:[#allocation8 + $0x94] sm:$0xf]
        %v3359 = vld [vmem:[#allocation8 + $0x98] sm:$0xf]
        %v3360 = vld [vmem:[#allocation8 + $0x9c] sm:$0xf]
        %v3361 = vld [vmem:[#allocation8 + $0xa0] sm:$0xf]
        %v3362 = vld [vmem:[#allocation8 + $0xa4] sm:$0xf]
        %v3363 = vld [vmem:[#allocation8 + $0xa8] sm:$0xf]
        %v3364 = vld [vmem:[#allocation8 + $0xac] sm:$0xf]
        %v3365 = vld [vmem:[#allocation8 + $0xb0] sm:$0xf]
        %v3366 = vld [vmem:[#allocation8 + $0xb4] sm:$0xf]
        %v3367 = vld [vmem:[#allocation8 + $0xb8] sm:$0xf]
        %v3368 = vld [vmem:[#allocation8 + $0xbc] sm:$0xf]
        %v3369 = vld [vmem:[#allocation2 + $0x180] sm:$0xff]
        %v3370 = vld [vmem:[#allocation2 + $0x188] sm:$0xf]
        %v3371 = vld [vmem:[#allocation2 + $0x18c] sm:$0xff]
        %v3372 = vld [vmem:[#allocation2 + $0x194] sm:$0xf]
        %s3373 = scalar_lea.vmem [#allocation8], 192
        %v3374 = vld [vmem:[%s3373] sm:$0xf]
        %v3375 = vld [vmem:[%s3373 + $0x4] sm:$0xf]
        %v3376 = vld [vmem:[%s3373 + $0x8] sm:$0xf]
        %v3377 = vld [vmem:[%s3373 + $0xc] sm:$0xf]
        %v3378 = vld [vmem:[%s3373 + $0x10] sm:$0xf]
        %v3379 = vld [vmem:[%s3373 + $0x14] sm:$0xf]
        %v3380 = vld [vmem:[%s3373 + $0x18] sm:$0xf]
        %v3381 = vld [vmem:[%s3373 + $0x1c] sm:$0xf]
        %v3382 = vld [vmem:[%s3373 + $0x20] sm:$0xf]
        %v3383 = vld [vmem:[%s3373 + $0x24] sm:$0xf]
        %v3384 = vld [vmem:[%s3373 + $0x28] sm:$0xf]
        %v3385 = vld [vmem:[%s3373 + $0x2c] sm:$0xf]
        %v3386 = vld [vmem:[%s3373 + $0x30] sm:$0xf]
        %v3387 = vld [vmem:[%s3373 + $0x34] sm:$0xf]
        %v3388 = vld [vmem:[%s3373 + $0x38] sm:$0xf]
        %v3389 = vld [vmem:[%s3373 + $0x3c] sm:$0xf]
        %v3390 = vld [vmem:[%s3373 + $0x40] sm:$0xf]
        %v3391 = vld [vmem:[%s3373 + $0x44] sm:$0xf]
        %v3392 = vld [vmem:[%s3373 + $0x48] sm:$0xf]
        %v3393 = vld [vmem:[%s3373 + $0x4c] sm:$0xf]
        %v3394 = vld [vmem:[%s3373 + $0x50] sm:$0xf]
        %v3395 = vld [vmem:[%s3373 + $0x54] sm:$0xf]
        %v3396 = vld [vmem:[%s3373 + $0x58] sm:$0xf]
        %v3397 = vld [vmem:[%s3373 + $0x5c] sm:$0xf]
        %v3398 = vld [vmem:[%s3373 + $0x60] sm:$0xf]
        %v3399 = vld [vmem:[%s3373 + $0x64] sm:$0xf]
        %v3400 = vld [vmem:[%s3373 + $0x68] sm:$0xf]
        %v3401 = vld [vmem:[%s3373 + $0x6c] sm:$0xf]
        %v3402 = vld [vmem:[%s3373 + $0x70] sm:$0xf]
        %v3403 = vld [vmem:[%s3373 + $0x74] sm:$0xf]
        %v3404 = vld [vmem:[%s3373 + $0x78] sm:$0xf]
        %v3405 = vld [vmem:[%s3373 + $0x7c] sm:$0xf]
        %v3406 = vld [vmem:[%s3373 + $0x80] sm:$0xf]
        %v3407 = vld [vmem:[%s3373 + $0x84] sm:$0xf]
        %v3408 = vld [vmem:[%s3373 + $0x88] sm:$0xf]
        %v3409 = vld [vmem:[%s3373 + $0x8c] sm:$0xf]
        %v3410 = vld [vmem:[%s3373 + $0x90] sm:$0xf]
        %v3411 = vld [vmem:[%s3373 + $0x94] sm:$0xf]
        %v3412 = vld [vmem:[%s3373 + $0x98] sm:$0xf]
        %v3413 = vld [vmem:[%s3373 + $0x9c] sm:$0xf]
        %v3414 = vld [vmem:[%s3373 + $0xa0] sm:$0xf]
        %v3415 = vld [vmem:[%s3373 + $0xa4] sm:$0xf]
        %v3416 = vld [vmem:[%s3373 + $0xa8] sm:$0xf]
        %v3417 = vld [vmem:[%s3373 + $0xac] sm:$0xf]
        %v3418 = vld [vmem:[%s3373 + $0xb0] sm:$0xf]
        %v3419 = vld [vmem:[%s3373 + $0xb4] sm:$0xf]
        %v3420 = vld [vmem:[%s3373 + $0xb8] sm:$0xf]
        %v3421 = vld [vmem:[%s3373 + $0xbc] sm:$0xf]
        %v3486 = vunpack.c.l.b16 %v3261
        %v3487 = vunpack.c.h.b16 %v3261
        %v3488 = vunpack.c.l.b16 %v3262
        %v3489 = vunpack.c.l.b16 %v3263
        %v3490 = vunpack.c.h.b16 %v3263
        %v3491 = vunpack.c.l.b16 %v3264
        %v3492 = vunpack.c.l.b16 %v3265
        %v3493 = vunpack.c.h.b16 %v3265
        %v3494 = vunpack.c.l.b16 %v3266
        %v3495 = vunpack.c.l.b16 %v3267
        %v3496 = vunpack.c.h.b16 %v3267
        %v3497 = vunpack.c.l.b16 %v3268
        %v3498 = vunpack.c.l.b16 %v3269
        %v3499 = vunpack.c.h.b16 %v3269
        %v3500 = vunpack.c.l.b16 %v3270
        %v3501 = vunpack.c.l.b16 %v3271
        %v3502 = vunpack.c.h.b16 %v3271
        %v3503 = vunpack.c.l.b16 %v3272
        %v3504 = vunpack.c.l.b16 %v3273
        %v3505 = vunpack.c.h.b16 %v3273
        %v3506 = vunpack.c.l.b16 %v3274
        %v3507 = vunpack.c.l.b16 %v3275
        %v3508 = vunpack.c.h.b16 %v3275
        %v3509 = vunpack.c.l.b16 %v3276
        %v3510 = vunpack.c.l.b16 %v3277
        %v3511 = vunpack.c.h.b16 %v3277
        %v3512 = vunpack.c.l.b16 %v3278
        %v3513 = vunpack.c.l.b16 %v3279
        %v3514 = vunpack.c.h.b16 %v3279
        %v3515 = vunpack.c.l.b16 %v3280
        %v3516 = vunpack.c.l.b16 %v3281
        %v3517 = vunpack.c.h.b16 %v3281
        %v3518 = vunpack.c.l.b16 %v3282
        %v3519 = vunpack.c.l.b16 %v3283
        %v3520 = vunpack.c.h.b16 %v3283
        %v3521 = vunpack.c.l.b16 %v3284
        %v3522 = vunpack.c.l.b16 %v3285
        %v3523 = vunpack.c.h.b16 %v3285
        %v3524 = vunpack.c.l.b16 %v3286
        %v3525 = vunpack.c.l.b16 %v3287
        %v3526 = vunpack.c.h.b16 %v3287
        %v3527 = vunpack.c.l.b16 %v3288
        %v3528 = vunpack.c.l.b16 %v3289
        %v3529 = vunpack.c.h.b16 %v3289
        %v3530 = vunpack.c.l.b16 %v3290
        %v3531 = vunpack.c.l.b16 %v3291
        %v3532 = vunpack.c.h.b16 %v3291
        %v3533 = vunpack.c.l.b16 %v3292
        %v3534 = vunpack.c.l.b16 %v3293
        %v3535 = vunpack.c.h.b16 %v3293
        %v3536 = vunpack.c.l.b16 %v3294
        %v3537 = vunpack.c.l.b16 %v3295
        %v3538 = vunpack.c.h.b16 %v3295
        %v3539 = vunpack.c.l.b16 %v3296
        %v3540 = vunpack.c.l.b16 %v3297
        %v3541 = vunpack.c.h.b16 %v3297
        %v3542 = vunpack.c.l.b16 %v3298
        %v3543 = vunpack.c.l.b16 %v3299
        %v3544 = vunpack.c.h.b16 %v3299
        %v3545 = vunpack.c.l.b16 %v3300
        %v3546 = vunpack.c.l.b16 %v3301
        %v3547 = vunpack.c.h.b16 %v3301
        %v3548 = vunpack.c.l.b16 %v3302
        %v3549 = vunpack.c.l.b16 %v3303
        %v3550 = vunpack.c.h.b16 %v3303
        %v3551 = vunpack.c.l.b16 %v3304
        %v3552 = vunpack.c.l.b16 %v3305
        %v3553 = vunpack.c.h.b16 %v3305
        %v3554 = vunpack.c.l.b16 %v3306
        %v3555 = vunpack.c.l.b16 %v3307
        %v3556 = vunpack.c.h.b16 %v3307
        %v3557 = vunpack.c.l.b16 %v3308
        %v3558 = vunpack.c.l.b16 %v3309
        %v3559 = vunpack.c.h.b16 %v3309
        %v3560 = vunpack.c.l.b16 %v3310
        %v3561 = vunpack.c.l.b16 %v3311
        %v3562 = vunpack.c.h.b16 %v3311
        %v3563 = vunpack.c.l.b16 %v3312
        %v3564 = vunpack.c.l.b16 %v3313
        %v3565 = vunpack.c.h.b16 %v3313
        %v3566 = vunpack.c.l.b16 %v3314
        %v3567 = vunpack.c.l.b16 %v3315
        %v3568 = vunpack.c.h.b16 %v3315
        %v3569 = vunpack.c.l.b16 %v3316
        %v3570 = vunpack.c.l.b16 %v3317
        %v3571 = vunpack.c.h.b16 %v3317
        %v3572 = vunpack.c.l.b16 %v3318
        %v3573 = vunpack.c.l.b16 %v3319
        %v3574 = vunpack.c.h.b16 %v3319
        %v3575 = vunpack.c.l.b16 %v3320
        %v3576 = vunpack.c.l.b16 %v3369
        %v3577 = vunpack.c.h.b16 %v3369
        %v3578 = vunpack.c.l.b16 %v3370
        %v3579 = vunpack.c.l.b16 %v3371
        %v3580 = vunpack.c.h.b16 %v3371
        %v3581 = vunpack.c.l.b16 %v3372
        %v3582 = vpack.c.b16 %v3489, %v3486
        %v3583 = vpack.c.b16 %v3490, %v3487
        %v3584 = vpack.c.b16 %v3491, %v3488
        %v3585 = vpack.c.b16 %v3495, %v3492
        %v3586 = vpack.c.b16 %v3496, %v3493
        %v3587 = vpack.c.b16 %v3497, %v3494
        %v3588 = vpack.c.b16 %v3501, %v3498
        %v3589 = vpack.c.b16 %v3502, %v3499
        %v3590 = vpack.c.b16 %v3503, %v3500
        %v3591 = vpack.c.b16 %v3507, %v3504
        %v3592 = vpack.c.b16 %v3508, %v3505
        %v3593 = vpack.c.b16 %v3509, %v3506
        %v3594 = vpack.c.b16 %v3513, %v3510
        %v3595 = vpack.c.b16 %v3514, %v3511
        %v3596 = vpack.c.b16 %v3515, %v3512
        %v3597 = vpack.c.b16 %v3519, %v3516
        %v3598 = vpack.c.b16 %v3520, %v3517
        %v3599 = vpack.c.b16 %v3521, %v3518
        %v3600 = vpack.c.b16 %v3525, %v3522
        %v3601 = vpack.c.b16 %v3526, %v3523
        %v3602 = vpack.c.b16 %v3527, %v3524
        %v3603 = vpack.c.b16 %v3531, %v3528
        %v3604 = vpack.c.b16 %v3532, %v3529
        %v3605 = vpack.c.b16 %v3533, %v3530
        %v3606 = vpack.c.b16 %v3537, %v3534
        %v3607 = vpack.c.b16 %v3538, %v3535
        %v3608 = vpack.c.b16 %v3539, %v3536
        %v3609 = vpack.c.b16 %v3543, %v3540
        %v3610 = vpack.c.b16 %v3544, %v3541
        %v3611 = vpack.c.b16 %v3545, %v3542
        %v3612 = vpack.c.b16 %v3549, %v3546
        %v3613 = vpack.c.b16 %v3550, %v3547
        %v3614 = vpack.c.b16 %v3551, %v3548
        %v3615 = vpack.c.b16 %v3555, %v3552
        %v3616 = vpack.c.b16 %v3556, %v3553
        %v3617 = vpack.c.b16 %v3557, %v3554
        %v3618 = vpack.c.b16 %v3561, %v3558
        %v3619 = vpack.c.b16 %v3562, %v3559
        %v3620 = vpack.c.b16 %v3563, %v3560
        %v3621 = vpack.c.b16 %v3567, %v3564
        %v3622 = vpack.c.b16 %v3568, %v3565
        %v3623 = vpack.c.b16 %v3569, %v3566
        %v3624 = vpack.c.b16 %v3573, %v3570
        %v3625 = vpack.c.b16 %v3574, %v3571
        %v3626 = vpack.c.b16 %v3575, %v3572
        %v3627 = vpack.c.b16 %v3579, %v3576
        %v3628 = vpack.c.b16 %v3580, %v3577
        %v3629 = vpack.c.b16 %v3581, %v3578
        %v3726 = vunpack.c.l.b16 %v3374
        %v3727 = vunpack.c.l.b16 %v3375
        %v3728 = vunpack.c.l.b16 %v3376
        %v3729 = vunpack.c.l.b16 %v3377
        %v3730 = vunpack.c.l.b16 %v3378
        %v3731 = vunpack.c.l.b16 %v3379
        %v3732 = vunpack.c.l.b16 %v3380
        %v3733 = vunpack.c.l.b16 %v3381
        %v3734 = vunpack.c.l.b16 %v3382
        %v3735 = vunpack.c.l.b16 %v3383
        %v3736 = vunpack.c.l.b16 %v3384
        %v3737 = vunpack.c.l.b16 %v3385
        %v3738 = vunpack.c.l.b16 %v3386
        %v3739 = vunpack.c.l.b16 %v3387
        %v3740 = vunpack.c.l.b16 %v3388
        %v3741 = vunpack.c.l.b16 %v3389
        %v3742 = vunpack.c.l.b16 %v3390
        %v3743 = vunpack.c.l.b16 %v3391
        %v3744 = vunpack.c.l.b16 %v3392
        %v3745 = vunpack.c.l.b16 %v3393
        %v3746 = vunpack.c.l.b16 %v3394
        %v3747 = vunpack.c.l.b16 %v3395
        %v3748 = vunpack.c.l.b16 %v3396
        %v3749 = vunpack.c.l.b16 %v3397
        %v3750 = vunpack.c.l.b16 %v3398
        %v3751 = vunpack.c.l.b16 %v3399
        %v3752 = vunpack.c.l.b16 %v3400
        %v3753 = vunpack.c.l.b16 %v3401
        %v3754 = vunpack.c.l.b16 %v3402
        %v3755 = vunpack.c.l.b16 %v3403
        %v3756 = vunpack.c.l.b16 %v3404
        %v3757 = vunpack.c.l.b16 %v3405
        %v3758 = vunpack.c.l.b16 %v3406
        %v3759 = vunpack.c.l.b16 %v3407
        %v3760 = vunpack.c.l.b16 %v3408
        %v3761 = vunpack.c.l.b16 %v3409
        %v3762 = vunpack.c.l.b16 %v3410
        %v3763 = vunpack.c.l.b16 %v3411
        %v3764 = vunpack.c.l.b16 %v3412
        %v3765 = vunpack.c.l.b16 %v3413
        %v3766 = vunpack.c.l.b16 %v3414
        %v3767 = vunpack.c.l.b16 %v3415
        %v3768 = vunpack.c.l.b16 %v3416
        %v3769 = vunpack.c.l.b16 %v3417
        %v3770 = vunpack.c.l.b16 %v3418
        %v3771 = vunpack.c.l.b16 %v3419
        %v3772 = vunpack.c.l.b16 %v3420
        %v3773 = vunpack.c.l.b16 %v3421
        %v3774 = vpack.c.b16 %v3727, %v3726
        %v3775 = vpack.c.b16 %v3729, %v3728
        %v3776 = vpack.c.b16 %v3731, %v3730
        %v3777 = vpack.c.b16 %v3733, %v3732
        %v3778 = vpack.c.b16 %v3735, %v3734
        %v3779 = vpack.c.b16 %v3737, %v3736
        %v3780 = vpack.c.b16 %v3739, %v3738
        %v3781 = vpack.c.b16 %v3741, %v3740
        %v3782 = vpack.c.b16 %v3743, %v3742
        %v3783 = vpack.c.b16 %v3745, %v3744
        %v3784 = vpack.c.b16 %v3747, %v3746
        %v3785 = vpack.c.b16 %v3749, %v3748
        %v3786 = vpack.c.b16 %v3751, %v3750
        %v3787 = vpack.c.b16 %v3753, %v3752
        %v3788 = vpack.c.b16 %v3755, %v3754
        %v3789 = vpack.c.b16 %v3757, %v3756
        %v3790 = vpack.c.b16 %v3759, %v3758
        %v3791 = vpack.c.b16 %v3761, %v3760
        %v3792 = vpack.c.b16 %v3763, %v3762
        %v3793 = vpack.c.b16 %v3765, %v3764
        %v3794 = vpack.c.b16 %v3767, %v3766
        %v3795 = vpack.c.b16 %v3769, %v3768
        %v3796 = vpack.c.b16 %v3771, %v3770
        %v3797 = vpack.c.b16 %v3773, %v3772
        %3822 = vmatprep.subr.bf16.mxu0 0
        %3823 = vmatpush1.bf16.msra.mxu0 %v3781
        %3824 = vmatprep.subr.bf16.mxu0 0
        %3825 = vmatpush1.bf16.msra.mxu0 %v3780
        %3826 = vmatprep.subr.bf16.mxu0 0
        %3827 = vmatpush1.bf16.msra.mxu0 %v3779
        %3828 = vmatprep.subr.bf16.mxu0 0
        %3829 = vmatpush1.bf16.msra.mxu0 %v3778
        %3830 = vmatprep.subr.bf16.mxu0 0
        %3831 = vmatpush1.bf16.msra.mxu0 %v3777
        %3832 = vmatprep.subr.bf16.mxu0 0
        %3833 = vmatpush1.bf16.msra.mxu0 %v3776
        %3834 = vmatprep.subr.bf16.mxu0 0
        %3835 = vmatpush1.bf16.msra.mxu0 %v3775
        %3836 = vmatprep.subr.bf16.mxu0 0
        %3837 = vmatpush1.bf16.msra.mxu0 %v3774
        %3838 = vmatprep.subr.bf16.mxu0 0
        %3839 = vmatpush2.bf16.msra.mxu0 %v3789
        %3840 = vmatprep.subr.bf16.mxu0 0
        %3841 = vmatpush2.bf16.msra.mxu0 %v3788
        %3842 = vmatprep.subr.bf16.mxu0 0
        %3843 = vmatpush2.bf16.msra.mxu0 %v3787
        %3844 = vmatprep.subr.bf16.mxu0 0
        %3845 = vmatpush2.bf16.msra.mxu0 %v3786
        %3846 = vmatprep.subr.bf16.mxu0 0
        %3847 = vmatpush2.bf16.msra.mxu0 %v3785
        %3848 = vmatprep.subr.bf16.mxu0 0
        %3849 = vmatpush2.bf16.msra.mxu0 %v3784
        %3850 = vmatprep.subr.bf16.mxu0 0
        %3851 = vmatpush2.bf16.msra.mxu0 %v3783
        %3852 = vmatprep.subr.bf16.mxu0 0
        %3853 = vmatpush2.bf16.msra.mxu0 %v3782
        %3854 = vmatprep.mubr.bf16.mxu0 %v3583
        %3855 = vmatmul.mubr.bf16.gmra.mxu0 %v3582
        %v3856 = vpop.f32.mrf.mxu0
        %v3857 = vadd.f32 0.0, %v3856
        %v3858 = vpop.f32.mrf.mxu0
        %v3859 = vpop.f32.mrf.mxu0
        %v3860 = vadd.f32 0.0, %v3859
        %v3861 = vpop.f32.mrf.mxu0
        %3862 = vmatprep.mubr.bf16.mxu0 %v3586
        %3863 = vmatmul.mubr.bf16.gmra.mxu0 %v3585
        %v3864 = vpop.f32.mrf.mxu0
        %v3865 = vadd.f32 0.0, %v3864
        %v3866 = vpop.f32.mrf.mxu0
        %v3867 = vpop.f32.mrf.mxu0
        %v3868 = vadd.f32 0.0, %v3867
        %v3869 = vpop.f32.mrf.mxu0
        %3870 = vmatprep.mubr.bf16.mxu0 %v3589
        %3871 = vmatmul.mubr.bf16.gmra.mxu0 %v3588
        %v3872 = vpop.f32.mrf.mxu0
        %v3873 = vadd.f32 0.0, %v3872
        %v3874 = vpop.f32.mrf.mxu0
        %v3875 = vpop.f32.mrf.mxu0
        %v3876 = vadd.f32 0.0, %v3875
        %v3877 = vpop.f32.mrf.mxu0
        %3878 = vmatprep.mubr.bf16.mxu0 %v3592
        %3879 = vmatmul.mubr.bf16.gmra.mxu0 %v3591
        %v3880 = vpop.f32.mrf.mxu0
        %v3881 = vadd.f32 0.0, %v3880
        %v3882 = vpop.f32.mrf.mxu0
        %v3883 = vpop.f32.mrf.mxu0
        %v3884 = vadd.f32 0.0, %v3883
        %v3885 = vpop.f32.mrf.mxu0
        %3886 = vmatprep.mubr.bf16.mxu0 %v3595
        %3887 = vmatmul.mubr.bf16.gmra.mxu0 %v3594
        %v3888 = vpop.f32.mrf.mxu0
        %v3889 = vadd.f32 0.0, %v3888
        %v3890 = vpop.f32.mrf.mxu0
        %v3891 = vpop.f32.mrf.mxu0
        %v3892 = vadd.f32 0.0, %v3891
        %v3893 = vpop.f32.mrf.mxu0
        %3894 = vmatprep.mubr.bf16.mxu0 %v3598
        %3895 = vmatmul.mubr.bf16.gmra.mxu0 %v3597
        %v3896 = vpop.f32.mrf.mxu0
        %v3897 = vadd.f32 0.0, %v3896
        %v3898 = vpop.f32.mrf.mxu0
        %v3899 = vpop.f32.mrf.mxu0
        %v3900 = vadd.f32 0.0, %v3899
        %v3901 = vpop.f32.mrf.mxu0
        %3902 = vmatprep.mubr.bf16.mxu0 %v3601
        %3903 = vmatmul.mubr.bf16.gmra.mxu0 %v3600
        %v3904 = vpop.f32.mrf.mxu0
        %v3905 = vadd.f32 0.0, %v3904
        %v3906 = vpop.f32.mrf.mxu0
        %v3907 = vpop.f32.mrf.mxu0
        %v3908 = vadd.f32 0.0, %v3907
        %v3909 = vpop.f32.mrf.mxu0
        %3910 = vmatprep.mubr.bf16.mxu0 %v3604
        %3911 = vmatmul.mubr.bf16.gmra.mxu0 %v3603
        %v3912 = vpop.f32.mrf.mxu0
        %v3913 = vadd.f32 0.0, %v3912
        %v3914 = vpop.f32.mrf.mxu0
        %v3915 = vpop.f32.mrf.mxu0
        %v3916 = vadd.f32 0.0, %v3915
        %v3917 = vpop.f32.mrf.mxu0
        %3918 = vmatprep.mubr.bf16.mxu0 %v3607
        %3919 = vmatmul.mubr.bf16.gmra.mxu0 %v3606
        %v3920 = vpop.f32.mrf.mxu0
        %v3921 = vadd.f32 0.0, %v3920
        %v3922 = vpop.f32.mrf.mxu0
        %v3923 = vpop.f32.mrf.mxu0
        %v3924 = vadd.f32 0.0, %v3923
        %v3925 = vpop.f32.mrf.mxu0
        %3926 = vmatprep.mubr.bf16.mxu0 %v3610
        %3927 = vmatmul.mubr.bf16.gmra.mxu0 %v3609
        %v3928 = vpop.f32.mrf.mxu0
        %v3929 = vadd.f32 0.0, %v3928
        %v3930 = vpop.f32.mrf.mxu0
        %v3931 = vpop.f32.mrf.mxu0
        %v3932 = vadd.f32 0.0, %v3931
        %v3933 = vpop.f32.mrf.mxu0
        %3934 = vmatprep.mubr.bf16.mxu0 %v3613
        %3935 = vmatmul.mubr.bf16.gmra.mxu0 %v3612
        %v3936 = vpop.f32.mrf.mxu0
        %v3937 = vadd.f32 0.0, %v3936
        %v3938 = vpop.f32.mrf.mxu0
        %v3939 = vpop.f32.mrf.mxu0
        %v3940 = vadd.f32 0.0, %v3939
        %v3941 = vpop.f32.mrf.mxu0
        %3942 = vmatprep.mubr.bf16.mxu0 %v3616
        %3943 = vmatmul.mubr.bf16.gmra.mxu0 %v3615
        %v3944 = vpop.f32.mrf.mxu0
        %v3945 = vadd.f32 0.0, %v3944
        %v3946 = vpop.f32.mrf.mxu0
        %v3947 = vpop.f32.mrf.mxu0
        %v3948 = vadd.f32 0.0, %v3947
        %v3949 = vpop.f32.mrf.mxu0
        %3950 = vmatprep.mubr.bf16.mxu0 %v3619
        %3951 = vmatmul.mubr.bf16.gmra.mxu0 %v3618
        %v3952 = vpop.f32.mrf.mxu0
        %v3953 = vadd.f32 0.0, %v3952
        %v3954 = vpop.f32.mrf.mxu0
        %v3955 = vpop.f32.mrf.mxu0
        %v3956 = vadd.f32 0.0, %v3955
        %v3957 = vpop.f32.mrf.mxu0
        %3958 = vmatprep.mubr.bf16.mxu0 %v3622
        %3959 = vmatmul.mubr.bf16.gmra.mxu0 %v3621
        %v3960 = vpop.f32.mrf.mxu0
        %v3961 = vadd.f32 0.0, %v3960
        %v3962 = vpop.f32.mrf.mxu0
        %v3963 = vpop.f32.mrf.mxu0
        %v3964 = vadd.f32 0.0, %v3963
        %v3965 = vpop.f32.mrf.mxu0
        %3966 = vmatprep.mubr.bf16.mxu0 %v3625
        %3967 = vmatmul.mubr.bf16.gmra.mxu0 %v3624
        %v3968 = vpop.f32.mrf.mxu0
        %v3969 = vadd.f32 0.0, %v3968
        %v3970 = vpop.f32.mrf.mxu0
        %v3971 = vpop.f32.mrf.mxu0
        %v3972 = vadd.f32 0.0, %v3971
        %v3973 = vpop.f32.mrf.mxu0
        %3974 = vmatprep.mubr.bf16.mxu0 %v3628
        %3975 = vmatmul.mubr.bf16.gmra.mxu0 %v3627
        %v3976 = vpop.f32.mrf.mxu0
        %v3977 = vadd.f32 0.0, %v3976
        %v3978 = vpop.f32.mrf.mxu0
        %v3979 = vpop.f32.mrf.mxu0
        %v3980 = vadd.f32 0.0, %v3979
        %v3981 = vpop.f32.mrf.mxu0
        %3982 = vdwg.mxu0
        %3983 = vmatprep.subr.bf16.mxu0 0
        %3984 = vmatpush1.bf16.msra.mxu0 %v3797
        %3985 = vmatprep.subr.bf16.mxu0 0
        %3986 = vmatpush1.bf16.msra.mxu0 %v3796
        %3987 = vmatprep.subr.bf16.mxu0 0
        %3988 = vmatpush1.bf16.msra.mxu0 %v3795
        %3989 = vmatprep.subr.bf16.mxu0 0
        %3990 = vmatpush1.bf16.msra.mxu0 %v3794
        %3991 = vmatprep.subr.bf16.mxu0 0
        %3992 = vmatpush1.bf16.msra.mxu0 %v3793
        %3993 = vmatprep.subr.bf16.mxu0 0
        %3994 = vmatpush1.bf16.msra.mxu0 %v3792
        %3995 = vmatprep.subr.bf16.mxu0 0
        %3996 = vmatpush1.bf16.msra.mxu0 %v3791
        %3997 = vmatprep.subr.bf16.mxu0 0
        %3998 = vmatpush1.bf16.msra.mxu0 %v3790
        %3999 = vmatprep.subr.bf16.mxu0 0
        %4000 = vmatpush2.bf16.msra.mxu0 0
        %4001 = vmatprep.subr.bf16.mxu0 0
        %4002 = vmatpush2.bf16.msra.mxu0 0
        %4003 = vmatprep.subr.bf16.mxu0 0
        %4004 = vmatpush2.bf16.msra.mxu0 0
        %4005 = vmatprep.subr.bf16.mxu0 0
        %4006 = vmatpush2.bf16.msra.mxu0 0
        %4007 = vmatprep.subr.bf16.mxu0 0
        %4008 = vmatpush2.bf16.msra.mxu0 0
        %4009 = vmatprep.subr.bf16.mxu0 0
        %4010 = vmatpush2.bf16.msra.mxu0 0
        %4011 = vmatprep.subr.bf16.mxu0 0
        %4012 = vmatpush2.bf16.msra.mxu0 0
        %4013 = vmatprep.subr.bf16.mxu0 0
        %4014 = vmatpush2.bf16.msra.mxu0 0
        %4015 = vmatprep.mubr.bf16.mxu0 0
        %4016 = vmatmul.mubr.bf16.gmra.mxu0 %v3584
        %v4017 = vpop.f32.mrf.mxu0
        %v4018 = vadd.f32 %v3857, %v4017
        %v4019 = vpop.f32.mrf.mxu0
        %v4020 = vpop.f32.mrf.mxu0
        %v4021 = vadd.f32 %v3860, %v4020
        %v4022 = vpop.f32.mrf.mxu0
        %4023 = vmatprep.mubr.bf16.mxu0 0
        %4024 = vmatmul.mubr.bf16.gmra.mxu0 %v3587
        %v4025 = vpop.f32.mrf.mxu0
        %v4026 = vadd.f32 %v3865, %v4025
        %v4027 = vpop.f32.mrf.mxu0
        %v4028 = vpop.f32.mrf.mxu0
        %v4029 = vadd.f32 %v3868, %v4028
        %v4030 = vpop.f32.mrf.mxu0
        %4031 = vmatprep.mubr.bf16.mxu0 0
        %4032 = vmatmul.mubr.bf16.gmra.mxu0 %v3590
        %v4033 = vpop.f32.mrf.mxu0
        %v4034 = vadd.f32 %v3873, %v4033
        %v4035 = vpop.f32.mrf.mxu0
        %v4036 = vpop.f32.mrf.mxu0
        %v4037 = vadd.f32 %v3876, %v4036
        %v4038 = vpop.f32.mrf.mxu0
        %4039 = vmatprep.mubr.bf16.mxu0 0
        %4040 = vmatmul.mubr.bf16.gmra.mxu0 %v3593
        %v4041 = vpop.f32.mrf.mxu0
        %v4042 = vadd.f32 %v3881, %v4041
        %v4043 = vpop.f32.mrf.mxu0
        %v4044 = vpop.f32.mrf.mxu0
        %v4045 = vadd.f32 %v3884, %v4044
        %v4046 = vpop.f32.mrf.mxu0
        %4047 = vmatprep.mubr.bf16.mxu0 0
        %4048 = vmatmul.mubr.bf16.gmra.mxu0 %v3596
        %v4049 = vpop.f32.mrf.mxu0
        %v4050 = vadd.f32 %v3889, %v4049
        %v4051 = vpop.f32.mrf.mxu0
        %v4052 = vpop.f32.mrf.mxu0
        %v4053 = vadd.f32 %v3892, %v4052
        %v4054 = vpop.f32.mrf.mxu0
        %4055 = vmatprep.mubr.bf16.mxu0 0
        %4056 = vmatmul.mubr.bf16.gmra.mxu0 %v3599
        %v4057 = vpop.f32.mrf.mxu0
        %v4058 = vadd.f32 %v3897, %v4057
        %v4059 = vpop.f32.mrf.mxu0
        %v4060 = vpop.f32.mrf.mxu0
        %v4061 = vadd.f32 %v3900, %v4060
        %v4062 = vpop.f32.mrf.mxu0
        %4063 = vmatprep.mubr.bf16.mxu0 0
        %4064 = vmatmul.mubr.bf16.gmra.mxu0 %v3602
        %v4065 = vpop.f32.mrf.mxu0
        %v4066 = vadd.f32 %v3905, %v4065
        %v4067 = vpop.f32.mrf.mxu0
        %v4068 = vpop.f32.mrf.mxu0
        %v4069 = vadd.f32 %v3908, %v4068
        %v4070 = vpop.f32.mrf.mxu0
        %4071 = vmatprep.mubr.bf16.mxu0 0
        %4072 = vmatmul.mubr.bf16.gmra.mxu0 %v3605
        %v4073 = vpop.f32.mrf.mxu0
        %v4074 = vadd.f32 %v3913, %v4073
        %v4075 = vpop.f32.mrf.mxu0
        %v4076 = vpop.f32.mrf.mxu0
        %v4077 = vadd.f32 %v3916, %v4076
        %v4078 = vpop.f32.mrf.mxu0
        %4079 = vmatprep.mubr.bf16.mxu0 0
        %4080 = vmatmul.mubr.bf16.gmra.mxu0 %v3608
        %v4081 = vpop.f32.mrf.mxu0
        %v4082 = vadd.f32 %v3921, %v4081
        %v4083 = vpop.f32.mrf.mxu0
        %v4084 = vpop.f32.mrf.mxu0
        %v4085 = vadd.f32 %v3924, %v4084
        %v4086 = vpop.f32.mrf.mxu0
        %4087 = vmatprep.mubr.bf16.mxu0 0
        %4088 = vmatmul.mubr.bf16.gmra.mxu0 %v3611
        %v4089 = vpop.f32.mrf.mxu0
        %v4090 = vadd.f32 %v3929, %v4089
        %v4091 = vpop.f32.mrf.mxu0
        %v4092 = vpop.f32.mrf.mxu0
        %v4093 = vadd.f32 %v3932, %v4092
        %v4094 = vpop.f32.mrf.mxu0
        %4095 = vmatprep.mubr.bf16.mxu0 0
        %4096 = vmatmul.mubr.bf16.gmra.mxu0 %v3614
        %v4097 = vpop.f32.mrf.mxu0
        %v4098 = vadd.f32 %v3937, %v4097
        %v4099 = vpop.f32.mrf.mxu0
        %v4100 = vpop.f32.mrf.mxu0
        %v4101 = vadd.f32 %v3940, %v4100
        %v4102 = vpop.f32.mrf.mxu0
        %4103 = vmatprep.mubr.bf16.mxu0 0
        %4104 = vmatmul.mubr.bf16.gmra.mxu0 %v3617
        %v4105 = vpop.f32.mrf.mxu0
        %v4106 = vadd.f32 %v3945, %v4105
        %v4107 = vpop.f32.mrf.mxu0
        %v4108 = vpop.f32.mrf.mxu0
        %v4109 = vadd.f32 %v3948, %v4108
        %v4110 = vpop.f32.mrf.mxu0
        %4111 = vmatprep.mubr.bf16.mxu0 0
        %4112 = vmatmul.mubr.bf16.gmra.mxu0 %v3620
        %v4113 = vpop.f32.mrf.mxu0
        %v4114 = vadd.f32 %v3953, %v4113
        %v4115 = vpop.f32.mrf.mxu0
        %v4116 = vpop.f32.mrf.mxu0
        %v4117 = vadd.f32 %v3956, %v4116
        %v4118 = vpop.f32.mrf.mxu0
        %4119 = vmatprep.mubr.bf16.mxu0 0
        %4120 = vmatmul.mubr.bf16.gmra.mxu0 %v3623
        %v4121 = vpop.f32.mrf.mxu0
        %v4122 = vadd.f32 %v3961, %v4121
        %v4123 = vpop.f32.mrf.mxu0
        %v4124 = vpop.f32.mrf.mxu0
        %v4125 = vadd.f32 %v3964, %v4124
        %v4126 = vpop.f32.mrf.mxu0
        %4127 = vmatprep.mubr.bf16.mxu0 0
        %4128 = vmatmul.mubr.bf16.gmra.mxu0 %v3626
        %v4129 = vpop.f32.mrf.mxu0
        %v4130 = vadd.f32 %v3969, %v4129
        %v4131 = vpop.f32.mrf.mxu0
        %v4132 = vpop.f32.mrf.mxu0
        %v4133 = vadd.f32 %v3972, %v4132
        %v4134 = vpop.f32.mrf.mxu0
        %4135 = vmatprep.mubr.bf16.mxu0 0
        %4136 = vmatmul.mubr.bf16.gmra.mxu0 %v3629
        %v4137 = vpop.f32.mrf.mxu0
        %v4138 = vadd.f32 %v3977, %v4137
        %v4139 = vpop.f32.mrf.mxu0
        %v4140 = vpop.f32.mrf.mxu0
        %v4141 = vadd.f32 %v3980, %v4140
        %v4142 = vpop.f32.mrf.mxu0
        %4143 = vdwg.mxu0
        %v4148 = vunpack.c.l.b16 %v3257
        %v4149 = vunpack.c.h.b16 %v3257
        %v4150 = vunpack.c.l.b16 %v3258
        %v4151 = vunpack.c.l.b16 %v3259
        %v4152 = vunpack.c.h.b16 %v3259
        %v4153 = vunpack.c.l.b16 %v3260
        %v4154 = vpack.c.b16 %v4151, %v4148
        %v4155 = vpack.c.b16 %v4152, %v4149
        %v4156 = vpack.c.b16 %v4153, %v4150
        %v4208 = vunpack.c.l.b16 %v3321
        %v4209 = vunpack.c.l.b16 %v3322
        %v4210 = vunpack.c.l.b16 %v3323
        %v4211 = vunpack.c.l.b16 %v3324
        %v4212 = vunpack.c.l.b16 %v3325
        %v4213 = vunpack.c.l.b16 %v3326
        %v4214 = vunpack.c.l.b16 %v3327
        %v4215 = vunpack.c.l.b16 %v3328
        %v4216 = vunpack.c.l.b16 %v3329
        %v4217 = vunpack.c.l.b16 %v3330
        %v4218 = vunpack.c.l.b16 %v3331
        %v4219 = vunpack.c.l.b16 %v3332
        %v4220 = vunpack.c.l.b16 %v3333
        %v4221 = vunpack.c.l.b16 %v3334
        %v4222 = vunpack.c.l.b16 %v3335
        %v4223 = vunpack.c.l.b16 %v3336
        %v4224 = vunpack.c.l.b16 %v3337
        %v4225 = vunpack.c.l.b16 %v3338
        %v4226 = vunpack.c.l.b16 %v3339
        %v4227 = vunpack.c.l.b16 %v3340
        %v4228 = vunpack.c.l.b16 %v3341
        %v4229 = vunpack.c.l.b16 %v3342
        %v4230 = vunpack.c.l.b16 %v3343
        %v4231 = vunpack.c.l.b16 %v3344
        %v4232 = vunpack.c.l.b16 %v3345
        %v4233 = vunpack.c.l.b16 %v3346
        %v4234 = vunpack.c.l.b16 %v3347
        %v4235 = vunpack.c.l.b16 %v3348
        %v4236 = vunpack.c.l.b16 %v3349
        %v4237 = vunpack.c.l.b16 %v3350
        %v4238 = vunpack.c.l.b16 %v3351
        %v4239 = vunpack.c.l.b16 %v3352
        %v4240 = vunpack.c.l.b16 %v3353
        %v4241 = vunpack.c.l.b16 %v3354
        %v4242 = vunpack.c.l.b16 %v3355
        %v4243 = vunpack.c.l.b16 %v3356
        %v4244 = vunpack.c.l.b16 %v3357
        %v4245 = vunpack.c.l.b16 %v3358
        %v4246 = vunpack.c.l.b16 %v3359
        %v4247 = vunpack.c.l.b16 %v3360
        %v4248 = vunpack.c.l.b16 %v3361
        %v4249 = vunpack.c.l.b16 %v3362
        %v4250 = vunpack.c.l.b16 %v3363
        %v4251 = vunpack.c.l.b16 %v3364
        %v4252 = vunpack.c.l.b16 %v3365
        %v4253 = vunpack.c.l.b16 %v3366
        %v4254 = vunpack.c.l.b16 %v3367
        %v4255 = vunpack.c.l.b16 %v3368
        %v4256 = vpack.c.b16 %v4209, %v4208
        %v4257 = vpack.c.b16 %v4211, %v4210
        %v4258 = vpack.c.b16 %v4213, %v4212
        %v4259 = vpack.c.b16 %v4215, %v4214
        %v4260 = vpack.c.b16 %v4217, %v4216
        %v4261 = vpack.c.b16 %v4219, %v4218
        %v4262 = vpack.c.b16 %v4221, %v4220
        %v4263 = vpack.c.b16 %v4223, %v4222
        %v4264 = vpack.c.b16 %v4225, %v4224
        %v4265 = vpack.c.b16 %v4227, %v4226
        %v4266 = vpack.c.b16 %v4229, %v4228
        %v4267 = vpack.c.b16 %v4231, %v4230
        %v4268 = vpack.c.b16 %v4233, %v4232
        %v4269 = vpack.c.b16 %v4235, %v4234
        %v4270 = vpack.c.b16 %v4237, %v4236
        %v4271 = vpack.c.b16 %v4239, %v4238
        %v4272 = vpack.c.b16 %v4241, %v4240
        %v4273 = vpack.c.b16 %v4243, %v4242
        %v4274 = vpack.c.b16 %v4245, %v4244
        %v4275 = vpack.c.b16 %v4247, %v4246
        %v4276 = vpack.c.b16 %v4249, %v4248
        %v4277 = vpack.c.b16 %v4251, %v4250
        %v4278 = vpack.c.b16 %v4253, %v4252
        %v4279 = vpack.c.b16 %v4255, %v4254
        %4304 = vmatprep.subr.bf16.mxu0 0
        %4305 = vmatpush1.bf16.msra.mxu0 %v4263
        %4306 = vmatprep.subr.bf16.mxu0 0
        %4307 = vmatpush1.bf16.msra.mxu0 %v4262
        %4308 = vmatprep.subr.bf16.mxu0 0
        %4309 = vmatpush1.bf16.msra.mxu0 %v4261
        %4310 = vmatprep.subr.bf16.mxu0 0
        %4311 = vmatpush1.bf16.msra.mxu0 %v4260
        %4312 = vmatprep.subr.bf16.mxu0 0
        %4313 = vmatpush1.bf16.msra.mxu0 %v4259
        %4314 = vmatprep.subr.bf16.mxu0 0
        %4315 = vmatpush1.bf16.msra.mxu0 %v4258
        %4316 = vmatprep.subr.bf16.mxu0 0
        %4317 = vmatpush1.bf16.msra.mxu0 %v4257
        %4318 = vmatprep.subr.bf16.mxu0 0
        %4319 = vmatpush1.bf16.msra.mxu0 %v4256
        %4320 = vmatprep.subr.bf16.mxu0 0
        %4321 = vmatpush2.bf16.msra.mxu0 %v4271
        %4322 = vmatprep.subr.bf16.mxu0 0
        %4323 = vmatpush2.bf16.msra.mxu0 %v4270
        %4324 = vmatprep.subr.bf16.mxu0 0
        %4325 = vmatpush2.bf16.msra.mxu0 %v4269
        %4326 = vmatprep.subr.bf16.mxu0 0
        %4327 = vmatpush2.bf16.msra.mxu0 %v4268
        %4328 = vmatprep.subr.bf16.mxu0 0
        %4329 = vmatpush2.bf16.msra.mxu0 %v4267
        %4330 = vmatprep.subr.bf16.mxu0 0
        %4331 = vmatpush2.bf16.msra.mxu0 %v4266
        %4332 = vmatprep.subr.bf16.mxu0 0
        %4333 = vmatpush2.bf16.msra.mxu0 %v4265
        %4334 = vmatprep.subr.bf16.mxu0 0
        %4335 = vmatpush2.bf16.msra.mxu0 %v4264
        %4336 = vmatprep.mubr.bf16.mxu0 %v4155
        %4337 = vmatmul.mubr.bf16.gmra.mxu0 %v4154
        %v4338 = vpop.f32.mrf.mxu0
        %v4339 = vadd.f32 %v4018, %v4338
        %v4340 = vpop.f32.mrf.mxu0
        %v4341 = vpop.f32.mrf.mxu0
        %v4342 = vadd.f32 %v4021, %v4341
        %v4343 = vpop.f32.mrf.mxu0
        %4344 = vmatprep.mubr.bf16.mxu0 %v3583
        %4345 = vmatmul.mubr.bf16.gmra.mxu0 %v3582
        %v4346 = vpop.f32.mrf.mxu0
        %v4347 = vadd.f32 %v4026, %v4346
        %v4348 = vpop.f32.mrf.mxu0
        %v4349 = vpop.f32.mrf.mxu0
        %v4350 = vadd.f32 %v4029, %v4349
        %v4351 = vpop.f32.mrf.mxu0
        %4352 = vmatprep.mubr.bf16.mxu0 %v3586
        %4353 = vmatmul.mubr.bf16.gmra.mxu0 %v3585
        %v4354 = vpop.f32.mrf.mxu0
        %v4355 = vadd.f32 %v4034, %v4354
        %v4356 = vpop.f32.mrf.mxu0
        %v4357 = vpop.f32.mrf.mxu0
        %v4358 = vadd.f32 %v4037, %v4357
        %v4359 = vpop.f32.mrf.mxu0
        %4360 = vmatprep.mubr.bf16.mxu0 %v3589
        %4361 = vmatmul.mubr.bf16.gmra.mxu0 %v3588
        %v4362 = vpop.f32.mrf.mxu0
        %v4363 = vadd.f32 %v4042, %v4362
        %v4364 = vpop.f32.mrf.mxu0
        %v4365 = vpop.f32.mrf.mxu0
        %v4366 = vadd.f32 %v4045, %v4365
        %v4367 = vpop.f32.mrf.mxu0
        %4368 = vmatprep.mubr.bf16.mxu0 %v3592
        %4369 = vmatmul.mubr.bf16.gmra.mxu0 %v3591
        %v4370 = vpop.f32.mrf.mxu0
        %v4371 = vadd.f32 %v4050, %v4370
        %v4372 = vpop.f32.mrf.mxu0
        %v4373 = vpop.f32.mrf.mxu0
        %v4374 = vadd.f32 %v4053, %v4373
        %v4375 = vpop.f32.mrf.mxu0
        %4376 = vmatprep.mubr.bf16.mxu0 %v3595
        %4377 = vmatmul.mubr.bf16.gmra.mxu0 %v3594
        %v4378 = vpop.f32.mrf.mxu0
        %v4379 = vadd.f32 %v4058, %v4378
        %v4380 = vpop.f32.mrf.mxu0
        %v4381 = vpop.f32.mrf.mxu0
        %v4382 = vadd.f32 %v4061, %v4381
        %v4383 = vpop.f32.mrf.mxu0
        %4384 = vmatprep.mubr.bf16.mxu0 %v3598
        %4385 = vmatmul.mubr.bf16.gmra.mxu0 %v3597
        %v4386 = vpop.f32.mrf.mxu0
        %v4387 = vadd.f32 %v4066, %v4386
        %v4388 = vpop.f32.mrf.mxu0
        %v4389 = vpop.f32.mrf.mxu0
        %v4390 = vadd.f32 %v4069, %v4389
        %v4391 = vpop.f32.mrf.mxu0
        %4392 = vmatprep.mubr.bf16.mxu0 %v3601
        %4393 = vmatmul.mubr.bf16.gmra.mxu0 %v3600
        %v4394 = vpop.f32.mrf.mxu0
        %v4395 = vadd.f32 %v4074, %v4394
        %v4396 = vpop.f32.mrf.mxu0
        %v4397 = vpop.f32.mrf.mxu0
        %v4398 = vadd.f32 %v4077, %v4397
        %v4399 = vpop.f32.mrf.mxu0
        %4400 = vmatprep.mubr.bf16.mxu0 %v3604
        %4401 = vmatmul.mubr.bf16.gmra.mxu0 %v3603
        %v4402 = vpop.f32.mrf.mxu0
        %v4403 = vadd.f32 %v4082, %v4402
        %v4404 = vpop.f32.mrf.mxu0
        %v4405 = vpop.f32.mrf.mxu0
        %v4406 = vadd.f32 %v4085, %v4405
        %v4407 = vpop.f32.mrf.mxu0
        %4408 = vmatprep.mubr.bf16.mxu0 %v3607
        %4409 = vmatmul.mubr.bf16.gmra.mxu0 %v3606
        %v4410 = vpop.f32.mrf.mxu0
        %v4411 = vadd.f32 %v4090, %v4410
        %v4412 = vpop.f32.mrf.mxu0
        %v4413 = vpop.f32.mrf.mxu0
        %v4414 = vadd.f32 %v4093, %v4413
        %v4415 = vpop.f32.mrf.mxu0
        %4416 = vmatprep.mubr.bf16.mxu0 %v3610
        %4417 = vmatmul.mubr.bf16.gmra.mxu0 %v3609
        %v4418 = vpop.f32.mrf.mxu0
        %v4419 = vadd.f32 %v4098, %v4418
        %v4420 = vpop.f32.mrf.mxu0
        %v4421 = vpop.f32.mrf.mxu0
        %v4422 = vadd.f32 %v4101, %v4421
        %v4423 = vpop.f32.mrf.mxu0
        %4424 = vmatprep.mubr.bf16.mxu0 %v3613
        %4425 = vmatmul.mubr.bf16.gmra.mxu0 %v3612
        %v4426 = vpop.f32.mrf.mxu0
        %v4427 = vadd.f32 %v4106, %v4426
        %v4428 = vpop.f32.mrf.mxu0
        %v4429 = vpop.f32.mrf.mxu0
        %v4430 = vadd.f32 %v4109, %v4429
        %v4431 = vpop.f32.mrf.mxu0
        %4432 = vmatprep.mubr.bf16.mxu0 %v3616
        %4433 = vmatmul.mubr.bf16.gmra.mxu0 %v3615
        %v4434 = vpop.f32.mrf.mxu0
        %v4435 = vadd.f32 %v4114, %v4434
        %v4436 = vpop.f32.mrf.mxu0
        %v4437 = vpop.f32.mrf.mxu0
        %v4438 = vadd.f32 %v4117, %v4437
        %v4439 = vpop.f32.mrf.mxu0
        %4440 = vmatprep.mubr.bf16.mxu0 %v3619
        %4441 = vmatmul.mubr.bf16.gmra.mxu0 %v3618
        %v4442 = vpop.f32.mrf.mxu0
        %v4443 = vadd.f32 %v4122, %v4442
        %v4444 = vpop.f32.mrf.mxu0
        %v4445 = vpop.f32.mrf.mxu0
        %v4446 = vadd.f32 %v4125, %v4445
        %v4447 = vpop.f32.mrf.mxu0
        %4448 = vmatprep.mubr.bf16.mxu0 %v3622
        %4449 = vmatmul.mubr.bf16.gmra.mxu0 %v3621
        %v4450 = vpop.f32.mrf.mxu0
        %v4451 = vadd.f32 %v4130, %v4450
        %v4452 = vpop.f32.mrf.mxu0
        %v4453 = vpop.f32.mrf.mxu0
        %v4454 = vadd.f32 %v4133, %v4453
        %v4455 = vpop.f32.mrf.mxu0
        %4456 = vmatprep.mubr.bf16.mxu0 %v3625
        %4457 = vmatmul.mubr.bf16.gmra.mxu0 %v3624
        %v4458 = vpop.f32.mrf.mxu0
        %v4459 = vadd.f32 %v4138, %v4458
        %v4460 = vpop.f32.mrf.mxu0
        %v4461 = vpop.f32.mrf.mxu0
        %v4462 = vadd.f32 %v4141, %v4461
        %v4463 = vpop.f32.mrf.mxu0
        %4464 = vdwg.mxu0
        %4465 = vmatprep.subr.bf16.mxu0 0
        %4466 = vmatpush1.bf16.msra.mxu0 %v4279
        %4467 = vmatprep.subr.bf16.mxu0 0
        %4468 = vmatpush1.bf16.msra.mxu0 %v4278
        %4469 = vmatprep.subr.bf16.mxu0 0
        %4470 = vmatpush1.bf16.msra.mxu0 %v4277
        %4471 = vmatprep.subr.bf16.mxu0 0
        %4472 = vmatpush1.bf16.msra.mxu0 %v4276
        %4473 = vmatprep.subr.bf16.mxu0 0
        %4474 = vmatpush1.bf16.msra.mxu0 %v4275
        %4475 = vmatprep.subr.bf16.mxu0 0
        %4476 = vmatpush1.bf16.msra.mxu0 %v4274
        %4477 = vmatprep.subr.bf16.mxu0 0
        %4478 = vmatpush1.bf16.msra.mxu0 %v4273
        %4479 = vmatprep.subr.bf16.mxu0 0
        %4480 = vmatpush1.bf16.msra.mxu0 %v4272
        %4481 = vmatprep.subr.bf16.mxu0 0
        %4482 = vmatpush2.bf16.msra.mxu0 0
        %4483 = vmatprep.subr.bf16.mxu0 0
        %4484 = vmatpush2.bf16.msra.mxu0 0
        %4485 = vmatprep.subr.bf16.mxu0 0
        %4486 = vmatpush2.bf16.msra.mxu0 0
        %4487 = vmatprep.subr.bf16.mxu0 0
        %4488 = vmatpush2.bf16.msra.mxu0 0
        %4489 = vmatprep.subr.bf16.mxu0 0
        %4490 = vmatpush2.bf16.msra.mxu0 0
        %4491 = vmatprep.subr.bf16.mxu0 0
        %4492 = vmatpush2.bf16.msra.mxu0 0
        %4493 = vmatprep.subr.bf16.mxu0 0
        %4494 = vmatpush2.bf16.msra.mxu0 0
        %4495 = vmatprep.subr.bf16.mxu0 0
        %4496 = vmatpush2.bf16.msra.mxu0 0
        %4497 = vmatprep.mubr.bf16.mxu0 0
        %4498 = vmatmul.mubr.bf16.gmra.mxu0 %v4156
        %v4499 = vpop.f32.mrf.mxu0
        %v4500 = vadd.f32 %v4339, %v4499
        %v4501 = vpop.f32.mrf.mxu0
        %v4502 = vpop.f32.mrf.mxu0
        %v4503 = vadd.f32 %v4342, %v4502
        %v4504 = vpop.f32.mrf.mxu0
        %4505 = vmatprep.mubr.bf16.mxu0 0
        %4506 = vmatmul.mubr.bf16.gmra.mxu0 %v3584
        %v4507 = vpop.f32.mrf.mxu0
        %v4508 = vadd.f32 %v4347, %v4507
        %v4509 = vpop.f32.mrf.mxu0
        %v4510 = vpop.f32.mrf.mxu0
        %v4511 = vadd.f32 %v4350, %v4510
        %v4512 = vpop.f32.mrf.mxu0
        %4513 = vmatprep.mubr.bf16.mxu0 0
        %4514 = vmatmul.mubr.bf16.gmra.mxu0 %v3587
        %v4515 = vpop.f32.mrf.mxu0
        %v4516 = vadd.f32 %v4355, %v4515
        %v4517 = vpop.f32.mrf.mxu0
        %v4518 = vpop.f32.mrf.mxu0
        %v4519 = vadd.f32 %v4358, %v4518
        %v4520 = vpop.f32.mrf.mxu0
        %4521 = vmatprep.mubr.bf16.mxu0 0
        %4522 = vmatmul.mubr.bf16.gmra.mxu0 %v3590
        %v4523 = vpop.f32.mrf.mxu0
        %v4524 = vadd.f32 %v4363, %v4523
        %v4525 = vpop.f32.mrf.mxu0
        %v4526 = vpop.f32.mrf.mxu0
        %v4527 = vadd.f32 %v4366, %v4526
        %v4528 = vpop.f32.mrf.mxu0
        %4529 = vmatprep.mubr.bf16.mxu0 0
        %4530 = vmatmul.mubr.bf16.gmra.mxu0 %v3593
        %v4531 = vpop.f32.mrf.mxu0
        %v4532 = vadd.f32 %v4371, %v4531
        %v4533 = vpop.f32.mrf.mxu0
        %v4534 = vpop.f32.mrf.mxu0
        %v4535 = vadd.f32 %v4374, %v4534
        %v4536 = vpop.f32.mrf.mxu0
        %4537 = vmatprep.mubr.bf16.mxu0 0
        %4538 = vmatmul.mubr.bf16.gmra.mxu0 %v3596
        %v4539 = vpop.f32.mrf.mxu0
        %v4540 = vadd.f32 %v4379, %v4539
        %v4541 = vpop.f32.mrf.mxu0
        %v4542 = vpop.f32.mrf.mxu0
        %v4543 = vadd.f32 %v4382, %v4542
        %v4544 = vpop.f32.mrf.mxu0
        %4545 = vmatprep.mubr.bf16.mxu0 0
        %4546 = vmatmul.mubr.bf16.gmra.mxu0 %v3599
        %v4547 = vpop.f32.mrf.mxu0
        %v4548 = vadd.f32 %v4387, %v4547
        %v4549 = vpop.f32.mrf.mxu0
        %v4550 = vpop.f32.mrf.mxu0
        %v4551 = vadd.f32 %v4390, %v4550
        %v4552 = vpop.f32.mrf.mxu0
        %4553 = vmatprep.mubr.bf16.mxu0 0
        %4554 = vmatmul.mubr.bf16.gmra.mxu0 %v3602
        %v4555 = vpop.f32.mrf.mxu0
        %v4556 = vadd.f32 %v4395, %v4555
        %v4557 = vpop.f32.mrf.mxu0
        %v4558 = vpop.f32.mrf.mxu0
        %v4559 = vadd.f32 %v4398, %v4558
        %v4560 = vpop.f32.mrf.mxu0
        %4561 = vmatprep.mubr.bf16.mxu0 0
        %4562 = vmatmul.mubr.bf16.gmra.mxu0 %v3605
        %v4563 = vpop.f32.mrf.mxu0
        %v4564 = vadd.f32 %v4403, %v4563
        %v4565 = vpop.f32.mrf.mxu0
        %v4566 = vpop.f32.mrf.mxu0
        %v4567 = vadd.f32 %v4406, %v4566
        %v4568 = vpop.f32.mrf.mxu0
        %4569 = vmatprep.mubr.bf16.mxu0 0
        %4570 = vmatmul.mubr.bf16.gmra.mxu0 %v3608
        %v4571 = vpop.f32.mrf.mxu0
        %v4572 = vadd.f32 %v4411, %v4571
        %v4573 = vpop.f32.mrf.mxu0
        %v4574 = vpop.f32.mrf.mxu0
        %v4575 = vadd.f32 %v4414, %v4574
        %v4576 = vpop.f32.mrf.mxu0
        %4577 = vmatprep.mubr.bf16.mxu0 0
        %4578 = vmatmul.mubr.bf16.gmra.mxu0 %v3611
        %v4579 = vpop.f32.mrf.mxu0
        %v4580 = vadd.f32 %v4419, %v4579
        %v4581 = vpop.f32.mrf.mxu0
        %v4582 = vpop.f32.mrf.mxu0
        %v4583 = vadd.f32 %v4422, %v4582
        %v4584 = vpop.f32.mrf.mxu0
        %4585 = vmatprep.mubr.bf16.mxu0 0
        %4586 = vmatmul.mubr.bf16.gmra.mxu0 %v3614
        %v4587 = vpop.f32.mrf.mxu0
        %v4588 = vadd.f32 %v4427, %v4587
        %v4589 = vpop.f32.mrf.mxu0
        %v4590 = vpop.f32.mrf.mxu0
        %v4591 = vadd.f32 %v4430, %v4590
        %v4592 = vpop.f32.mrf.mxu0
        %4593 = vmatprep.mubr.bf16.mxu0 0
        %4594 = vmatmul.mubr.bf16.gmra.mxu0 %v3617
        %v4595 = vpop.f32.mrf.mxu0
        %v4596 = vadd.f32 %v4435, %v4595
        %v4597 = vpop.f32.mrf.mxu0
        %v4598 = vpop.f32.mrf.mxu0
        %v4599 = vadd.f32 %v4438, %v4598
        %v4600 = vpop.f32.mrf.mxu0
        %4601 = vmatprep.mubr.bf16.mxu0 0
        %4602 = vmatmul.mubr.bf16.gmra.mxu0 %v3620
        %v4603 = vpop.f32.mrf.mxu0
        %v4604 = vadd.f32 %v4443, %v4603
        %v4605 = vpop.f32.mrf.mxu0
        %v4606 = vpop.f32.mrf.mxu0
        %v4607 = vadd.f32 %v4446, %v4606
        %v4608 = vpop.f32.mrf.mxu0
        %4609 = vmatprep.mubr.bf16.mxu0 0
        %4610 = vmatmul.mubr.bf16.gmra.mxu0 %v3623
        %v4611 = vpop.f32.mrf.mxu0
        %v4612 = vadd.f32 %v4451, %v4611
        %v4613 = vpop.f32.mrf.mxu0
        %v4614 = vpop.f32.mrf.mxu0
        %v4615 = vadd.f32 %v4454, %v4614
        %v4616 = vpop.f32.mrf.mxu0
        %4617 = vmatprep.mubr.bf16.mxu0 0
        %4618 = vmatmul.mubr.bf16.gmra.mxu0 %v3626
        %v4619 = vpop.f32.mrf.mxu0
        %v4620 = vadd.f32 %v4459, %v4619
        %v4621 = vpop.f32.mrf.mxu0
        %v4622 = vpop.f32.mrf.mxu0
        %v4623 = vadd.f32 %v4462, %v4622
        %v4624 = vpop.f32.mrf.mxu0
        %4625 = vdwg.mxu0
        %v4626 = vld [vmem:[#allocation2 + $0x30] sm:$0xff]
        %v4627 = vld [vmem:[#allocation2 + $0x38] sm:$0xf]
        %v4628 = vld [vmem:[#allocation2 + $0x3c] sm:$0xff]
        %v4629 = vld [vmem:[#allocation2 + $0x44] sm:$0xf]
        %v4630 = vld [vmem:[#allocation2 + $0x48] sm:$0xff]
        %v4631 = vld [vmem:[#allocation2 + $0x50] sm:$0xf]
        %v4632 = vld [vmem:[#allocation2 + $0x54] sm:$0xff]
        %v4633 = vld [vmem:[#allocation2 + $0x5c] sm:$0xf]
        %v4634 = vld [vmem:[#allocation2 + $0x60] sm:$0xff]
        %v4635 = vld [vmem:[#allocation2 + $0x68] sm:$0xf]
        %v4636 = vld [vmem:[#allocation2 + $0x6c] sm:$0xff]
        %v4637 = vld [vmem:[#allocation2 + $0x74] sm:$0xf]
        %v4638 = vld [vmem:[#allocation2 + $0x78] sm:$0xff]
        %v4639 = vld [vmem:[#allocation2 + $0x80] sm:$0xf]
        %v4640 = vld [vmem:[#allocation2 + $0x84] sm:$0xff]
        %v4641 = vld [vmem:[#allocation2 + $0x8c] sm:$0xf]
        %v4642 = vld [vmem:[#allocation2 + $0x90] sm:$0xff]
        %v4643 = vld [vmem:[#allocation2 + $0x98] sm:$0xf]
        %v4644 = vld [vmem:[#allocation2 + $0x9c] sm:$0xff]
        %v4645 = vld [vmem:[#allocation2 + $0xa4] sm:$0xf]
        %v4646 = vld [vmem:[#allocation2 + $0xa8] sm:$0xff]
        %v4647 = vld [vmem:[#allocation2 + $0xb0] sm:$0xf]
        %v4648 = vld [vmem:[#allocation2 + $0xb4] sm:$0xff]
        %v4649 = vld [vmem:[#allocation2 + $0xbc] sm:$0xf]
        %v4650 = vld [vmem:[#allocation2 + $0xc0] sm:$0xff]
        %v4651 = vld [vmem:[#allocation2 + $0xc8] sm:$0xf]
        %v4652 = vld [vmem:[#allocation2 + $0xcc] sm:$0xff]
        %v4653 = vld [vmem:[#allocation2 + $0xd4] sm:$0xf]
        %v4654 = vld [vmem:[#allocation2 + $0xd8] sm:$0xff]
        %v4655 = vld [vmem:[#allocation2 + $0xe0] sm:$0xf]
        %v4656 = vld [vmem:[#allocation2 + $0xe4] sm:$0xff]
        %v4657 = vld [vmem:[#allocation2 + $0xec] sm:$0xf]
        %v4658 = vld [vmem:[#allocation2 + $0xf0] sm:$0xff]
        %v4659 = vld [vmem:[#allocation2 + $0xf8] sm:$0xf]
        %v4660 = vld [vmem:[#allocation2 + $0xfc] sm:$0xff]
        %v4661 = vld [vmem:[#allocation2 + $0x104] sm:$0xf]
        %v4662 = vld [vmem:[#allocation2 + $0x108] sm:$0xff]
        %v4663 = vld [vmem:[#allocation2 + $0x110] sm:$0xf]
        %v4664 = vld [vmem:[#allocation2 + $0x114] sm:$0xff]
        %v4665 = vld [vmem:[#allocation2 + $0x11c] sm:$0xf]
        %v4666 = vld [vmem:[#allocation2 + $0x120] sm:$0xff]
        %v4667 = vld [vmem:[#allocation2 + $0x128] sm:$0xf]
        %v4668 = vld [vmem:[#allocation2 + $0x12c] sm:$0xff]
        %v4669 = vld [vmem:[#allocation2 + $0x134] sm:$0xf]
        %v4670 = vld [vmem:[#allocation2 + $0x138] sm:$0xff]
        %v4671 = vld [vmem:[#allocation2 + $0x140] sm:$0xf]
        %v4672 = vld [vmem:[#allocation2 + $0x144] sm:$0xff]
        %v4673 = vld [vmem:[#allocation2 + $0x14c] sm:$0xf]
        %v4674 = vld [vmem:[#allocation2 + $0x150] sm:$0xff]
        %v4675 = vld [vmem:[#allocation2 + $0x158] sm:$0xf]
        %v4676 = vld [vmem:[#allocation2 + $0x15c] sm:$0xff]
        %v4677 = vld [vmem:[#allocation2 + $0x164] sm:$0xf]
        %v4678 = vld [vmem:[#allocation2 + $0x168] sm:$0xff]
        %v4679 = vld [vmem:[#allocation2 + $0x170] sm:$0xf]
        %v4680 = vld [vmem:[#allocation2 + $0x174] sm:$0xff]
        %v4681 = vld [vmem:[#allocation2 + $0x17c] sm:$0xf]
        %v4682 = vld [vmem:[#allocation2 + $0x180] sm:$0xff]
        %v4683 = vld [vmem:[#allocation2 + $0x188] sm:$0xf]
        %v4684 = vld [vmem:[#allocation2 + $0x18c] sm:$0xff]
        %v4685 = vld [vmem:[#allocation2 + $0x194] sm:$0xf]
        %v4686 = vld [vmem:[#allocation2 + $0x198] sm:$0xff]
        %v4687 = vld [vmem:[#allocation2 + $0x1a0] sm:$0xf]
        %v4688 = vld [vmem:[#allocation2 + $0x1a4] sm:$0xff]
        %v4689 = vld [vmem:[#allocation2 + $0x1ac] sm:$0xf]
        %s4690 = scalar_lea.vmem [#allocation8], 384
        %v4691 = vld [vmem:[%s4690] sm:$0xf]
        %v4692 = vld [vmem:[%s4690 + $0x4] sm:$0xf]
        %v4693 = vld [vmem:[%s4690 + $0x8] sm:$0xf]
        %v4694 = vld [vmem:[%s4690 + $0xc] sm:$0xf]
        %v4695 = vld [vmem:[%s4690 + $0x10] sm:$0xf]
        %v4696 = vld [vmem:[%s4690 + $0x14] sm:$0xf]
        %v4697 = vld [vmem:[%s4690 + $0x18] sm:$0xf]
        %v4698 = vld [vmem:[%s4690 + $0x1c] sm:$0xf]
        %v4699 = vld [vmem:[%s4690 + $0x20] sm:$0xf]
        %v4700 = vld [vmem:[%s4690 + $0x24] sm:$0xf]
        %v4701 = vld [vmem:[%s4690 + $0x28] sm:$0xf]
        %v4702 = vld [vmem:[%s4690 + $0x2c] sm:$0xf]
        %v4703 = vld [vmem:[%s4690 + $0x30] sm:$0xf]
        %v4704 = vld [vmem:[%s4690 + $0x34] sm:$0xf]
        %v4705 = vld [vmem:[%s4690 + $0x38] sm:$0xf]
        %v4706 = vld [vmem:[%s4690 + $0x3c] sm:$0xf]
        %v4707 = vld [vmem:[%s4690 + $0x40] sm:$0xf]
        %v4708 = vld [vmem:[%s4690 + $0x44] sm:$0xf]
        %v4709 = vld [vmem:[%s4690 + $0x48] sm:$0xf]
        %v4710 = vld [vmem:[%s4690 + $0x4c] sm:$0xf]
        %v4711 = vld [vmem:[%s4690 + $0x50] sm:$0xf]
        %v4712 = vld [vmem:[%s4690 + $0x54] sm:$0xf]
        %v4713 = vld [vmem:[%s4690 + $0x58] sm:$0xf]
        %v4714 = vld [vmem:[%s4690 + $0x5c] sm:$0xf]
        %v4715 = vld [vmem:[%s4690 + $0x60] sm:$0xf]
        %v4716 = vld [vmem:[%s4690 + $0x64] sm:$0xf]
        %v4717 = vld [vmem:[%s4690 + $0x68] sm:$0xf]
        %v4718 = vld [vmem:[%s4690 + $0x6c] sm:$0xf]
        %v4719 = vld [vmem:[%s4690 + $0x70] sm:$0xf]
        %v4720 = vld [vmem:[%s4690 + $0x74] sm:$0xf]
        %v4721 = vld [vmem:[%s4690 + $0x78] sm:$0xf]
        %v4722 = vld [vmem:[%s4690 + $0x7c] sm:$0xf]
        %v4723 = vld [vmem:[%s4690 + $0x80] sm:$0xf]
        %v4724 = vld [vmem:[%s4690 + $0x84] sm:$0xf]
        %v4725 = vld [vmem:[%s4690 + $0x88] sm:$0xf]
        %v4726 = vld [vmem:[%s4690 + $0x8c] sm:$0xf]
        %v4727 = vld [vmem:[%s4690 + $0x90] sm:$0xf]
        %v4728 = vld [vmem:[%s4690 + $0x94] sm:$0xf]
        %v4729 = vld [vmem:[%s4690 + $0x98] sm:$0xf]
        %v4730 = vld [vmem:[%s4690 + $0x9c] sm:$0xf]
        %v4731 = vld [vmem:[%s4690 + $0xa0] sm:$0xf]
        %v4732 = vld [vmem:[%s4690 + $0xa4] sm:$0xf]
        %v4733 = vld [vmem:[%s4690 + $0xa8] sm:$0xf]
        %v4734 = vld [vmem:[%s4690 + $0xac] sm:$0xf]
        %v4735 = vld [vmem:[%s4690 + $0xb0] sm:$0xf]
        %v4736 = vld [vmem:[%s4690 + $0xb4] sm:$0xf]
        %v4737 = vld [vmem:[%s4690 + $0xb8] sm:$0xf]
        %v4738 = vld [vmem:[%s4690 + $0xbc] sm:$0xf]
        %v4803 = vunpack.c.l.b16 %v4626
        %v4804 = vunpack.c.h.b16 %v4626
        %v4805 = vunpack.c.l.b16 %v4627
        %v4806 = vunpack.c.l.b16 %v4628
        %v4807 = vunpack.c.h.b16 %v4628
        %v4808 = vunpack.c.l.b16 %v4629
        %v4809 = vunpack.c.l.b16 %v4630
        %v4810 = vunpack.c.h.b16 %v4630
        %v4811 = vunpack.c.l.b16 %v4631
        %v4812 = vunpack.c.l.b16 %v4632
        %v4813 = vunpack.c.h.b16 %v4632
        %v4814 = vunpack.c.l.b16 %v4633
        %v4815 = vunpack.c.l.b16 %v4634
        %v4816 = vunpack.c.h.b16 %v4634
        %v4817 = vunpack.c.l.b16 %v4635
        %v4818 = vunpack.c.l.b16 %v4636
        %v4819 = vunpack.c.h.b16 %v4636
        %v4820 = vunpack.c.l.b16 %v4637
        %v4821 = vunpack.c.l.b16 %v4638
        %v4822 = vunpack.c.h.b16 %v4638
        %v4823 = vunpack.c.l.b16 %v4639
        %v4824 = vunpack.c.l.b16 %v4640
        %v4825 = vunpack.c.h.b16 %v4640
        %v4826 = vunpack.c.l.b16 %v4641
        %v4827 = vunpack.c.l.b16 %v4642
        %v4828 = vunpack.c.h.b16 %v4642
        %v4829 = vunpack.c.l.b16 %v4643
        %v4830 = vunpack.c.l.b16 %v4644
        %v4831 = vunpack.c.h.b16 %v4644
        %v4832 = vunpack.c.l.b16 %v4645
        %v4833 = vunpack.c.l.b16 %v4646
        %v4834 = vunpack.c.h.b16 %v4646
        %v4835 = vunpack.c.l.b16 %v4647
        %v4836 = vunpack.c.l.b16 %v4648
        %v4837 = vunpack.c.h.b16 %v4648
        %v4838 = vunpack.c.l.b16 %v4649
        %v4839 = vunpack.c.l.b16 %v4650
        %v4840 = vunpack.c.h.b16 %v4650
        %v4841 = vunpack.c.l.b16 %v4651
        %v4842 = vunpack.c.l.b16 %v4652
        %v4843 = vunpack.c.h.b16 %v4652
        %v4844 = vunpack.c.l.b16 %v4653
        %v4845 = vunpack.c.l.b16 %v4654
        %v4846 = vunpack.c.h.b16 %v4654
        %v4847 = vunpack.c.l.b16 %v4655
        %v4848 = vunpack.c.l.b16 %v4656
        %v4849 = vunpack.c.h.b16 %v4656
        %v4850 = vunpack.c.l.b16 %v4657
        %v4851 = vunpack.c.l.b16 %v4658
        %v4852 = vunpack.c.h.b16 %v4658
        %v4853 = vunpack.c.l.b16 %v4659
        %v4854 = vunpack.c.l.b16 %v4660
        %v4855 = vunpack.c.h.b16 %v4660
        %v4856 = vunpack.c.l.b16 %v4661
        %v4857 = vunpack.c.l.b16 %v4662
        %v4858 = vunpack.c.h.b16 %v4662
        %v4859 = vunpack.c.l.b16 %v4663
        %v4860 = vunpack.c.l.b16 %v4664
        %v4861 = vunpack.c.h.b16 %v4664
        %v4862 = vunpack.c.l.b16 %v4665
        %v4863 = vunpack.c.l.b16 %v4666
        %v4864 = vunpack.c.h.b16 %v4666
        %v4865 = vunpack.c.l.b16 %v4667
        %v4866 = vunpack.c.l.b16 %v4668
        %v4867 = vunpack.c.h.b16 %v4668
        %v4868 = vunpack.c.l.b16 %v4669
        %v4869 = vunpack.c.l.b16 %v4670
        %v4870 = vunpack.c.h.b16 %v4670
        %v4871 = vunpack.c.l.b16 %v4671
        %v4872 = vunpack.c.l.b16 %v4672
        %v4873 = vunpack.c.h.b16 %v4672
        %v4874 = vunpack.c.l.b16 %v4673
        %v4875 = vunpack.c.l.b16 %v4674
        %v4876 = vunpack.c.h.b16 %v4674
        %v4877 = vunpack.c.l.b16 %v4675
        %v4878 = vunpack.c.l.b16 %v4676
        %v4879 = vunpack.c.h.b16 %v4676
        %v4880 = vunpack.c.l.b16 %v4677
        %v4881 = vunpack.c.l.b16 %v4678
        %v4882 = vunpack.c.h.b16 %v4678
        %v4883 = vunpack.c.l.b16 %v4679
        %v4884 = vunpack.c.l.b16 %v4680
        %v4885 = vunpack.c.h.b16 %v4680
        %v4886 = vunpack.c.l.b16 %v4681
        %v4887 = vunpack.c.l.b16 %v4682
        %v4888 = vunpack.c.h.b16 %v4682
        %v4889 = vunpack.c.l.b16 %v4683
        %v4890 = vunpack.c.l.b16 %v4684
        %v4891 = vunpack.c.h.b16 %v4684
        %v4892 = vunpack.c.l.b16 %v4685
        %v4893 = vunpack.c.l.b16 %v4686
        %v4894 = vunpack.c.h.b16 %v4686
        %v4895 = vunpack.c.l.b16 %v4687
        %v4896 = vunpack.c.l.b16 %v4688
        %v4897 = vunpack.c.h.b16 %v4688
        %v4898 = vunpack.c.l.b16 %v4689
        %v4899 = vpack.c.b16 %v4806, %v4803
        %v4900 = vpack.c.b16 %v4807, %v4804
        %v4901 = vpack.c.b16 %v4808, %v4805
        %v4902 = vpack.c.b16 %v4812, %v4809
        %v4903 = vpack.c.b16 %v4813, %v4810
        %v4904 = vpack.c.b16 %v4814, %v4811
        %v4905 = vpack.c.b16 %v4818, %v4815
        %v4906 = vpack.c.b16 %v4819, %v4816
        %v4907 = vpack.c.b16 %v4820, %v4817
        %v4908 = vpack.c.b16 %v4824, %v4821
        %v4909 = vpack.c.b16 %v4825, %v4822
        %v4910 = vpack.c.b16 %v4826, %v4823
        %v4911 = vpack.c.b16 %v4830, %v4827
        %v4912 = vpack.c.b16 %v4831, %v4828
        %v4913 = vpack.c.b16 %v4832, %v4829
        %v4914 = vpack.c.b16 %v4836, %v4833
        %v4915 = vpack.c.b16 %v4837, %v4834
        %v4916 = vpack.c.b16 %v4838, %v4835
        %v4917 = vpack.c.b16 %v4842, %v4839
        %v4918 = vpack.c.b16 %v4843, %v4840
        %v4919 = vpack.c.b16 %v4844, %v4841
        %v4920 = vpack.c.b16 %v4848, %v4845
        %v4921 = vpack.c.b16 %v4849, %v4846
        %v4922 = vpack.c.b16 %v4850, %v4847
        %v4923 = vpack.c.b16 %v4854, %v4851
        %v4924 = vpack.c.b16 %v4855, %v4852
        %v4925 = vpack.c.b16 %v4856, %v4853
        %v4926 = vpack.c.b16 %v4860, %v4857
        %v4927 = vpack.c.b16 %v4861, %v4858
        %v4928 = vpack.c.b16 %v4862, %v4859
        %v4929 = vpack.c.b16 %v4866, %v4863
        %v4930 = vpack.c.b16 %v4867, %v4864
        %v4931 = vpack.c.b16 %v4868, %v4865
        %v4932 = vpack.c.b16 %v4872, %v4869
        %v4933 = vpack.c.b16 %v4873, %v4870
        %v4934 = vpack.c.b16 %v4874, %v4871
        %v4935 = vpack.c.b16 %v4878, %v4875
        %v4936 = vpack.c.b16 %v4879, %v4876
        %v4937 = vpack.c.b16 %v4880, %v4877
        %v4938 = vpack.c.b16 %v4884, %v4881
        %v4939 = vpack.c.b16 %v4885, %v4882
        %v4940 = vpack.c.b16 %v4886, %v4883
        %v4941 = vpack.c.b16 %v4890, %v4887
        %v4942 = vpack.c.b16 %v4891, %v4888
        %v4943 = vpack.c.b16 %v4892, %v4889
        %v4944 = vpack.c.b16 %v4896, %v4893
        %v4945 = vpack.c.b16 %v4897, %v4894
        %v4946 = vpack.c.b16 %v4898, %v4895
        %v5043 = vunpack.c.l.b16 %v4691
        %v5044 = vunpack.c.l.b16 %v4692
        %v5045 = vunpack.c.l.b16 %v4693
        %v5046 = vunpack.c.l.b16 %v4694
        %v5047 = vunpack.c.l.b16 %v4695
        %v5048 = vunpack.c.l.b16 %v4696
        %v5049 = vunpack.c.l.b16 %v4697
        %v5050 = vunpack.c.l.b16 %v4698
        %v5051 = vunpack.c.l.b16 %v4699
        %v5052 = vunpack.c.l.b16 %v4700
        %v5053 = vunpack.c.l.b16 %v4701
        %v5054 = vunpack.c.l.b16 %v4702
        %v5055 = vunpack.c.l.b16 %v4703
        %v5056 = vunpack.c.l.b16 %v4704
        %v5057 = vunpack.c.l.b16 %v4705
        %v5058 = vunpack.c.l.b16 %v4706
        %v5059 = vunpack.c.l.b16 %v4707
        %v5060 = vunpack.c.l.b16 %v4708
        %v5061 = vunpack.c.l.b16 %v4709
        %v5062 = vunpack.c.l.b16 %v4710
        %v5063 = vunpack.c.l.b16 %v4711
        %v5064 = vunpack.c.l.b16 %v4712
        %v5065 = vunpack.c.l.b16 %v4713
        %v5066 = vunpack.c.l.b16 %v4714
        %v5067 = vunpack.c.l.b16 %v4715
        %v5068 = vunpack.c.l.b16 %v4716
        %v5069 = vunpack.c.l.b16 %v4717
        %v5070 = vunpack.c.l.b16 %v4718
        %v5071 = vunpack.c.l.b16 %v4719
        %v5072 = vunpack.c.l.b16 %v4720
        %v5073 = vunpack.c.l.b16 %v4721
        %v5074 = vunpack.c.l.b16 %v4722
        %v5075 = vunpack.c.l.b16 %v4723
        %v5076 = vunpack.c.l.b16 %v4724
        %v5077 = vunpack.c.l.b16 %v4725
        %v5078 = vunpack.c.l.b16 %v4726
        %v5079 = vunpack.c.l.b16 %v4727
        %v5080 = vunpack.c.l.b16 %v4728
        %v5081 = vunpack.c.l.b16 %v4729
        %v5082 = vunpack.c.l.b16 %v4730
        %v5083 = vunpack.c.l.b16 %v4731
        %v5084 = vunpack.c.l.b16 %v4732
        %v5085 = vunpack.c.l.b16 %v4733
        %v5086 = vunpack.c.l.b16 %v4734
        %v5087 = vunpack.c.l.b16 %v4735
        %v5088 = vunpack.c.l.b16 %v4736
        %v5089 = vunpack.c.l.b16 %v4737
        %v5090 = vunpack.c.l.b16 %v4738
        %v5091 = vpack.c.b16 %v5044, %v5043
        %v5092 = vpack.c.b16 %v5046, %v5045
        %v5093 = vpack.c.b16 %v5048, %v5047
        %v5094 = vpack.c.b16 %v5050, %v5049
        %v5095 = vpack.c.b16 %v5052, %v5051
        %v5096 = vpack.c.b16 %v5054, %v5053
        %v5097 = vpack.c.b16 %v5056, %v5055
        %v5098 = vpack.c.b16 %v5058, %v5057
        %v5099 = vpack.c.b16 %v5060, %v5059
        %v5100 = vpack.c.b16 %v5062, %v5061
        %v5101 = vpack.c.b16 %v5064, %v5063
        %v5102 = vpack.c.b16 %v5066, %v5065
        %v5103 = vpack.c.b16 %v5068, %v5067
        %v5104 = vpack.c.b16 %v5070, %v5069
        %v5105 = vpack.c.b16 %v5072, %v5071
        %v5106 = vpack.c.b16 %v5074, %v5073
        %v5107 = vpack.c.b16 %v5076, %v5075
        %v5108 = vpack.c.b16 %v5078, %v5077
        %v5109 = vpack.c.b16 %v5080, %v5079
        %v5110 = vpack.c.b16 %v5082, %v5081
        %v5111 = vpack.c.b16 %v5084, %v5083
        %v5112 = vpack.c.b16 %v5086, %v5085
        %v5113 = vpack.c.b16 %v5088, %v5087
        %v5114 = vpack.c.b16 %v5090, %v5089
        %5139 = vmatprep.subr.bf16.mxu0 0
        %5140 = vmatpush1.bf16.msra.mxu0 %v5098
        %5141 = vmatprep.subr.bf16.mxu0 0
        %5142 = vmatpush1.bf16.msra.mxu0 %v5097
        %5143 = vmatprep.subr.bf16.mxu0 0
        %5144 = vmatpush1.bf16.msra.mxu0 %v5096
        %5145 = vmatprep.subr.bf16.mxu0 0
        %5146 = vmatpush1.bf16.msra.mxu0 %v5095
        %5147 = vmatprep.subr.bf16.mxu0 0
        %5148 = vmatpush1.bf16.msra.mxu0 %v5094
        %5149 = vmatprep.subr.bf16.mxu0 0
        %5150 = vmatpush1.bf16.msra.mxu0 %v5093
        %5151 = vmatprep.subr.bf16.mxu0 0
        %5152 = vmatpush1.bf16.msra.mxu0 %v5092
        %5153 = vmatprep.subr.bf16.mxu0 0
        %5154 = vmatpush1.bf16.msra.mxu0 %v5091
        %5155 = vmatprep.subr.bf16.mxu0 0
        %5156 = vmatpush2.bf16.msra.mxu0 %v5106
        %5157 = vmatprep.subr.bf16.mxu0 0
        %5158 = vmatpush2.bf16.msra.mxu0 %v5105
        %5159 = vmatprep.subr.bf16.mxu0 0
        %5160 = vmatpush2.bf16.msra.mxu0 %v5104
        %5161 = vmatprep.subr.bf16.mxu0 0
        %5162 = vmatpush2.bf16.msra.mxu0 %v5103
        %5163 = vmatprep.subr.bf16.mxu0 0
        %5164 = vmatpush2.bf16.msra.mxu0 %v5102
        %5165 = vmatprep.subr.bf16.mxu0 0
        %5166 = vmatpush2.bf16.msra.mxu0 %v5101
        %5167 = vmatprep.subr.bf16.mxu0 0
        %5168 = vmatpush2.bf16.msra.mxu0 %v5100
        %5169 = vmatprep.subr.bf16.mxu0 0
        %5170 = vmatpush2.bf16.msra.mxu0 %v5099
        %5171 = vmatprep.mubr.bf16.mxu0 %v4900
        %5172 = vmatmul.mubr.bf16.gmra.mxu0 %v4899
        %v5173 = vpop.f32.mrf.mxu0
        %v5174 = vadd.f32 0.0, %v5173
        %v5175 = vpop.f32.mrf.mxu0
        %v5176 = vpop.f32.mrf.mxu0
        %v5177 = vadd.f32 0.0, %v5176
        %v5178 = vpop.f32.mrf.mxu0
        %5179 = vmatprep.mubr.bf16.mxu0 %v4903
        %5180 = vmatmul.mubr.bf16.gmra.mxu0 %v4902
        %v5181 = vpop.f32.mrf.mxu0
        %v5182 = vadd.f32 0.0, %v5181
        %v5183 = vpop.f32.mrf.mxu0
        %v5184 = vpop.f32.mrf.mxu0
        %v5185 = vadd.f32 0.0, %v5184
        %v5186 = vpop.f32.mrf.mxu0
        %5187 = vmatprep.mubr.bf16.mxu0 %v4906
        %5188 = vmatmul.mubr.bf16.gmra.mxu0 %v4905
        %v5189 = vpop.f32.mrf.mxu0
        %v5190 = vadd.f32 0.0, %v5189
        %v5191 = vpop.f32.mrf.mxu0
        %v5192 = vpop.f32.mrf.mxu0
        %v5193 = vadd.f32 0.0, %v5192
        %v5194 = vpop.f32.mrf.mxu0
        %5195 = vmatprep.mubr.bf16.mxu0 %v4909
        %5196 = vmatmul.mubr.bf16.gmra.mxu0 %v4908
        %v5197 = vpop.f32.mrf.mxu0
        %v5198 = vadd.f32 0.0, %v5197
        %v5199 = vpop.f32.mrf.mxu0
        %v5200 = vpop.f32.mrf.mxu0
        %v5201 = vadd.f32 0.0, %v5200
        %v5202 = vpop.f32.mrf.mxu0
        %5203 = vmatprep.mubr.bf16.mxu0 %v4912
        %5204 = vmatmul.mubr.bf16.gmra.mxu0 %v4911
        %v5205 = vpop.f32.mrf.mxu0
        %v5206 = vadd.f32 0.0, %v5205
        %v5207 = vpop.f32.mrf.mxu0
        %v5208 = vpop.f32.mrf.mxu0
        %v5209 = vadd.f32 0.0, %v5208
        %v5210 = vpop.f32.mrf.mxu0
        %5211 = vmatprep.mubr.bf16.mxu0 %v4915
        %5212 = vmatmul.mubr.bf16.gmra.mxu0 %v4914
        %v5213 = vpop.f32.mrf.mxu0
        %v5214 = vadd.f32 0.0, %v5213
        %v5215 = vpop.f32.mrf.mxu0
        %v5216 = vpop.f32.mrf.mxu0
        %v5217 = vadd.f32 0.0, %v5216
        %v5218 = vpop.f32.mrf.mxu0
        %5219 = vmatprep.mubr.bf16.mxu0 %v4918
        %5220 = vmatmul.mubr.bf16.gmra.mxu0 %v4917
        %v5221 = vpop.f32.mrf.mxu0
        %v5222 = vadd.f32 0.0, %v5221
        %v5223 = vpop.f32.mrf.mxu0
        %v5224 = vpop.f32.mrf.mxu0
        %v5225 = vadd.f32 0.0, %v5224
        %v5226 = vpop.f32.mrf.mxu0
        %5227 = vmatprep.mubr.bf16.mxu0 %v4921
        %5228 = vmatmul.mubr.bf16.gmra.mxu0 %v4920
        %v5229 = vpop.f32.mrf.mxu0
        %v5230 = vadd.f32 0.0, %v5229
        %v5231 = vpop.f32.mrf.mxu0
        %v5232 = vpop.f32.mrf.mxu0
        %v5233 = vadd.f32 0.0, %v5232
        %v5234 = vpop.f32.mrf.mxu0
        %5235 = vmatprep.mubr.bf16.mxu0 %v4924
        %5236 = vmatmul.mubr.bf16.gmra.mxu0 %v4923
        %v5237 = vpop.f32.mrf.mxu0
        %v5238 = vadd.f32 0.0, %v5237
        %v5239 = vpop.f32.mrf.mxu0
        %v5240 = vpop.f32.mrf.mxu0
        %v5241 = vadd.f32 0.0, %v5240
        %v5242 = vpop.f32.mrf.mxu0
        %5243 = vmatprep.mubr.bf16.mxu0 %v4927
        %5244 = vmatmul.mubr.bf16.gmra.mxu0 %v4926
        %v5245 = vpop.f32.mrf.mxu0
        %v5246 = vadd.f32 0.0, %v5245
        %v5247 = vpop.f32.mrf.mxu0
        %v5248 = vpop.f32.mrf.mxu0
        %v5249 = vadd.f32 0.0, %v5248
        %v5250 = vpop.f32.mrf.mxu0
        %5251 = vmatprep.mubr.bf16.mxu0 %v4930
        %5252 = vmatmul.mubr.bf16.gmra.mxu0 %v4929
        %v5253 = vpop.f32.mrf.mxu0
        %v5254 = vadd.f32 0.0, %v5253
        %v5255 = vpop.f32.mrf.mxu0
        %v5256 = vpop.f32.mrf.mxu0
        %v5257 = vadd.f32 0.0, %v5256
        %v5258 = vpop.f32.mrf.mxu0
        %5259 = vmatprep.mubr.bf16.mxu0 %v4933
        %5260 = vmatmul.mubr.bf16.gmra.mxu0 %v4932
        %v5261 = vpop.f32.mrf.mxu0
        %v5262 = vadd.f32 0.0, %v5261
        %v5263 = vpop.f32.mrf.mxu0
        %v5264 = vpop.f32.mrf.mxu0
        %v5265 = vadd.f32 0.0, %v5264
        %v5266 = vpop.f32.mrf.mxu0
        %5267 = vmatprep.mubr.bf16.mxu0 %v4936
        %5268 = vmatmul.mubr.bf16.gmra.mxu0 %v4935
        %v5269 = vpop.f32.mrf.mxu0
        %v5270 = vadd.f32 0.0, %v5269
        %v5271 = vpop.f32.mrf.mxu0
        %v5272 = vpop.f32.mrf.mxu0
        %v5273 = vadd.f32 0.0, %v5272
        %v5274 = vpop.f32.mrf.mxu0
        %5275 = vmatprep.mubr.bf16.mxu0 %v4939
        %5276 = vmatmul.mubr.bf16.gmra.mxu0 %v4938
        %v5277 = vpop.f32.mrf.mxu0
        %v5278 = vadd.f32 0.0, %v5277
        %v5279 = vpop.f32.mrf.mxu0
        %v5280 = vpop.f32.mrf.mxu0
        %v5281 = vadd.f32 0.0, %v5280
        %v5282 = vpop.f32.mrf.mxu0
        %5283 = vmatprep.mubr.bf16.mxu0 %v4942
        %5284 = vmatmul.mubr.bf16.gmra.mxu0 %v4941
        %v5285 = vpop.f32.mrf.mxu0
        %v5286 = vadd.f32 0.0, %v5285
        %v5287 = vpop.f32.mrf.mxu0
        %v5288 = vpop.f32.mrf.mxu0
        %v5289 = vadd.f32 0.0, %v5288
        %v5290 = vpop.f32.mrf.mxu0
        %5291 = vmatprep.mubr.bf16.mxu0 %v4945
        %5292 = vmatmul.mubr.bf16.gmra.mxu0 %v4944
        %v5293 = vpop.f32.mrf.mxu0
        %v5294 = vadd.f32 0.0, %v5293
        %v5295 = vpop.f32.mrf.mxu0
        %v5296 = vpop.f32.mrf.mxu0
        %v5297 = vadd.f32 0.0, %v5296
        %v5298 = vpop.f32.mrf.mxu0
        %5299 = vdwg.mxu0
        %5300 = vmatprep.subr.bf16.mxu0 0
        %5301 = vmatpush1.bf16.msra.mxu0 %v5114
        %5302 = vmatprep.subr.bf16.mxu0 0
        %5303 = vmatpush1.bf16.msra.mxu0 %v5113
        %5304 = vmatprep.subr.bf16.mxu0 0
        %5305 = vmatpush1.bf16.msra.mxu0 %v5112
        %5306 = vmatprep.subr.bf16.mxu0 0
        %5307 = vmatpush1.bf16.msra.mxu0 %v5111
        %5308 = vmatprep.subr.bf16.mxu0 0
        %5309 = vmatpush1.bf16.msra.mxu0 %v5110
        %5310 = vmatprep.subr.bf16.mxu0 0
        %5311 = vmatpush1.bf16.msra.mxu0 %v5109
        %5312 = vmatprep.subr.bf16.mxu0 0
        %5313 = vmatpush1.bf16.msra.mxu0 %v5108
        %5314 = vmatprep.subr.bf16.mxu0 0
        %5315 = vmatpush1.bf16.msra.mxu0 %v5107
        %5316 = vmatprep.subr.bf16.mxu0 0
        %5317 = vmatpush2.bf16.msra.mxu0 0
        %5318 = vmatprep.subr.bf16.mxu0 0
        %5319 = vmatpush2.bf16.msra.mxu0 0
        %5320 = vmatprep.subr.bf16.mxu0 0
        %5321 = vmatpush2.bf16.msra.mxu0 0
        %5322 = vmatprep.subr.bf16.mxu0 0
        %5323 = vmatpush2.bf16.msra.mxu0 0
        %5324 = vmatprep.subr.bf16.mxu0 0
        %5325 = vmatpush2.bf16.msra.mxu0 0
        %5326 = vmatprep.subr.bf16.mxu0 0
        %5327 = vmatpush2.bf16.msra.mxu0 0
        %5328 = vmatprep.subr.bf16.mxu0 0
        %5329 = vmatpush2.bf16.msra.mxu0 0
        %5330 = vmatprep.subr.bf16.mxu0 0
        %5331 = vmatpush2.bf16.msra.mxu0 0
        %5332 = vmatprep.mubr.bf16.mxu0 0
        %5333 = vmatmul.mubr.bf16.gmra.mxu0 %v4901
        %v5334 = vpop.f32.mrf.mxu0
        %v5335 = vadd.f32 %v5174, %v5334
        %v5336 = vpop.f32.mrf.mxu0
        %v5337 = vpop.f32.mrf.mxu0
        %v5338 = vadd.f32 %v5177, %v5337
        %v5339 = vpop.f32.mrf.mxu0
        %5340 = vmatprep.mubr.bf16.mxu0 0
        %5341 = vmatmul.mubr.bf16.gmra.mxu0 %v4904
        %v5342 = vpop.f32.mrf.mxu0
        %v5343 = vadd.f32 %v5182, %v5342
        %v5344 = vpop.f32.mrf.mxu0
        %v5345 = vpop.f32.mrf.mxu0
        %v5346 = vadd.f32 %v5185, %v5345
        %v5347 = vpop.f32.mrf.mxu0
        %5348 = vmatprep.mubr.bf16.mxu0 0
        %5349 = vmatmul.mubr.bf16.gmra.mxu0 %v4907
        %v5350 = vpop.f32.mrf.mxu0
        %v5351 = vadd.f32 %v5190, %v5350
        %v5352 = vpop.f32.mrf.mxu0
        %v5353 = vpop.f32.mrf.mxu0
        %v5354 = vadd.f32 %v5193, %v5353
        %v5355 = vpop.f32.mrf.mxu0
        %5356 = vmatprep.mubr.bf16.mxu0 0
        %5357 = vmatmul.mubr.bf16.gmra.mxu0 %v4910
        %v5358 = vpop.f32.mrf.mxu0
        %v5359 = vadd.f32 %v5198, %v5358
        %v5360 = vpop.f32.mrf.mxu0
        %v5361 = vpop.f32.mrf.mxu0
        %v5362 = vadd.f32 %v5201, %v5361
        %v5363 = vpop.f32.mrf.mxu0
        %5364 = vmatprep.mubr.bf16.mxu0 0
        %5365 = vmatmul.mubr.bf16.gmra.mxu0 %v4913
        %v5366 = vpop.f32.mrf.mxu0
        %v5367 = vadd.f32 %v5206, %v5366
        %v5368 = vpop.f32.mrf.mxu0
        %v5369 = vpop.f32.mrf.mxu0
        %v5370 = vadd.f32 %v5209, %v5369
        %v5371 = vpop.f32.mrf.mxu0
        %5372 = vmatprep.mubr.bf16.mxu0 0
        %5373 = vmatmul.mubr.bf16.gmra.mxu0 %v4916
        %v5374 = vpop.f32.mrf.mxu0
        %v5375 = vadd.f32 %v5214, %v5374
        %v5376 = vpop.f32.mrf.mxu0
        %v5377 = vpop.f32.mrf.mxu0
        %v5378 = vadd.f32 %v5217, %v5377
        %v5379 = vpop.f32.mrf.mxu0
        %5380 = vmatprep.mubr.bf16.mxu0 0
        %5381 = vmatmul.mubr.bf16.gmra.mxu0 %v4919
        %v5382 = vpop.f32.mrf.mxu0
        %v5383 = vadd.f32 %v5222, %v5382
        %v5384 = vpop.f32.mrf.mxu0
        %v5385 = vpop.f32.mrf.mxu0
        %v5386 = vadd.f32 %v5225, %v5385
        %v5387 = vpop.f32.mrf.mxu0
        %5388 = vmatprep.mubr.bf16.mxu0 0
        %5389 = vmatmul.mubr.bf16.gmra.mxu0 %v4922
        %v5390 = vpop.f32.mrf.mxu0
        %v5391 = vadd.f32 %v5230, %v5390
        %v5392 = vpop.f32.mrf.mxu0
        %v5393 = vpop.f32.mrf.mxu0
        %v5394 = vadd.f32 %v5233, %v5393
        %v5395 = vpop.f32.mrf.mxu0
        %5396 = vmatprep.mubr.bf16.mxu0 0
        %5397 = vmatmul.mubr.bf16.gmra.mxu0 %v4925
        %v5398 = vpop.f32.mrf.mxu0
        %v5399 = vadd.f32 %v5238, %v5398
        %v5400 = vpop.f32.mrf.mxu0
        %v5401 = vpop.f32.mrf.mxu0
        %v5402 = vadd.f32 %v5241, %v5401
        %v5403 = vpop.f32.mrf.mxu0
        %5404 = vmatprep.mubr.bf16.mxu0 0
        %5405 = vmatmul.mubr.bf16.gmra.mxu0 %v4928
        %v5406 = vpop.f32.mrf.mxu0
        %v5407 = vadd.f32 %v5246, %v5406
        %v5408 = vpop.f32.mrf.mxu0
        %v5409 = vpop.f32.mrf.mxu0
        %v5410 = vadd.f32 %v5249, %v5409
        %v5411 = vpop.f32.mrf.mxu0
        %5412 = vmatprep.mubr.bf16.mxu0 0
        %5413 = vmatmul.mubr.bf16.gmra.mxu0 %v4931
        %v5414 = vpop.f32.mrf.mxu0
        %v5415 = vadd.f32 %v5254, %v5414
        %v5416 = vpop.f32.mrf.mxu0
        %v5417 = vpop.f32.mrf.mxu0
        %v5418 = vadd.f32 %v5257, %v5417
        %v5419 = vpop.f32.mrf.mxu0
        %5420 = vmatprep.mubr.bf16.mxu0 0
        %5421 = vmatmul.mubr.bf16.gmra.mxu0 %v4934
        %v5422 = vpop.f32.mrf.mxu0
        %v5423 = vadd.f32 %v5262, %v5422
        %v5424 = vpop.f32.mrf.mxu0
        %v5425 = vpop.f32.mrf.mxu0
        %v5426 = vadd.f32 %v5265, %v5425
        %v5427 = vpop.f32.mrf.mxu0
        %5428 = vmatprep.mubr.bf16.mxu0 0
        %5429 = vmatmul.mubr.bf16.gmra.mxu0 %v4937
        %v5430 = vpop.f32.mrf.mxu0
        %v5431 = vadd.f32 %v5270, %v5430
        %v5432 = vpop.f32.mrf.mxu0
        %v5433 = vpop.f32.mrf.mxu0
        %v5434 = vadd.f32 %v5273, %v5433
        %v5435 = vpop.f32.mrf.mxu0
        %5436 = vmatprep.mubr.bf16.mxu0 0
        %5437 = vmatmul.mubr.bf16.gmra.mxu0 %v4940
        %v5438 = vpop.f32.mrf.mxu0
        %v5439 = vadd.f32 %v5278, %v5438
        %v5440 = vpop.f32.mrf.mxu0
        %v5441 = vpop.f32.mrf.mxu0
        %v5442 = vadd.f32 %v5281, %v5441
        %v5443 = vpop.f32.mrf.mxu0
        %5444 = vmatprep.mubr.bf16.mxu0 0
        %5445 = vmatmul.mubr.bf16.gmra.mxu0 %v4943
        %v5446 = vpop.f32.mrf.mxu0
        %v5447 = vadd.f32 %v5286, %v5446
        %v5448 = vpop.f32.mrf.mxu0
        %v5449 = vpop.f32.mrf.mxu0
        %v5450 = vadd.f32 %v5289, %v5449
        %v5451 = vpop.f32.mrf.mxu0
        %5452 = vmatprep.mubr.bf16.mxu0 0
        %5453 = vmatmul.mubr.bf16.gmra.mxu0 %v4946
        %v5454 = vpop.f32.mrf.mxu0
        %v5455 = vadd.f32 %v5294, %v5454
        %v5456 = vpop.f32.mrf.mxu0
        %v5457 = vpop.f32.mrf.mxu0
        %v5458 = vadd.f32 %v5297, %v5457
        %v5459 = vpop.f32.mrf.mxu0
        %5460 = vdwg.mxu0
        %v5461 = vadd.f32 %v4500, %v5335
        %v5462 = vadd.f32 %v4503, %v5338
        %v5463 = vadd.f32 %v4508, %v5343
        %v5464 = vadd.f32 %v4511, %v5346
        %v5465 = vadd.f32 %v4516, %v5351
        %v5466 = vadd.f32 %v4519, %v5354
        %v5467 = vadd.f32 %v4524, %v5359
        %v5468 = vadd.f32 %v4527, %v5362
        %v5469 = vadd.f32 %v4532, %v5367
        %v5470 = vadd.f32 %v4535, %v5370
        %v5471 = vadd.f32 %v4540, %v5375
        %v5472 = vadd.f32 %v4543, %v5378
        %v5473 = vadd.f32 %v4548, %v5383
        %v5474 = vadd.f32 %v4551, %v5386
        %v5475 = vadd.f32 %v4556, %v5391
        %v5476 = vadd.f32 %v4559, %v5394
        %v5477 = vadd.f32 %v4564, %v5399
        %v5478 = vadd.f32 %v4567, %v5402
        %v5479 = vadd.f32 %v4572, %v5407
        %v5480 = vadd.f32 %v4575, %v5410
        %v5481 = vadd.f32 %v4580, %v5415
        %v5482 = vadd.f32 %v4583, %v5418
        %v5483 = vadd.f32 %v4588, %v5423
        %v5484 = vadd.f32 %v4591, %v5426
        %v5485 = vadd.f32 %v4596, %v5431
        %v5486 = vadd.f32 %v4599, %v5434
        %v5487 = vadd.f32 %v4604, %v5439
        %v5488 = vadd.f32 %v4607, %v5442
        %v5489 = vadd.f32 %v4612, %v5447
        %v5490 = vadd.f32 %v4615, %v5450
        %v5491 = vadd.f32 %v4620, %v5455
        %v5492 = vadd.f32 %v4623, %v5458
        %v5493 = vld [vmem:[%s4] sm:$0x1]
        %v5495 = vlaneseq
        %v5496 = vshrl.u32 %v5495, 7
        %v5497 = vsub.s32 0, %v5496
        %v5498 = vrot.slane %v5493, %v5497
        %v5500 = vadd.f32 %v5461, %v5498
        %v5501 = vadd.f32 %v5462, %v5498
        %v5502 = vadd.f32 %v5463, %v5498
        %v5503 = vadd.f32 %v5464, %v5498
        %v5504 = vadd.f32 %v5465, %v5498
        %v5505 = vadd.f32 %v5466, %v5498
        %v5506 = vadd.f32 %v5467, %v5498
        %v5507 = vadd.f32 %v5468, %v5498
        %v5508 = vadd.f32 %v5469, %v5498
        %v5509 = vadd.f32 %v5470, %v5498
        %v5510 = vadd.f32 %v5471, %v5498
        %v5511 = vadd.f32 %v5472, %v5498
        %v5512 = vadd.f32 %v5473, %v5498
        %v5513 = vadd.f32 %v5474, %v5498
        %v5514 = vadd.f32 %v5475, %v5498
        %v5515 = vadd.f32 %v5476, %v5498
        %v5516 = vadd.f32 %v5477, %v5498
        %v5517 = vadd.f32 %v5478, %v5498
        %v5518 = vadd.f32 %v5479, %v5498
        %v5519 = vadd.f32 %v5480, %v5498
        %v5520 = vadd.f32 %v5481, %v5498
        %v5521 = vadd.f32 %v5482, %v5498
        %v5522 = vadd.f32 %v5483, %v5498
        %v5523 = vadd.f32 %v5484, %v5498
        %v5524 = vadd.f32 %v5485, %v5498
        %v5525 = vadd.f32 %v5486, %v5498
        %v5526 = vadd.f32 %v5487, %v5498
        %v5527 = vadd.f32 %v5488, %v5498
        %v5528 = vadd.f32 %v5489, %v5498
        %v5529 = vadd.f32 %v5490, %v5498
        %v5530 = vadd.f32 %v5491, %v5498
        %v5531 = vadd.f32 %v5492, %v5498
        %v5532 = vmax.f32 %v5500, 0.0
        %v5533 = vmax.f32 %v5501, 0.0
        %v5534 = vmax.f32 %v5502, 0.0
        %v5535 = vmax.f32 %v5503, 0.0
        %v5536 = vmax.f32 %v5504, 0.0
        %v5537 = vmax.f32 %v5505, 0.0
        %v5538 = vmax.f32 %v5506, 0.0
        %v5539 = vmax.f32 %v5507, 0.0
        %v5540 = vmax.f32 %v5508, 0.0
        %v5541 = vmax.f32 %v5509, 0.0
        %v5542 = vmax.f32 %v5510, 0.0
        %v5543 = vmax.f32 %v5511, 0.0
        %v5544 = vmax.f32 %v5512, 0.0
        %v5545 = vmax.f32 %v5513, 0.0
        %v5546 = vmax.f32 %v5514, 0.0
        %v5547 = vmax.f32 %v5515, 0.0
        %v5548 = vmax.f32 %v5516, 0.0
        %v5549 = vmax.f32 %v5517, 0.0
        %v5550 = vmax.f32 %v5518, 0.0
        %v5551 = vmax.f32 %v5519, 0.0
        %v5552 = vmax.f32 %v5520, 0.0
        %v5553 = vmax.f32 %v5521, 0.0
        %v5554 = vmax.f32 %v5522, 0.0
        %v5555 = vmax.f32 %v5523, 0.0
        %v5556 = vmax.f32 %v5524, 0.0
        %v5557 = vmax.f32 %v5525, 0.0
        %v5558 = vmax.f32 %v5526, 0.0
        %v5559 = vmax.f32 %v5527, 0.0
        %v5560 = vmax.f32 %v5528, 0.0
        %v5561 = vmax.f32 %v5529, 0.0
        %v5562 = vmax.f32 %v5530, 0.0
        %v5563 = vmax.f32 %v5531, 0.0
        %v5564 = vpack.c.bf16 %v5533, %v5532
        %v5565 = vpack.c.bf16 %v5535, %v5534
        %v5566 = vpack.c.bf16 %v5537, %v5536
        %v5567 = vpack.c.bf16 %v5539, %v5538
        %v5568 = vpack.c.bf16 %v5541, %v5540
        %v5569 = vpack.c.bf16 %v5543, %v5542
        %v5570 = vpack.c.bf16 %v5545, %v5544
        %v5571 = vpack.c.bf16 %v5547, %v5546
        %v5572 = vpack.c.bf16 %v5549, %v5548
        %v5573 = vpack.c.bf16 %v5551, %v5550
        %v5574 = vpack.c.bf16 %v5553, %v5552
        %v5575 = vpack.c.bf16 %v5555, %v5554
        %v5576 = vpack.c.bf16 %v5557, %v5556
        %v5577 = vpack.c.bf16 %v5559, %v5558
        %v5578 = vpack.c.bf16 %v5561, %v5560
        %v5579 = vpack.c.bf16 %v5563, %v5562
        %v5580 = vld [vmem:[#allocation9] sm:$0xf]
        %v5581 = vld [vmem:[#allocation9 + $0x4] sm:$0xf]
        %v5582 = vld [vmem:[#allocation9 + $0x8] sm:$0xf]
        %v5583 = vld [vmem:[#allocation9 + $0xc] sm:$0xf]
        %v5584 = vld [vmem:[#allocation9 + $0x10] sm:$0xf]
        %v5585 = vld [vmem:[#allocation9 + $0x14] sm:$0xf]
        %v5586 = vld [vmem:[#allocation9 + $0x18] sm:$0xf]
        %v5587 = vld [vmem:[#allocation9 + $0x1c] sm:$0xf]
        %v5588 = vld [vmem:[#allocation9 + $0x20] sm:$0xf]
        %v5589 = vld [vmem:[#allocation9 + $0x24] sm:$0xf]
        %v5590 = vld [vmem:[#allocation9 + $0x28] sm:$0xf]
        %v5591 = vld [vmem:[#allocation9 + $0x2c] sm:$0xf]
        %v5592 = vld [vmem:[#allocation9 + $0x30] sm:$0xf]
        %v5593 = vld [vmem:[#allocation9 + $0x34] sm:$0xf]
        %v5594 = vld [vmem:[#allocation9 + $0x38] sm:$0xf]
        %v5595 = vld [vmem:[#allocation9 + $0x3c] sm:$0xf]
        %v5596 = vld [vmem:[%s298] sm:$0xf]
        %v5597 = vld [vmem:[%s298 + $0x4] sm:$0xf]
        %v5598 = vld [vmem:[%s298 + $0x8] sm:$0xf]
        %v5599 = vld [vmem:[%s298 + $0xc] sm:$0xf]
        %v5600 = vld [vmem:[%s298 + $0x10] sm:$0xf]
        %v5601 = vld [vmem:[%s298 + $0x14] sm:$0xf]
        %v5602 = vld [vmem:[%s298 + $0x18] sm:$0xf]
        %v5603 = vld [vmem:[%s298 + $0x1c] sm:$0xf]
        %v5604 = vld [vmem:[%s298 + $0x20] sm:$0xf]
        %v5605 = vld [vmem:[%s298 + $0x24] sm:$0xf]
        %v5606 = vld [vmem:[%s298 + $0x28] sm:$0xf]
        %v5607 = vld [vmem:[%s298 + $0x2c] sm:$0xf]
        %v5608 = vld [vmem:[%s298 + $0x30] sm:$0xf]
        %v5609 = vld [vmem:[%s298 + $0x34] sm:$0xf]
        %v5610 = vld [vmem:[%s298 + $0x38] sm:$0xf]
        %v5611 = vld [vmem:[%s298 + $0x3c] sm:$0xf]
        %v5612 = vld [vmem:[%s298 + $0x40] sm:$0xf]
        %v5613 = vld [vmem:[%s298 + $0x44] sm:$0xf]
        %v5614 = vld [vmem:[%s298 + $0x48] sm:$0xf]
        %v5615 = vld [vmem:[%s298 + $0x4c] sm:$0xf]
        %v5616 = vld [vmem:[%s298 + $0x50] sm:$0xf]
        %v5617 = vld [vmem:[%s298 + $0x54] sm:$0xf]
        %v5618 = vld [vmem:[%s298 + $0x58] sm:$0xf]
        %v5619 = vld [vmem:[%s298 + $0x5c] sm:$0xf]
        %v5620 = vld [vmem:[%s298 + $0x60] sm:$0xf]
        %v5621 = vld [vmem:[%s298 + $0x64] sm:$0xf]
        %v5622 = vld [vmem:[%s298 + $0x68] sm:$0xf]
        %v5623 = vld [vmem:[%s298 + $0x6c] sm:$0xf]
        %v5624 = vld [vmem:[%s298 + $0x70] sm:$0xf]
        %v5625 = vld [vmem:[%s298 + $0x74] sm:$0xf]
        %v5626 = vld [vmem:[%s298 + $0x78] sm:$0xf]
        %v5627 = vld [vmem:[%s298 + $0x7c] sm:$0xf]
        %v5628 = vunpack.c.l.bf16 %v5596
        %v5629 = vunpack.c.l.bf16 %v5597
        %v5630 = vunpack.c.l.bf16 %v5598
        %v5631 = vunpack.c.l.bf16 %v5599
        %v5632 = vunpack.c.l.bf16 %v5600
        %v5633 = vunpack.c.l.bf16 %v5601
        %v5634 = vunpack.c.l.bf16 %v5602
        %v5635 = vunpack.c.l.bf16 %v5603
        %v5636 = vunpack.c.l.bf16 %v5604
        %v5637 = vunpack.c.l.bf16 %v5605
        %v5638 = vunpack.c.l.bf16 %v5606
        %v5639 = vunpack.c.l.bf16 %v5607
        %v5640 = vunpack.c.l.bf16 %v5608
        %v5641 = vunpack.c.l.bf16 %v5609
        %v5642 = vunpack.c.l.bf16 %v5610
        %v5643 = vunpack.c.l.bf16 %v5611
        %v5644 = vunpack.c.l.bf16 %v5612
        %v5645 = vunpack.c.l.bf16 %v5613
        %v5646 = vunpack.c.l.bf16 %v5614
        %v5647 = vunpack.c.l.bf16 %v5615
        %v5648 = vunpack.c.l.bf16 %v5616
        %v5649 = vunpack.c.l.bf16 %v5617
        %v5650 = vunpack.c.l.bf16 %v5618
        %v5651 = vunpack.c.l.bf16 %v5619
        %v5652 = vunpack.c.l.bf16 %v5620
        %v5653 = vunpack.c.l.bf16 %v5621
        %v5654 = vunpack.c.l.bf16 %v5622
        %v5655 = vunpack.c.l.bf16 %v5623
        %v5656 = vunpack.c.l.bf16 %v5624
        %v5657 = vunpack.c.l.bf16 %v5625
        %v5658 = vunpack.c.l.bf16 %v5626
        %v5659 = vunpack.c.l.bf16 %v5627
        %v5676 = vunpack.c.l.b16 %v5580
        %v5677 = vunpack.c.l.b16 %v5581
        %v5678 = vunpack.c.l.b16 %v5582
        %v5679 = vunpack.c.l.b16 %v5583
        %v5680 = vunpack.c.l.b16 %v5584
        %v5681 = vunpack.c.l.b16 %v5585
        %v5682 = vunpack.c.l.b16 %v5586
        %v5683 = vunpack.c.l.b16 %v5587
        %v5684 = vunpack.c.l.b16 %v5588
        %v5685 = vunpack.c.l.b16 %v5589
        %v5686 = vunpack.c.l.b16 %v5590
        %v5687 = vunpack.c.l.b16 %v5591
        %v5688 = vunpack.c.l.b16 %v5592
        %v5689 = vunpack.c.l.b16 %v5593
        %v5690 = vunpack.c.l.b16 %v5594
        %v5691 = vunpack.c.l.b16 %v5595
        %v5692 = vpack.c.b16 %v5677, %v5676
        %v5693 = vpack.c.b16 %v5679, %v5678
        %v5694 = vpack.c.b16 %v5681, %v5680
        %v5695 = vpack.c.b16 %v5683, %v5682
        %v5696 = vpack.c.b16 %v5685, %v5684
        %v5697 = vpack.c.b16 %v5687, %v5686
        %v5698 = vpack.c.b16 %v5689, %v5688
        %v5699 = vpack.c.b16 %v5691, %v5690
        %5708 = vmatprep.subr.bf16.mxu0 0
        %5709 = vmatpush1.bf16.msra.mxu0 %v5699
        %5710 = vmatprep.subr.bf16.mxu0 0
        %5711 = vmatpush1.bf16.msra.mxu0 %v5698
        %5712 = vmatprep.subr.bf16.mxu0 0
        %5713 = vmatpush1.bf16.msra.mxu0 %v5697
        %5714 = vmatprep.subr.bf16.mxu0 0
        %5715 = vmatpush1.bf16.msra.mxu0 %v5696
        %5716 = vmatprep.subr.bf16.mxu0 0
        %5717 = vmatpush1.bf16.msra.mxu0 %v5695
        %5718 = vmatprep.subr.bf16.mxu0 0
        %5719 = vmatpush1.bf16.msra.mxu0 %v5694
        %5720 = vmatprep.subr.bf16.mxu0 0
        %5721 = vmatpush1.bf16.msra.mxu0 %v5693
        %5722 = vmatprep.subr.bf16.mxu0 0
        %5723 = vmatpush1.bf16.msra.mxu0 %v5692
        %5724 = vmatprep.subr.bf16.mxu0 0
        %5725 = vmatpush2.bf16.msra.mxu0 0
        %5726 = vmatprep.subr.bf16.mxu0 0
        %5727 = vmatpush2.bf16.msra.mxu0 0
        %5728 = vmatprep.subr.bf16.mxu0 0
        %5729 = vmatpush2.bf16.msra.mxu0 0
        %5730 = vmatprep.subr.bf16.mxu0 0
        %5731 = vmatpush2.bf16.msra.mxu0 0
        %5732 = vmatprep.subr.bf16.mxu0 0
        %5733 = vmatpush2.bf16.msra.mxu0 0
        %5734 = vmatprep.subr.bf16.mxu0 0
        %5735 = vmatpush2.bf16.msra.mxu0 0
        %5736 = vmatprep.subr.bf16.mxu0 0
        %5737 = vmatpush2.bf16.msra.mxu0 0
        %5738 = vmatprep.subr.bf16.mxu0 0
        %5739 = vmatpush2.bf16.msra.mxu0 0
        %5740 = vmatprep.mubr.bf16.mxu0 0
        %5741 = vmatmul.mubr.bf16.gmra.mxu0 %v5564
        %v5742 = vpop.f32.mrf.mxu0
        %v5743 = vadd.f32 %v5628, %v5742
        %v5744 = vpop.f32.mrf.mxu0
        %v5745 = vpop.f32.mrf.mxu0
        %v5746 = vadd.f32 %v5629, %v5745
        %v5747 = vpop.f32.mrf.mxu0
        %5748 = vmatprep.mubr.bf16.mxu0 0
        %5749 = vmatmul.mubr.bf16.gmra.mxu0 %v5565
        %v5750 = vpop.f32.mrf.mxu0
        %v5751 = vadd.f32 %v5630, %v5750
        %v5752 = vpop.f32.mrf.mxu0
        %v5753 = vpop.f32.mrf.mxu0
        %v5754 = vadd.f32 %v5631, %v5753
        %v5755 = vpop.f32.mrf.mxu0
        %5756 = vmatprep.mubr.bf16.mxu0 0
        %5757 = vmatmul.mubr.bf16.gmra.mxu0 %v5566
        %v5758 = vpop.f32.mrf.mxu0
        %v5759 = vadd.f32 %v5632, %v5758
        %v5760 = vpop.f32.mrf.mxu0
        %v5761 = vpop.f32.mrf.mxu0
        %v5762 = vadd.f32 %v5633, %v5761
        %v5763 = vpop.f32.mrf.mxu0
        %5764 = vmatprep.mubr.bf16.mxu0 0
        %5765 = vmatmul.mubr.bf16.gmra.mxu0 %v5567
        %v5766 = vpop.f32.mrf.mxu0
        %v5767 = vadd.f32 %v5634, %v5766
        %v5768 = vpop.f32.mrf.mxu0
        %v5769 = vpop.f32.mrf.mxu0
        %v5770 = vadd.f32 %v5635, %v5769
        %v5771 = vpop.f32.mrf.mxu0
        %5772 = vmatprep.mubr.bf16.mxu0 0
        %5773 = vmatmul.mubr.bf16.gmra.mxu0 %v5568
        %v5774 = vpop.f32.mrf.mxu0
        %v5775 = vadd.f32 %v5636, %v5774
        %v5776 = vpop.f32.mrf.mxu0
        %v5777 = vpop.f32.mrf.mxu0
        %v5778 = vadd.f32 %v5637, %v5777
        %v5779 = vpop.f32.mrf.mxu0
        %5780 = vmatprep.mubr.bf16.mxu0 0
        %5781 = vmatmul.mubr.bf16.gmra.mxu0 %v5569
        %v5782 = vpop.f32.mrf.mxu0
        %v5783 = vadd.f32 %v5638, %v5782
        %v5784 = vpop.f32.mrf.mxu0
        %v5785 = vpop.f32.mrf.mxu0
        %v5786 = vadd.f32 %v5639, %v5785
        %v5787 = vpop.f32.mrf.mxu0
        %5788 = vmatprep.mubr.bf16.mxu0 0
        %5789 = vmatmul.mubr.bf16.gmra.mxu0 %v5570
        %v5790 = vpop.f32.mrf.mxu0
        %v5791 = vadd.f32 %v5640, %v5790
        %v5792 = vpop.f32.mrf.mxu0
        %v5793 = vpop.f32.mrf.mxu0
        %v5794 = vadd.f32 %v5641, %v5793
        %v5795 = vpop.f32.mrf.mxu0
        %5796 = vmatprep.mubr.bf16.mxu0 0
        %5797 = vmatmul.mubr.bf16.gmra.mxu0 %v5571
        %v5798 = vpop.f32.mrf.mxu0
        %v5799 = vadd.f32 %v5642, %v5798
        %v5800 = vpop.f32.mrf.mxu0
        %v5801 = vpop.f32.mrf.mxu0
        %v5802 = vadd.f32 %v5643, %v5801
        %v5803 = vpop.f32.mrf.mxu0
        %5804 = vmatprep.mubr.bf16.mxu0 0
        %5805 = vmatmul.mubr.bf16.gmra.mxu0 %v5572
        %v5806 = vpop.f32.mrf.mxu0
        %v5807 = vadd.f32 %v5644, %v5806
        %v5808 = vpop.f32.mrf.mxu0
        %v5809 = vpop.f32.mrf.mxu0
        %v5810 = vadd.f32 %v5645, %v5809
        %v5811 = vpop.f32.mrf.mxu0
        %5812 = vmatprep.mubr.bf16.mxu0 0
        %5813 = vmatmul.mubr.bf16.gmra.mxu0 %v5573
        %v5814 = vpop.f32.mrf.mxu0
        %v5815 = vadd.f32 %v5646, %v5814
        %v5816 = vpop.f32.mrf.mxu0
        %v5817 = vpop.f32.mrf.mxu0
        %v5818 = vadd.f32 %v5647, %v5817
        %v5819 = vpop.f32.mrf.mxu0
        %5820 = vmatprep.mubr.bf16.mxu0 0
        %5821 = vmatmul.mubr.bf16.gmra.mxu0 %v5574
        %v5822 = vpop.f32.mrf.mxu0
        %v5823 = vadd.f32 %v5648, %v5822
        %v5824 = vpop.f32.mrf.mxu0
        %v5825 = vpop.f32.mrf.mxu0
        %v5826 = vadd.f32 %v5649, %v5825
        %v5827 = vpop.f32.mrf.mxu0
        %5828 = vmatprep.mubr.bf16.mxu0 0
        %5829 = vmatmul.mubr.bf16.gmra.mxu0 %v5575
        %v5830 = vpop.f32.mrf.mxu0
        %v5831 = vadd.f32 %v5650, %v5830
        %v5832 = vpop.f32.mrf.mxu0
        %v5833 = vpop.f32.mrf.mxu0
        %v5834 = vadd.f32 %v5651, %v5833
        %v5835 = vpop.f32.mrf.mxu0
        %5836 = vmatprep.mubr.bf16.mxu0 0
        %5837 = vmatmul.mubr.bf16.gmra.mxu0 %v5576
        %v5838 = vpop.f32.mrf.mxu0
        %v5839 = vadd.f32 %v5652, %v5838
        %v5840 = vpop.f32.mrf.mxu0
        %v5841 = vpop.f32.mrf.mxu0
        %v5842 = vadd.f32 %v5653, %v5841
        %v5843 = vpop.f32.mrf.mxu0
        %5844 = vmatprep.mubr.bf16.mxu0 0
        %5845 = vmatmul.mubr.bf16.gmra.mxu0 %v5577
        %v5846 = vpop.f32.mrf.mxu0
        %v5847 = vadd.f32 %v5654, %v5846
        %v5848 = vpop.f32.mrf.mxu0
        %v5849 = vpop.f32.mrf.mxu0
        %v5850 = vadd.f32 %v5655, %v5849
        %v5851 = vpop.f32.mrf.mxu0
        %5852 = vmatprep.mubr.bf16.mxu0 0
        %5853 = vmatmul.mubr.bf16.gmra.mxu0 %v5578
        %v5854 = vpop.f32.mrf.mxu0
        %v5855 = vadd.f32 %v5656, %v5854
        %v5856 = vpop.f32.mrf.mxu0
        %v5857 = vpop.f32.mrf.mxu0
        %v5858 = vadd.f32 %v5657, %v5857
        %v5859 = vpop.f32.mrf.mxu0
        %5860 = vmatprep.mubr.bf16.mxu0 0
        %5861 = vmatmul.mubr.bf16.gmra.mxu0 %v5579
        %v5862 = vpop.f32.mrf.mxu0
        %v5863 = vadd.f32 %v5658, %v5862
        %v5864 = vpop.f32.mrf.mxu0
        %v5865 = vpop.f32.mrf.mxu0
        %v5866 = vadd.f32 %v5659, %v5865
        %v5867 = vpop.f32.mrf.mxu0
        %5868 = vdwg.mxu0
        %v5869 = vpack.c.bf16 %v5746, %v5743
        %v5870 = vpack.c.bf16 %v5754, %v5751
        %v5871 = vpack.c.bf16 %v5762, %v5759
        %v5872 = vpack.c.bf16 %v5770, %v5767
        %v5873 = vpack.c.bf16 %v5778, %v5775
        %v5874 = vpack.c.bf16 %v5786, %v5783
        %v5875 = vpack.c.bf16 %v5794, %v5791
        %v5876 = vpack.c.bf16 %v5802, %v5799
        %v5877 = vpack.c.bf16 %v5810, %v5807
        %v5878 = vpack.c.bf16 %v5818, %v5815
        %v5879 = vpack.c.bf16 %v5826, %v5823
        %v5880 = vpack.c.bf16 %v5834, %v5831
        %v5881 = vpack.c.bf16 %v5842, %v5839
        %v5882 = vpack.c.bf16 %v5850, %v5847
        %v5883 = vpack.c.bf16 %v5858, %v5855
        %v5884 = vpack.c.bf16 %v5866, %v5863
        %v5901 = vunpack.c.l.b16 %v5869
        %v5902 = vunpack.c.h.b16 %v5869
        %v5903 = vunpack.c.l.b16 %v5870
        %v5904 = vunpack.c.h.b16 %v5870
        %v5905 = vunpack.c.l.b16 %v5871
        %v5906 = vunpack.c.h.b16 %v5871
        %v5907 = vunpack.c.l.b16 %v5872
        %v5908 = vunpack.c.h.b16 %v5872
        %v5909 = vunpack.c.l.b16 %v5873
        %v5910 = vunpack.c.h.b16 %v5873
        %v5911 = vunpack.c.l.b16 %v5874
        %v5912 = vunpack.c.h.b16 %v5874
        %v5913 = vunpack.c.l.b16 %v5875
        %v5914 = vunpack.c.h.b16 %v5875
        %v5915 = vunpack.c.l.b16 %v5876
        %v5916 = vunpack.c.h.b16 %v5876
        %v5917 = vunpack.c.l.b16 %v5877
        %v5918 = vunpack.c.h.b16 %v5877
        %v5919 = vunpack.c.l.b16 %v5878
        %v5920 = vunpack.c.h.b16 %v5878
        %v5921 = vunpack.c.l.b16 %v5879
        %v5922 = vunpack.c.h.b16 %v5879
        %v5923 = vunpack.c.l.b16 %v5880
        %v5924 = vunpack.c.h.b16 %v5880
        %v5925 = vunpack.c.l.b16 %v5881
        %v5926 = vunpack.c.h.b16 %v5881
        %v5927 = vunpack.c.l.b16 %v5882
        %v5928 = vunpack.c.h.b16 %v5882
        %v5929 = vunpack.c.l.b16 %v5883
        %v5930 = vunpack.c.h.b16 %v5883
        %v5931 = vunpack.c.l.b16 %v5884
        %v5932 = vunpack.c.h.b16 %v5884
        %v5933 = vpack.c.b16 %v5901, %v5901
        %v5934 = vpack.c.b16 %v5902, %v5902
        %v5935 = vpack.c.b16 %v5903, %v5903
        %v5936 = vpack.c.b16 %v5904, %v5904
        %v5937 = vpack.c.b16 %v5905, %v5905
        %v5938 = vpack.c.b16 %v5906, %v5906
        %v5939 = vpack.c.b16 %v5907, %v5907
        %v5940 = vpack.c.b16 %v5908, %v5908
        %v5941 = vpack.c.b16 %v5909, %v5909
        %v5942 = vpack.c.b16 %v5910, %v5910
        %v5943 = vpack.c.b16 %v5911, %v5911
        %v5944 = vpack.c.b16 %v5912, %v5912
        %v5945 = vpack.c.b16 %v5913, %v5913
        %v5946 = vpack.c.b16 %v5914, %v5914
        %v5947 = vpack.c.b16 %v5915, %v5915
        %v5948 = vpack.c.b16 %v5916, %v5916
        %v5949 = vpack.c.b16 %v5917, %v5917
        %v5950 = vpack.c.b16 %v5918, %v5918
        %v5951 = vpack.c.b16 %v5919, %v5919
        %v5952 = vpack.c.b16 %v5920, %v5920
        %v5953 = vpack.c.b16 %v5921, %v5921
        %v5954 = vpack.c.b16 %v5922, %v5922
        %v5955 = vpack.c.b16 %v5923, %v5923
        %v5956 = vpack.c.b16 %v5924, %v5924
        %v5957 = vpack.c.b16 %v5925, %v5925
        %v5958 = vpack.c.b16 %v5926, %v5926
        %v5959 = vpack.c.b16 %v5927, %v5927
        %v5960 = vpack.c.b16 %v5928, %v5928
        %v5961 = vpack.c.b16 %v5929, %v5929
        %v5962 = vpack.c.b16 %v5930, %v5930
        %v5963 = vpack.c.b16 %v5931, %v5931
        %v5964 = vpack.c.b16 %v5932, %v5932
        %5997 = vst [vmem:[%s340] sm:$0xf] %v5933
        %5998 = vst [vmem:[%s340 + $0x4] sm:$0xf] %v5934
        %5999 = vst [vmem:[%s340 + $0x8] sm:$0xf] %v5935
        %6000 = vst [vmem:[%s340 + $0xc] sm:$0xf] %v5936
        %6001 = vst [vmem:[%s340 + $0x10] sm:$0xf] %v5937
        %6002 = vst [vmem:[%s340 + $0x14] sm:$0xf] %v5938
        %6003 = vst [vmem:[%s340 + $0x18] sm:$0xf] %v5939
        %6004 = vst [vmem:[%s340 + $0x1c] sm:$0xf] %v5940
        %6005 = vst [vmem:[%s340 + $0x20] sm:$0xf] %v5941
        %6006 = vst [vmem:[%s340 + $0x24] sm:$0xf] %v5942
        %6007 = vst [vmem:[%s340 + $0x28] sm:$0xf] %v5943
        %6008 = vst [vmem:[%s340 + $0x2c] sm:$0xf] %v5944
        %6009 = vst [vmem:[%s340 + $0x30] sm:$0xf] %v5945
        %6010 = vst [vmem:[%s340 + $0x34] sm:$0xf] %v5946
        %6011 = vst [vmem:[%s340 + $0x38] sm:$0xf] %v5947
        %6012 = vst [vmem:[%s340 + $0x3c] sm:$0xf] %v5948
        %6013 = vst [vmem:[%s340 + $0x40] sm:$0xf] %v5949
        %6014 = vst [vmem:[%s340 + $0x44] sm:$0xf] %v5950
        %6015 = vst [vmem:[%s340 + $0x48] sm:$0xf] %v5951
        %6016 = vst [vmem:[%s340 + $0x4c] sm:$0xf] %v5952
        %6017 = vst [vmem:[%s340 + $0x50] sm:$0xf] %v5953
        %6018 = vst [vmem:[%s340 + $0x54] sm:$0xf] %v5954
        %6019 = vst [vmem:[%s340 + $0x58] sm:$0xf] %v5955
        %6020 = vst [vmem:[%s340 + $0x5c] sm:$0xf] %v5956
        %6021 = vst [vmem:[%s340 + $0x60] sm:$0xf] %v5957
        %6022 = vst [vmem:[%s340 + $0x64] sm:$0xf] %v5958
        %6023 = vst [vmem:[%s340 + $0x68] sm:$0xf] %v5959
        %6024 = vst [vmem:[%s340 + $0x6c] sm:$0xf] %v5960
        %6025 = vst [vmem:[%s340 + $0x70] sm:$0xf] %v5961
        %6026 = vst [vmem:[%s340 + $0x74] sm:$0xf] %v5962
        %6027 = vst [vmem:[%s340 + $0x78] sm:$0xf] %v5963
        %6028 = vst [vmem:[%s340 + $0x7c] sm:$0xf] %v5964
        %s6029 = sand.u32 %s186, 1
        %s6030 = scalar_lea.sflag [#allocation5], %s6029
        %s6031 = sand.u32 %s186, 1
        %s6032 = smul.addr %s6031, 128
        %s6033 = scalar_lea.vmem [#allocation11], %s6032
        // Predicated region
        $region65: #{tpu_custom_call.1} parent=47 // pred_check
          %p6034 = pneg %p196
        $region66: #{tpu_custom_call.1} parent=47 // pred_check_branch
          %6036 = sbr.rel (%p6034) target = $region68
        $region67: #{tpu_custom_call.1} parent=47 // pred_region
          %s6038 = ssub.s32 2048, 2048
          %6039 = vsyncadd %s6030, %s6038
          %s6040 = smul.addr %s26, 32
          %s6041 = smul.addr %s6040, 64
          %s6042 = scalar_lea.hbm %s7, %s6041
          %s6043 = sshll.u32 %s6033, 4
          %s6044 = int_to_ptr.vmem [resolvable:$true] %s6043
          %6049 = dma.vmem_to_hbm [thread:$0]  %s6044, 2048, %s6042, %s6030, 64, 64, 4
        $region68: #{tpu_custom_call.1} parent=47 // pred_fallthru
          _
      $region48: #{tpu_custom_call.1} parent=5 // pred_fallthru
        _
      %p6050 = scmp.le.s32.totalorder 2, %s21
      // Predicated region
      $region69: #{tpu_custom_call.1} parent=5 // pred_check
        %p6051 = pneg %p6050
      $region70: #{tpu_custom_call.1} parent=5 // pred_check_branch
        %6053 = sbr.rel (%p6051) target = $region72
      $region71: #{tpu_custom_call.1} parent=5 // pred_region
        %s6054 = ssub.s32 %s21, 2
        // Predicated region
        $region73: #{tpu_custom_call.1} parent=71 // pred_check
          %p6055 = pneg %p202
        $region74: #{tpu_custom_call.1} parent=71 // pred_check_branch
          %6057 = sbr.rel (%p6055) target = $region76
        $region75: #{tpu_custom_call.1} parent=71 // pred_region
          %s6058 = sand.u32 %s187, 1
          %s6059 = scalar_lea.sflag [#allocation5], %s6058
          %s6060 = sand.u32 %s187, 1
          %s6061 = smul.addr %s6060, 128
          %s6062 = scalar_lea.vmem [#allocation11], %s6061
          %6063 = dma.done %s6059, 2048
        $region76: #{tpu_custom_call.1} parent=71 // pred_fallthru
          _
      $region72: #{tpu_custom_call.1} parent=5 // pred_fallthru
        _
    $region6: #{tpu_custom_call.1} parent=1 // loop_footer
      %s25 = sadd.s32 1, %s21
    $region7: #{tpu_custom_call.1} parent=1 // loop_footer_branch
      %20 = sbr.rel target = $region3
    $region8: #{tpu_custom_call.1} parent=1 // loop_exit
      _
    %6064 = vsyncpa [#allocation4], 1
    %s6065 = scalar_lea.sflag [#allocation4], 1
    %6066 = vsyncpa %s6065, 1
    %6067 = vsyncpa [#allocation7], 1
    %6068 = vsyncpa [#allocation10], 1
    %6069 = vsyncpa [#allocation5], 1
    %s6070 = scalar_lea.sflag [#allocation5], 1
    %6071 = vsyncpa %s6070, 1

</llo_original>
